<compile_context>
chip_gen: v7x
topology: tpu7x:2x2x1
jax: 0.10.0
libtpu: 0.0.40
codegen_flags: <defaults>
</compile_context>

<pallas_src>
import functools

import jax
import jax.numpy as jnp
import numpy as np
from jax import lax
from jax.experimental import pallas as pl
from jax.experimental.pallas import tpu as pltpu


def _right_attn_kernel(x_nc_ref, x_cn_ref, wq_ref, wk_ref, wv_ref, bias_ref,
                       o_ref):
    """One grid step = `block_b` batch elements, all heads batched.

    x_nc_ref: (Bn, C)  bf16   pooled features, rows = (batch-in-block, pos)
    x_cn_ref: (C, Bn)  bf16   same data, channel-major (lane-dense)
    w*_ref:   (h, d, C) bf16  per-head projection weights (q pre-scaled)
    bias_ref: (Bn, Bn) f32    0 on same-batch (query,key) pairs, -1e30 otherwise
    o_ref:    (h, d, Bn) f32  channel-major output, 128-lane-dense store
    """
    x_nc = x_nc_ref[...]                       # (Bn, C)  bf16
    x_cn = x_cn_ref[...]                       # (C, Bn)  bf16
    Bn, C = x_nc.shape
    h = wq_ref.shape[0]

    # Broadcast x once so every projection is a single head-batched dot_general.
    xb_nc = jnp.broadcast_to(x_nc[None], (h, Bn, C))     # (h, Bn, C)
    xb_cn = jnp.broadcast_to(x_cn[None], (h, C, Bn))     # (h, C, Bn)

    # Projections (bf16 operands, f32 accumulation), heads as the batch dim.
    # q: 'hnc,hdc->hnd'   (attention scale already folded into wq)
    q = lax.dot_general(xb_nc, wq_ref[...], (((2,), (2,)), ((0,), (0,))),
                        preferred_element_type=jnp.float32)      # (h, Bn, d)
    # k, v: 'hdc,hcn->hdn'
    k = lax.dot_general(wk_ref[...], xb_cn, (((2,), (1,)), ((0,), (0,))),
                        preferred_element_type=jnp.float32)      # (h, d, Bn)
    v = lax.dot_general(wv_ref[...], xb_cn, (((2,), (1,)), ((0,), (0,))),
                        preferred_element_type=jnp.float32)      # (h, d, Bn)

    # Single cast back to the MXU operand dtype for the attention matmuls
    # (keeps the score matmul off the slow multi-pass f32 MXU mode).
    q = q.astype(x_nc.dtype)
    k = k.astype(x_nc.dtype)
    v = v.astype(x_nc.dtype)

    # Scores 'hnd,hdm->hnm' (plain NN matmul per head), f32 accumulation.
    s = lax.dot_general(q, k, (((2,), (1,)), ((0,), (0,))),
                        preferred_element_type=jnp.float32)      # (h, Bn, Bn)
    # Block-diagonal bias: fused batch elements don't attend to each other.
    s = s + bias_ref[...]

    # softmax(dim=-1) in f32; EUP approximate reciprocal for the normalisation.
    s = s - jnp.max(s, axis=-1, keepdims=True)
    p = jnp.exp(s)
    p = p * pl.reciprocal(jnp.sum(p, axis=-1, keepdims=True), approx=True)
    # attn_drop has p=0.0 -> identity (no dropout applied).

    # Output 'hdm,hnm->hdn' (NT per head).  Rows are already the head-major
    # channel order PyTorch produces, so this is one lane-dense (h, d, Bn) store.
    o = lax.dot_general(v, p.astype(x_nc.dtype), (((2,), (2,)), ((0,), (0,))),
                        preferred_element_type=jnp.float32)      # (h, d, Bn)
    o_ref[...] = o.astype(o_ref.dtype)


@functools.partial(jax.jit,
                   static_argnames=("num_heads", "pool_size", "block_b",
                                    "mxu_dtype"))
def right_forward(x, w_qkv, *, num_heads=8, pool_size=2, block_b=None,
                  mxu_dtype=jnp.bfloat16):
    """x: (B, C, H, W) f32; w_qkv: (3*C, C) = nn.Linear(dim, 3*dim).weight."""
    B, C, H, W = x.shape
    assert C % num_heads == 0
    head_dim = C // num_heads
    scale = head_dim ** (-0.5)

    # AvgPool2d(kernel=pool, stride=pool, pad=0) -- cheap glue fused under jit.
    if pool_size > 1:
        # TODO(synk): PyTorch AvgPool2d floors odd sizes; we require divisibility.
        assert H % pool_size == 0 and W % pool_size == 0
        Hp, Wp = H // pool_size, W // pool_size
        xp = x.reshape(B, C, Hp, pool_size, Wp, pool_size).mean(axis=(3, 5))
    else:
        Hp, Wp = H, W
        xp = x
    N = Hp * Wp

    # Fatten the grid: fold block_b batch elements into one step so the lane dim
    # reaches 128 (for B=2, N=64 this is a single step).  For larger B the grid
    # keeps B/block_b >= 2 "parallel" steps so v7x's two TensorCores get work.
    if block_b is None:
        block_b = 2 if (B % 2 == 0 and N < 128) else 1
    if (block_b * N) % 128 != 0 and block_b != B:
        block_b = B                       # single fat step is always legal
    n_steps = B // block_b
    Bn = block_b * N

    # Layout plumbing (wrapper-side, fuses under jit): two orientations of the
    # pooled features so every in-kernel dot is a standard NN/NT batched matmul.
    x3 = xp.reshape(B, C, N)
    x_cn = x3.transpose(1, 0, 2).reshape(C, B * N).astype(mxu_dtype)   # (C, B*N)
    x_nc = x3.transpose(0, 2, 1).reshape(B * N, C).astype(mxu_dtype)   # (B*N, C)

    # Per-head weights, head-major rows exactly as PyTorch's qkv Linear splits
    # them; the attention scale is folded into the q weights once.
    # (In a real model hoist this prep out of the per-call path / cache it.)
    wq = (w_qkv[:C] * scale).reshape(num_heads, head_dim, C).astype(mxu_dtype)
    wk = w_qkv[C:2 * C].reshape(num_heads, head_dim, C).astype(mxu_dtype)
    wv = w_qkv[2 * C:].reshape(num_heads, head_dim, C).astype(mxu_dtype)

    # Static block-diagonal additive mask over the fused batch elements
    # (trace-time numpy constant; all-zero when block_b == 1).
    blk = np.arange(Bn) // N
    bias = jnp.asarray(
        np.where(blk[:, None] == blk[None, :], 0.0, -1e30).astype(np.float32))

    out = pl.pallas_call(
        _right_attn_kernel,
        out_shape=jax.ShapeDtypeStruct((num_heads, head_dim, B * N),
                                       jnp.float32),
        grid=(n_steps,),
        in_specs=[
            pl.BlockSpec((Bn, C), lambda i: (i, 0)),
            pl.BlockSpec((C, Bn), lambda i: (0, i)),
            pl.BlockSpec((num_heads, head_dim, C), lambda i: (0, 0, 0)),
            pl.BlockSpec((num_heads, head_dim, C), lambda i: (0, 0, 0)),
            pl.BlockSpec((num_heads, head_dim, C), lambda i: (0, 0, 0)),
            pl.BlockSpec((Bn, Bn), lambda i: (0, 0)),
        ],
        out_specs=pl.BlockSpec((num_heads, head_dim, Bn), lambda i: (0, 0, i)),
        compiler_params=pltpu.CompilerParams(
            dimension_semantics=("parallel",)),
    )(x_nc, x_cn, wq, wk, wv, bias)

    # (h, d, B*N) -> (C, B, N) -> (B, C, N) -> (B, C, Hp, Wp): wrapper plumbing.
    y = out.reshape(C, B, N).transpose(1, 0, 2).reshape(B, C, Hp, Wp)

    # nn.Upsample(scale_factor=pool, mode='nearest') as a pure layout op.
    if pool_size > 1:
        y = jnp.broadcast_to(
            y[:, :, :, None, :, None],
            (B, C, Hp, pool_size, Wp, pool_size)).reshape(B, C, H, W)
    return y


def _reference(x, w_qkv, *, num_heads=8, pool_size=2):
    """Pure-JAX (f32) replica of the PyTorch forward, for correctness checking."""
    B, C, H, W = x.shape
    head_dim = C // num_heads
    scale = head_dim ** (-0.5)
    if pool_size > 1:
        Hp, Wp = H // pool_size, W // pool_size
        x = x.reshape(B, C, Hp, pool_size, Wp, pool_size).mean(axis=(3, 5))
    else:
        Hp, Wp = H, W
    N = Hp * Wp
    xs = x.reshape(B, C, N).transpose(0, 2, 1)                   # (B, N, C)
    qkv = xs @ w_qkv.T                                           # (B, N, 3C)
    qkv = qkv.reshape(B, N, 3, num_heads, head_dim).transpose(2, 0, 3, 1, 4)
    q, k, v = qkv[0], qkv[1], qkv[2]                             # (B, h, N, hd)
    attn = (q * scale) @ k.transpose(0, 1, 3, 2)
    attn = jax.nn.softmax(attn, axis=-1)
    o = (attn @ v).transpose(0, 1, 3, 2).reshape(B, C, N).reshape(B, C, Hp, Wp)
    if pool_size > 1:
        o = jnp.repeat(jnp.repeat(o, pool_size, axis=2), pool_size, axis=3)
    return o


if __name__ == "__main__":
    B, dim, H, W = 2, 32, 16, 16
    num_heads, pool_size = 8, 2

    key = jax.random.PRNGKey(0)
    kx, kw = jax.random.split(key)
    x = jax.random.normal(kx, (B, dim, H, W), dtype=jnp.float32)
    # Deterministic synthetic init for nn.Linear(dim, 3*dim, bias=False).weight
    w_qkv = jax.random.normal(kw, (3 * dim, dim), dtype=jnp.float32) * 0.02

    y = right_forward(x, w_qkv, num_heads=num_heads, pool_size=pool_size)
    y = jax.block_until_ready(y)
    assert y.shape == (B, dim, H, W), y.shape

    y_ref = jax.block_until_ready(
        _reference(x, w_qkv, num_heads=num_heads, pool_size=pool_size))
    # Tolerance accounts for bf16 MXU operands + approx reciprocal (accumulation
    # and all softmax math are f32).
    np.testing.assert_allclose(np.asarray(y), np.asarray(y_ref),
                               rtol=3e-2, atol=3e-3)
    print("KERNEL_OK")
</pallas_src>

<mosaic_0001>
module attributes {stable_mosaic.version = 11 : i64} {
  func.func @_right_attn_kernel(%arg0: i32, %arg1: memref<128x32xbf16, #tpu.memory_space<vmem>>, %arg2: memref<32x128xbf16, #tpu.memory_space<vmem>>, %arg3: memref<8x4x32xbf16, #tpu.memory_space<vmem>>, %arg4: memref<8x4x32xbf16, #tpu.memory_space<vmem>>, %arg5: memref<8x4x32xbf16, #tpu.memory_space<vmem>>, %arg6: memref<128x128xf32, #tpu.memory_space<vmem>>, %arg7: memref<8x4x128xf32, #tpu.memory_space<vmem>>) attributes {dimension_semantics = [#tpu.dimension_semantics<parallel>], iteration_bounds = array<i64: 1>, scalar_prefetch = 0 : i64, scratch_operands = 0 : i64, tpu.core_type = #tpu.core_type<tc>, window_params = [{transform_indices = @transform_0, window_bounds = array<i64: 128, 32>}, {transform_indices = @transform_1, window_bounds = array<i64: 32, 128>}, {pipeline_mode = #tpu.pipeline_mode<synchronous>, transform_indices = @transform_2, window_bounds = array<i64: 8, 4, 32>}, {pipeline_mode = #tpu.pipeline_mode<synchronous>, transform_indices = @transform_3, window_bounds = array<i64: 8, 4, 32>}, {pipeline_mode = #tpu.pipeline_mode<synchronous>, transform_indices = @transform_4, window_bounds = array<i64: 8, 4, 32>}, {pipeline_mode = #tpu.pipeline_mode<synchronous>, transform_indices = @transform_5, window_bounds = array<i64: 128, 128>}, {transform_indices = @transform_6, window_bounds = array<i64: 8, 4, 128>}]} {
    %c0 = arith.constant 0 : index
    %c0_0 = arith.constant 0 : index
    %0 = vector.load %arg1[%c0, %c0_0] : memref<128x32xbf16, #tpu.memory_space<vmem>>, vector<128x32xbf16>
    %c0_1 = arith.constant 0 : index
    %c0_2 = arith.constant 0 : index
    %1 = vector.load %arg2[%c0_1, %c0_2] : memref<32x128xbf16, #tpu.memory_space<vmem>>, vector<32x128xbf16>
    %2 = vector.shape_cast %0 : vector<128x32xbf16> to vector<1x128x32xbf16>
    %3 = vector.shape_cast %2 : vector<1x128x32xbf16> to vector<1x128x32xbf16>
    %4 = vector.broadcast %3 : vector<1x128x32xbf16> to vector<8x128x32xbf16>
    %5 = vector.shape_cast %1 : vector<32x128xbf16> to vector<1x32x128xbf16>
    %6 = vector.shape_cast %5 : vector<1x32x128xbf16> to vector<1x32x128xbf16>
    %7 = vector.broadcast %6 : vector<1x32x128xbf16> to vector<8x32x128xbf16>
    %c0_3 = arith.constant 0 : index
    %c0_4 = arith.constant 0 : index
    %c0_5 = arith.constant 0 : index
    %8 = vector.load %arg3[%c0_3, %c0_4, %c0_5] : memref<8x4x32xbf16, #tpu.memory_space<vmem>>, vector<8x4x32xbf16>
    %cst = arith.constant dense<0.000000e+00> : vector<8x128x4xf32>
    %9 = tpu.matmul %4, %8, %cst {dimension_numbers = #tpu.dot_dimension_numbers<[2], [2], [1], [1], [0, 0, 0, 1, 1, 1], [0], [0]>} : vector<8x128x32xbf16>, vector<8x4x32xbf16>, vector<8x128x4xf32> -> vector<8x128x4xf32>
    %c0_6 = arith.constant 0 : index
    %c0_7 = arith.constant 0 : index
    %c0_8 = arith.constant 0 : index
    %10 = vector.load %arg4[%c0_6, %c0_7, %c0_8] : memref<8x4x32xbf16, #tpu.memory_space<vmem>>, vector<8x4x32xbf16>
    %cst_9 = arith.constant dense<0.000000e+00> : vector<8x4x128xf32>
    %11 = tpu.matmul %10, %7, %cst_9 {dimension_numbers = #tpu.dot_dimension_numbers<[2], [1], [1], [2], [0, 0, 0, 1, 1, 2], [0], [0]>} : vector<8x4x32xbf16>, vector<8x32x128xbf16>, vector<8x4x128xf32> -> vector<8x4x128xf32>
    %c0_10 = arith.constant 0 : index
    %c0_11 = arith.constant 0 : index
    %c0_12 = arith.constant 0 : index
    %12 = vector.load %arg5[%c0_10, %c0_11, %c0_12] : memref<8x4x32xbf16, #tpu.memory_space<vmem>>, vector<8x4x32xbf16>
    %cst_13 = arith.constant dense<0.000000e+00> : vector<8x4x128xf32>
    %13 = tpu.matmul %12, %7, %cst_13 {dimension_numbers = #tpu.dot_dimension_numbers<[2], [1], [1], [2], [0, 0, 0, 1, 1, 2], [0], [0]>} : vector<8x4x32xbf16>, vector<8x32x128xbf16>, vector<8x4x128xf32> -> vector<8x4x128xf32>
    %14 = arith.truncf %9 : vector<8x128x4xf32> to vector<8x128x4xbf16>
    %15 = arith.truncf %11 : vector<8x4x128xf32> to vector<8x4x128xbf16>
    %16 = arith.truncf %13 : vector<8x4x128xf32> to vector<8x4x128xbf16>
    %cst_14 = arith.constant dense<0.000000e+00> : vector<8x128x128xf32>
    %17 = tpu.matmul %14, %15, %cst_14 {dimension_numbers = #tpu.dot_dimension_numbers<[2], [1], [1], [2], [0, 0, 0, 1, 1, 2], [0], [0]>} : vector<8x128x4xbf16>, vector<8x4x128xbf16>, vector<8x128x128xf32> -> vector<8x128x128xf32>
    %c0_15 = arith.constant 0 : index
    %c0_16 = arith.constant 0 : index
    %18 = vector.load %arg6[%c0_15, %c0_16] : memref<128x128xf32, #tpu.memory_space<vmem>>, vector<128x128xf32>
    %19 = vector.shape_cast %18 : vector<128x128xf32> to vector<1x128x128xf32>
    %20 = vector.broadcast %19 : vector<1x128x128xf32> to vector<8x128x128xf32>
    %21 = arith.addf %17, %20 : vector<8x128x128xf32>
    %cst_17 = arith.constant dense<0xFF800000> : vector<8x128xf32>
    %22 = vector.multi_reduction <maximumf>, %21, %cst_17 [2] : vector<8x128x128xf32> to vector<8x128xf32>
    %23 = vector.shape_cast %22 : vector<8x128xf32> to vector<8x128x1xf32>
    %24 = vector.broadcast %23 : vector<8x128x1xf32> to vector<8x128x128xf32>
    %25 = arith.subf %21, %24 : vector<8x128x128xf32>
    %26 = math.exp %25 : vector<8x128x128xf32>
    %cst_18 = arith.constant dense<0.000000e+00> : vector<8x128xf32>
    %27 = vector.multi_reduction <add>, %26, %cst_18 [2] : vector<8x128x128xf32> to vector<8x128xf32>
    %28 = vector.shape_cast %27 : vector<8x128xf32> to vector<8x128x1xf32>
    %29 = tpu.reciprocal %28 {approx = true} : vector<8x128x1xf32> -> vector<8x128x1xf32>
    %30 = vector.broadcast %29 : vector<8x128x1xf32> to vector<8x128x128xf32>
    %31 = arith.mulf %26, %30 : vector<8x128x128xf32>
    %32 = arith.truncf %31 : vector<8x128x128xf32> to vector<8x128x128xbf16>
    %cst_19 = arith.constant dense<0.000000e+00> : vector<8x4x128xf32>
    %33 = tpu.matmul %16, %32, %cst_19 {dimension_numbers = #tpu.dot_dimension_numbers<[2], [2], [1], [1], [0, 0, 0, 1, 1, 1], [0], [0]>} : vector<8x4x128xbf16>, vector<8x128x128xbf16>, vector<8x4x128xf32> -> vector<8x4x128xf32>
    %c0_20 = arith.constant 0 : index
    %c0_21 = arith.constant 0 : index
    %c0_22 = arith.constant 0 : index
    %34 = vector.load %arg7[%c0_20, %c0_21, %c0_22] : memref<8x4x128xf32, #tpu.memory_space<vmem>>, vector<8x4x128xf32>
    tpu.vector_store %arg7[%c0_20, %c0_21, %c0_22], %33 {strides = array<i32>} : memref<8x4x128xf32, #tpu.memory_space<vmem>>, vector<8x4x128xf32>,
    return
  }
  func.func @transform_0(%arg0: i32) -> (i32, i32) {
    %c0_i32 = arith.constant 0 : i32
    %c0_i32_0 = arith.constant 0 : i32
    return %arg0, %c0_i32 : i32, i32
  }
  func.func @transform_1(%arg0: i32) -> (i32, i32) {
    %c0_i32 = arith.constant 0 : i32
    %c0_i32_0 = arith.constant 0 : i32
    return %c0_i32, %arg0 : i32, i32
  }
  func.func @transform_2(%arg0: i32) -> (i32, i32, i32) {
    %c0_i32 = arith.constant 0 : i32
    %c0_i32_0 = arith.constant 0 : i32
    %c0_i32_1 = arith.constant 0 : i32
    %c0_i32_2 = arith.constant 0 : i32
    return %c0_i32, %c0_i32_0, %c0_i32_1 : i32, i32, i32
  }
  func.func @transform_3(%arg0: i32) -> (i32, i32, i32) {
    %c0_i32 = arith.constant 0 : i32
    %c0_i32_0 = arith.constant 0 : i32
    %c0_i32_1 = arith.constant 0 : i32
    %c0_i32_2 = arith.constant 0 : i32
    return %c0_i32, %c0_i32_0, %c0_i32_1 : i32, i32, i32
  }
  func.func @transform_4(%arg0: i32) -> (i32, i32, i32) {
    %c0_i32 = arith.constant 0 : i32
    %c0_i32_0 = arith.constant 0 : i32
    %c0_i32_1 = arith.constant 0 : i32
    %c0_i32_2 = arith.constant 0 : i32
    return %c0_i32, %c0_i32_0, %c0_i32_1 : i32, i32, i32
  }
  func.func @transform_5(%arg0: i32) -> (i32, i32) {
    %c0_i32 = arith.constant 0 : i32
    %c0_i32_0 = arith.constant 0 : i32
    %c0_i32_1 = arith.constant 0 : i32
    return %c0_i32, %c0_i32_0 : i32, i32
  }
  func.func @transform_6(%arg0: i32) -> (i32, i32, i32) {
    %c0_i32 = arith.constant 0 : i32
    %c0_i32_0 = arith.constant 0 : i32
    %c0_i32_1 = arith.constant 0 : i32
    return %c0_i32, %c0_i32_0, %arg0 : i32, i32, i32
  }
}

</mosaic_0001>

<llo_original>
// kernel: right_forward.1
$region0: #{right_forward.1}
  #allocation0 [shape = 'u32[]', space=smem, size = 0x4, offset = 0x4, fixed_abs, tag = 'smem constant byte address 0x4 - core index']
  #allocation1 [shape = 'u32[144,128]{1,0:T(1,128)}', space=vmem, size = 0x12000, scoped, tag = 'internal scratch']
  %s0 = inlined_call_operand.vmem [shape: bf16[128,32], index: 0, kind: input, shape index: {}]
  %s1 = inlined_call_operand.vmem [shape: bf16[32,128], index: 1, kind: input, shape index: {}]
  %s2 = inlined_call_operand.vmem [shape: bf16[8,4,32], index: 2, kind: input, shape index: {}]
  %s3 = inlined_call_operand.vmem [shape: bf16[8,4,32], index: 3, kind: input, shape index: {}]
  %s4 = inlined_call_operand.vmem [shape: bf16[8,4,32], index: 4, kind: input, shape index: {}]
  %s5 = inlined_call_operand.vmem [shape: f32[128,128], index: 5, kind: input, shape index: {}]
  %s6 = inlined_call_operand.vmem [shape: f32[8,4,128], index: 6, kind: output, shape index: {}]
  %s7 = sld [smem:[#allocation0]]
  $region34: #{right_forward.1} parent=0
    _
  %s9 = ssub.s32 1, %s7
  %s10 = scalar_select 0, %s9, %s7
  // Predicated region
  $region2: #{right_forward.1} parent=0 // pred_check
    _
  $region3: #{right_forward.1} parent=0 // pred_check_branch
    %12 = sbr.rel (0) target = $region5
  $region4: #{right_forward.1} parent=0 // pred_region
    _
  $region5: #{right_forward.1} parent=0 // pred_fallthru
    _
  // Predicated region
  $region6: #{right_forward.1} parent=0 // pred_check
    _
  $region7: #{right_forward.1} parent=0 // pred_check_branch
    %14 = sbr.rel (0) target = $region9
  $region8: #{right_forward.1} parent=0 // pred_region
    _
  $region9: #{right_forward.1} parent=0 // pred_fallthru
    _
  // Predicated region
  $region10: #{right_forward.1} parent=0 // pred_check
    _
  $region11: #{right_forward.1} parent=0 // pred_check_branch
    %16 = sbr.rel (0) target = $region13
  $region12: #{right_forward.1} parent=0 // pred_region
    _
  $region13: #{right_forward.1} parent=0 // pred_fallthru
    _
  // Predicated region
  $region14: #{right_forward.1} parent=0 // pred_check
    _
  $region15: #{right_forward.1} parent=0 // pred_check_branch
    %18 = sbr.rel (0) target = $region17
  $region16: #{right_forward.1} parent=0 // pred_region
    _
  $region17: #{right_forward.1} parent=0 // pred_fallthru
    _
  // Predicated region
  $region18: #{right_forward.1} parent=0 // pred_check
    _
  $region19: #{right_forward.1} parent=0 // pred_check_branch
    %20 = sbr.rel (0) target = $region21
  $region20: #{right_forward.1} parent=0 // pred_region
    _
  $region21: #{right_forward.1} parent=0 // pred_fallthru
    _
  // Predicated region
  $region22: #{right_forward.1} parent=0 // pred_check
    _
  $region23: #{right_forward.1} parent=0 // pred_check_branch
    %22 = sbr.rel (0) target = $region25
  $region24: #{right_forward.1} parent=0 // pred_region
    _
  $region25: #{right_forward.1} parent=0 // pred_fallthru
    _
  %v24 = vld [vmem:[%s0] sm:$0xf]
  %v25 = vld [vmem:[%s0 + $0x4] sm:$0xf]
  %v26 = vld [vmem:[%s0 + $0x8] sm:$0xf]
  %v27 = vld [vmem:[%s0 + $0xc] sm:$0xf]
  %v28 = vld [vmem:[%s0 + $0x10] sm:$0xf]
  %v29 = vld [vmem:[%s0 + $0x14] sm:$0xf]
  %v30 = vld [vmem:[%s0 + $0x18] sm:$0xf]
  %v31 = vld [vmem:[%s0 + $0x1c] sm:$0xf]
  %v32 = vld [vmem:[%s0 + $0x20] sm:$0xf]
  %v33 = vld [vmem:[%s0 + $0x24] sm:$0xf]
  %v34 = vld [vmem:[%s0 + $0x28] sm:$0xf]
  %v35 = vld [vmem:[%s0 + $0x2c] sm:$0xf]
  %v36 = vld [vmem:[%s0 + $0x30] sm:$0xf]
  %v37 = vld [vmem:[%s0 + $0x34] sm:$0xf]
  %v38 = vld [vmem:[%s0 + $0x38] sm:$0xf]
  %v39 = vld [vmem:[%s0 + $0x3c] sm:$0xf]
  %v40 = vld [vmem:[%s1] sm:$0xf]
  %v41 = vld [vmem:[%s1 + $0x4] sm:$0xf]
  %v42 = vld [vmem:[%s1 + $0x8] sm:$0xf]
  %v43 = vld [vmem:[%s1 + $0xc] sm:$0xf]
  %v44 = vld [vmem:[%s2] sm:$0x3]
  %v45 = vld [vmem:[%s2 + $0x2] sm:$0x3]
  %v46 = vld [vmem:[%s2 + $0x4] sm:$0x3]
  %v47 = vld [vmem:[%s2 + $0x6] sm:$0x3]
  %v48 = vld [vmem:[%s2 + $0x8] sm:$0x3]
  %v49 = vld [vmem:[%s2 + $0xa] sm:$0x3]
  %v50 = vld [vmem:[%s2 + $0xc] sm:$0x3]
  %v51 = vld [vmem:[%s2 + $0xe] sm:$0x3]
  %v68 = vunpack.c.l.b16 %v24
  %v69 = vunpack.c.l.b16 %v25
  %v70 = vunpack.c.l.b16 %v26
  %v71 = vunpack.c.l.b16 %v27
  %v72 = vunpack.c.l.b16 %v28
  %v73 = vunpack.c.l.b16 %v29
  %v74 = vunpack.c.l.b16 %v30
  %v75 = vunpack.c.l.b16 %v31
  %v76 = vunpack.c.l.b16 %v32
  %v77 = vunpack.c.l.b16 %v33
  %v78 = vunpack.c.l.b16 %v34
  %v79 = vunpack.c.l.b16 %v35
  %v80 = vunpack.c.l.b16 %v36
  %v81 = vunpack.c.l.b16 %v37
  %v82 = vunpack.c.l.b16 %v38
  %v83 = vunpack.c.l.b16 %v39
  %v84 = vpack.c.b16 %v69, %v68
  %v85 = vpack.c.b16 %v71, %v70
  %v86 = vpack.c.b16 %v73, %v72
  %v87 = vpack.c.b16 %v75, %v74
  %v88 = vpack.c.b16 %v77, %v76
  %v89 = vpack.c.b16 %v79, %v78
  %v90 = vpack.c.b16 %v81, %v80
  %v91 = vpack.c.b16 %v83, %v82
  %vm92 = vcmask 261120
  %v94 = vsel %vm92, %v84, 0
  %v97 = vsel %vm92, %v85, 0
  %v100 = vsel %vm92, %v86, 0
  %v103 = vsel %vm92, %v87, 0
  %v106 = vsel %vm92, %v88, 0
  %v109 = vsel %vm92, %v89, 0
  %v112 = vsel %vm92, %v90, 0
  %v115 = vsel %vm92, %v91, 0
  %v118 = vsel %vm92, %v44, 0
  %120 = vmatprep.subr.bf16.mxu0 0
  %121 = vmatpush1.bf16.xpose.msra.mxu0 %v118
  %122 = vmatprep.subr.bf16.mxu0 0
  %123 = vmatpush1.bf16.xpose.msra.mxu0 0
  %124 = vmatprep.subr.bf16.mxu0 0
  %125 = vmatpush1.bf16.xpose.msra.mxu0 0
  %126 = vmatprep.subr.bf16.mxu0 0
  %127 = vmatpush1.bf16.xpose.msra.mxu0 0
  %128 = vmatprep.subr.bf16.mxu0 0
  %129 = vmatpush1.bf16.xpose.msra.mxu0 0
  %130 = vmatprep.subr.bf16.mxu0 0
  %131 = vmatpush1.bf16.xpose.msra.mxu0 0
  %132 = vmatprep.subr.bf16.mxu0 0
  %133 = vmatpush1.bf16.xpose.msra.mxu0 0
  %134 = vmatprep.subr.bf16.mxu0 0
  %135 = vmatpush1.bf16.xpose.msra.mxu0 0
  %136 = vmatprep.subr.bf16.mxu0 0
  %137 = vmatpush1.bf16.xpose.msra.mxu0 0
  %138 = vmatprep.subr.bf16.mxu0 0
  %139 = vmatpush1.bf16.xpose.msra.mxu0 0
  %140 = vmatprep.subr.bf16.mxu0 0
  %141 = vmatpush1.bf16.xpose.msra.mxu0 0
  %142 = vmatprep.subr.bf16.mxu0 0
  %143 = vmatpush1.bf16.xpose.msra.mxu0 0
  %144 = vmatprep.subr.bf16.mxu0 0
  %145 = vmatpush1.bf16.xpose.msra.mxu0 0
  %146 = vmatprep.subr.bf16.mxu0 0
  %147 = vmatpush1.bf16.xpose.msra.mxu0 0
  %148 = vmatprep.subr.bf16.mxu0 0
  %149 = vmatpush1.bf16.xpose.msra.mxu0 0
  %150 = vmatprep.subr.bf16.mxu0 0
  %151 = vmatpush1.bf16.xpose.msra.mxu0 0
  %152 = vmatprep.mubr.bf16.mxu0 0
  %153 = vmatmul.mubr.bf16.gmra.mrb[0].mxu0 %v94
  %v154 = vpop.f32.mrb[0].mxu0
  %v155 = vadd.f32 0.0, %v154
  %v156 = vpop.f32.mrb[0].mxu0
  %v157 = vpop.f32.mrb[0].mxu0
  %v158 = vadd.f32 0.0, %v157
  %v159 = vpop.f32.mrb[0].mxu0
  %160 = vmatprep.mubr.bf16.mxu0 0
  %161 = vmatmul.mubr.bf16.gmra.mrb[0].mxu0 %v97
  %v162 = vpop.f32.mrb[0].mxu0
  %v163 = vadd.f32 0.0, %v162
  %v164 = vpop.f32.mrb[0].mxu0
  %v165 = vpop.f32.mrb[0].mxu0
  %v166 = vadd.f32 0.0, %v165
  %v167 = vpop.f32.mrb[0].mxu0
  %168 = vmatprep.mubr.bf16.mxu0 0
  %169 = vmatmul.mubr.bf16.gmra.mrb[0].mxu0 %v100
  %v170 = vpop.f32.mrb[0].mxu0
  %v171 = vadd.f32 0.0, %v170
  %v172 = vpop.f32.mrb[0].mxu0
  %v173 = vpop.f32.mrb[0].mxu0
  %v174 = vadd.f32 0.0, %v173
  %v175 = vpop.f32.mrb[0].mxu0
  %176 = vmatprep.mubr.bf16.mxu0 0
  %177 = vmatmul.mubr.bf16.gmra.mrb[0].mxu0 %v103
  %v178 = vpop.f32.mrb[0].mxu0
  %v179 = vadd.f32 0.0, %v178
  %v180 = vpop.f32.mrb[0].mxu0
  %v181 = vpop.f32.mrb[0].mxu0
  %v182 = vadd.f32 0.0, %v181
  %v183 = vpop.f32.mrb[0].mxu0
  %184 = vmatprep.mubr.bf16.mxu0 0
  %185 = vmatmul.mubr.bf16.gmra.mrb[0].mxu0 %v106
  %v186 = vpop.f32.mrb[0].mxu0
  %v187 = vadd.f32 0.0, %v186
  %v188 = vpop.f32.mrb[0].mxu0
  %v189 = vpop.f32.mrb[0].mxu0
  %v190 = vadd.f32 0.0, %v189
  %v191 = vpop.f32.mrb[0].mxu0
  %192 = vmatprep.mubr.bf16.mxu0 0
  %193 = vmatmul.mubr.bf16.gmra.mrb[0].mxu0 %v109
  %v194 = vpop.f32.mrb[0].mxu0
  %v195 = vadd.f32 0.0, %v194
  %v196 = vpop.f32.mrb[0].mxu0
  %v197 = vpop.f32.mrb[0].mxu0
  %v198 = vadd.f32 0.0, %v197
  %v199 = vpop.f32.mrb[0].mxu0
  %200 = vmatprep.mubr.bf16.mxu0 0
  %201 = vmatmul.mubr.bf16.gmra.mrb[0].mxu0 %v112
  %v202 = vpop.f32.mrb[0].mxu0
  %v203 = vadd.f32 0.0, %v202
  %v204 = vpop.f32.mrb[0].mxu0
  %v205 = vpop.f32.mrb[0].mxu0
  %v206 = vadd.f32 0.0, %v205
  %v207 = vpop.f32.mrb[0].mxu0
  %208 = vmatprep.mubr.bf16.mxu0 0
  %209 = vmatmul.mubr.bf16.gmra.mrb[0].mxu0 %v115
  %v210 = vpop.f32.mrb[0].mxu0
  %v211 = vadd.f32 0.0, %v210
  %v212 = vpop.f32.mrb[0].mxu0
  %v213 = vpop.f32.mrb[0].mxu0
  %v214 = vadd.f32 0.0, %v213
  %v215 = vpop.f32.mrb[0].mxu0
  %216 = vdwg.mxu0
  %v218 = vsel %vm92, %v45, 0
  %220 = vmatprep.subr.bf16.mxu0 0
  %221 = vmatpush1.bf16.xpose.msra.mxu0 %v218
  %222 = vmatprep.subr.bf16.mxu0 0
  %223 = vmatpush1.bf16.xpose.msra.mxu0 0
  %224 = vmatprep.subr.bf16.mxu0 0
  %225 = vmatpush1.bf16.xpose.msra.mxu0 0
  %226 = vmatprep.subr.bf16.mxu0 0
  %227 = vmatpush1.bf16.xpose.msra.mxu0 0
  %228 = vmatprep.subr.bf16.mxu0 0
  %229 = vmatpush1.bf16.xpose.msra.mxu0 0
  %230 = vmatprep.subr.bf16.mxu0 0
  %231 = vmatpush1.bf16.xpose.msra.mxu0 0
  %232 = vmatprep.subr.bf16.mxu0 0
  %233 = vmatpush1.bf16.xpose.msra.mxu0 0
  %234 = vmatprep.subr.bf16.mxu0 0
  %235 = vmatpush1.bf16.xpose.msra.mxu0 0
  %236 = vmatprep.subr.bf16.mxu0 0
  %237 = vmatpush1.bf16.xpose.msra.mxu0 0
  %238 = vmatprep.subr.bf16.mxu0 0
  %239 = vmatpush1.bf16.xpose.msra.mxu0 0
  %240 = vmatprep.subr.bf16.mxu0 0
  %241 = vmatpush1.bf16.xpose.msra.mxu0 0
  %242 = vmatprep.subr.bf16.mxu0 0
  %243 = vmatpush1.bf16.xpose.msra.mxu0 0
  %244 = vmatprep.subr.bf16.mxu0 0
  %245 = vmatpush1.bf16.xpose.msra.mxu0 0
  %246 = vmatprep.subr.bf16.mxu0 0
  %247 = vmatpush1.bf16.xpose.msra.mxu0 0
  %248 = vmatprep.subr.bf16.mxu0 0
  %249 = vmatpush1.bf16.xpose.msra.mxu0 0
  %250 = vmatprep.subr.bf16.mxu0 0
  %251 = vmatpush1.bf16.xpose.msra.mxu0 0
  %252 = vmatprep.mubr.bf16.mxu0 0
  %253 = vmatmul.mubr.bf16.gmra.mrb[0].mxu0 %v94
  %v254 = vpop.f32.mrb[0].mxu0
  %v255 = vadd.f32 0.0, %v254
  %v256 = vpop.f32.mrb[0].mxu0
  %v257 = vpop.f32.mrb[0].mxu0
  %v258 = vadd.f32 0.0, %v257
  %v259 = vpop.f32.mrb[0].mxu0
  %260 = vmatprep.mubr.bf16.mxu0 0
  %261 = vmatmul.mubr.bf16.gmra.mrb[0].mxu0 %v97
  %v262 = vpop.f32.mrb[0].mxu0
  %v263 = vadd.f32 0.0, %v262
  %v264 = vpop.f32.mrb[0].mxu0
  %v265 = vpop.f32.mrb[0].mxu0
  %v266 = vadd.f32 0.0, %v265
  %v267 = vpop.f32.mrb[0].mxu0
  %268 = vmatprep.mubr.bf16.mxu0 0
  %269 = vmatmul.mubr.bf16.gmra.mrb[0].mxu0 %v100
  %v270 = vpop.f32.mrb[0].mxu0
  %v271 = vadd.f32 0.0, %v270
  %v272 = vpop.f32.mrb[0].mxu0
  %v273 = vpop.f32.mrb[0].mxu0
  %v274 = vadd.f32 0.0, %v273
  %v275 = vpop.f32.mrb[0].mxu0
  %276 = vmatprep.mubr.bf16.mxu0 0
  %277 = vmatmul.mubr.bf16.gmra.mrb[0].mxu0 %v103
  %v278 = vpop.f32.mrb[0].mxu0
  %v279 = vadd.f32 0.0, %v278
  %v280 = vpop.f32.mrb[0].mxu0
  %v281 = vpop.f32.mrb[0].mxu0
  %v282 = vadd.f32 0.0, %v281
  %v283 = vpop.f32.mrb[0].mxu0
  %284 = vmatprep.mubr.bf16.mxu0 0
  %285 = vmatmul.mubr.bf16.gmra.mrb[0].mxu0 %v106
  %v286 = vpop.f32.mrb[0].mxu0
  %v287 = vadd.f32 0.0, %v286
  %v288 = vpop.f32.mrb[0].mxu0
  %v289 = vpop.f32.mrb[0].mxu0
  %v290 = vadd.f32 0.0, %v289
  %v291 = vpop.f32.mrb[0].mxu0
  %292 = vmatprep.mubr.bf16.mxu0 0
  %293 = vmatmul.mubr.bf16.gmra.mrb[0].mxu0 %v109
  %v294 = vpop.f32.mrb[0].mxu0
  %v295 = vadd.f32 0.0, %v294
  %v296 = vpop.f32.mrb[0].mxu0
  %v297 = vpop.f32.mrb[0].mxu0
  %v298 = vadd.f32 0.0, %v297
  %v299 = vpop.f32.mrb[0].mxu0
  %300 = vmatprep.mubr.bf16.mxu0 0
  %301 = vmatmul.mubr.bf16.gmra.mrb[0].mxu0 %v112
  %v302 = vpop.f32.mrb[0].mxu0
  %v303 = vadd.f32 0.0, %v302
  %v304 = vpop.f32.mrb[0].mxu0
  %v305 = vpop.f32.mrb[0].mxu0
  %v306 = vadd.f32 0.0, %v305
  %v307 = vpop.f32.mrb[0].mxu0
  %308 = vmatprep.mubr.bf16.mxu0 0
  %309 = vmatmul.mubr.bf16.gmra.mrb[0].mxu0 %v115
  %v310 = vpop.f32.mrb[0].mxu0
  %v311 = vadd.f32 0.0, %v310
  %v312 = vpop.f32.mrb[0].mxu0
  %v313 = vpop.f32.mrb[0].mxu0
  %v314 = vadd.f32 0.0, %v313
  %v315 = vpop.f32.mrb[0].mxu0
  %316 = vdwg.mxu0
  %v318 = vsel %vm92, %v46, 0
  %320 = vmatprep.subr.bf16.mxu0 0
  %321 = vmatpush1.bf16.xpose.msra.mxu0 %v318
  %322 = vmatprep.subr.bf16.mxu0 0
  %323 = vmatpush1.bf16.xpose.msra.mxu0 0
  %324 = vmatprep.subr.bf16.mxu0 0
  %325 = vmatpush1.bf16.xpose.msra.mxu0 0
  %326 = vmatprep.subr.bf16.mxu0 0
  %327 = vmatpush1.bf16.xpose.msra.mxu0 0
  %328 = vmatprep.subr.bf16.mxu0 0
  %329 = vmatpush1.bf16.xpose.msra.mxu0 0
  %330 = vmatprep.subr.bf16.mxu0 0
  %331 = vmatpush1.bf16.xpose.msra.mxu0 0
  %332 = vmatprep.subr.bf16.mxu0 0
  %333 = vmatpush1.bf16.xpose.msra.mxu0 0
  %334 = vmatprep.subr.bf16.mxu0 0
  %335 = vmatpush1.bf16.xpose.msra.mxu0 0
  %336 = vmatprep.subr.bf16.mxu0 0
  %337 = vmatpush1.bf16.xpose.msra.mxu0 0
  %338 = vmatprep.subr.bf16.mxu0 0
  %339 = vmatpush1.bf16.xpose.msra.mxu0 0
  %340 = vmatprep.subr.bf16.mxu0 0
  %341 = vmatpush1.bf16.xpose.msra.mxu0 0
  %342 = vmatprep.subr.bf16.mxu0 0
  %343 = vmatpush1.bf16.xpose.msra.mxu0 0
  %344 = vmatprep.subr.bf16.mxu0 0
  %345 = vmatpush1.bf16.xpose.msra.mxu0 0
  %346 = vmatprep.subr.bf16.mxu0 0
  %347 = vmatpush1.bf16.xpose.msra.mxu0 0
  %348 = vmatprep.subr.bf16.mxu0 0
  %349 = vmatpush1.bf16.xpose.msra.mxu0 0
  %350 = vmatprep.subr.bf16.mxu0 0
  %351 = vmatpush1.bf16.xpose.msra.mxu0 0
  %352 = vmatprep.mubr.bf16.mxu0 0
  %353 = vmatmul.mubr.bf16.gmra.mrb[0].mxu0 %v94
  %v354 = vpop.f32.mrb[0].mxu0
  %v355 = vadd.f32 0.0, %v354
  %v356 = vpop.f32.mrb[0].mxu0
  %v357 = vpop.f32.mrb[0].mxu0
  %v358 = vadd.f32 0.0, %v357
  %v359 = vpop.f32.mrb[0].mxu0
  %360 = vmatprep.mubr.bf16.mxu0 0
  %361 = vmatmul.mubr.bf16.gmra.mrb[0].mxu0 %v97
  %v362 = vpop.f32.mrb[0].mxu0
  %v363 = vadd.f32 0.0, %v362
  %v364 = vpop.f32.mrb[0].mxu0
  %v365 = vpop.f32.mrb[0].mxu0
  %v366 = vadd.f32 0.0, %v365
  %v367 = vpop.f32.mrb[0].mxu0
  %368 = vmatprep.mubr.bf16.mxu0 0
  %369 = vmatmul.mubr.bf16.gmra.mrb[0].mxu0 %v100
  %v370 = vpop.f32.mrb[0].mxu0
  %v371 = vadd.f32 0.0, %v370
  %v372 = vpop.f32.mrb[0].mxu0
  %v373 = vpop.f32.mrb[0].mxu0
  %v374 = vadd.f32 0.0, %v373
  %v375 = vpop.f32.mrb[0].mxu0
  %376 = vmatprep.mubr.bf16.mxu0 0
  %377 = vmatmul.mubr.bf16.gmra.mrb[0].mxu0 %v103
  %v378 = vpop.f32.mrb[0].mxu0
  %v379 = vadd.f32 0.0, %v378
  %v380 = vpop.f32.mrb[0].mxu0
  %v381 = vpop.f32.mrb[0].mxu0
  %v382 = vadd.f32 0.0, %v381
  %v383 = vpop.f32.mrb[0].mxu0
  %384 = vmatprep.mubr.bf16.mxu0 0
  %385 = vmatmul.mubr.bf16.gmra.mrb[0].mxu0 %v106
  %v386 = vpop.f32.mrb[0].mxu0
  %v387 = vadd.f32 0.0, %v386
  %v388 = vpop.f32.mrb[0].mxu0
  %v389 = vpop.f32.mrb[0].mxu0
  %v390 = vadd.f32 0.0, %v389
  %v391 = vpop.f32.mrb[0].mxu0
  %392 = vmatprep.mubr.bf16.mxu0 0
  %393 = vmatmul.mubr.bf16.gmra.mrb[0].mxu0 %v109
  %v394 = vpop.f32.mrb[0].mxu0
  %v395 = vadd.f32 0.0, %v394
  %v396 = vpop.f32.mrb[0].mxu0
  %v397 = vpop.f32.mrb[0].mxu0
  %v398 = vadd.f32 0.0, %v397
  %v399 = vpop.f32.mrb[0].mxu0
  %400 = vmatprep.mubr.bf16.mxu0 0
  %401 = vmatmul.mubr.bf16.gmra.mrb[0].mxu0 %v112
  %v402 = vpop.f32.mrb[0].mxu0
  %v403 = vadd.f32 0.0, %v402
  %v404 = vpop.f32.mrb[0].mxu0
  %v405 = vpop.f32.mrb[0].mxu0
  %v406 = vadd.f32 0.0, %v405
  %v407 = vpop.f32.mrb[0].mxu0
  %408 = vmatprep.mubr.bf16.mxu0 0
  %409 = vmatmul.mubr.bf16.gmra.mrb[0].mxu0 %v115
  %v410 = vpop.f32.mrb[0].mxu0
  %v411 = vadd.f32 0.0, %v410
  %v412 = vpop.f32.mrb[0].mxu0
  %v413 = vpop.f32.mrb[0].mxu0
  %v414 = vadd.f32 0.0, %v413
  %v415 = vpop.f32.mrb[0].mxu0
  %416 = vdwg.mxu0
  %v418 = vsel %vm92, %v47, 0
  %420 = vmatprep.subr.bf16.mxu0 0
  %421 = vmatpush1.bf16.xpose.msra.mxu0 %v418
  %422 = vmatprep.subr.bf16.mxu0 0
  %423 = vmatpush1.bf16.xpose.msra.mxu0 0
  %424 = vmatprep.subr.bf16.mxu0 0
  %425 = vmatpush1.bf16.xpose.msra.mxu0 0
  %426 = vmatprep.subr.bf16.mxu0 0
  %427 = vmatpush1.bf16.xpose.msra.mxu0 0
  %428 = vmatprep.subr.bf16.mxu0 0
  %429 = vmatpush1.bf16.xpose.msra.mxu0 0
  %430 = vmatprep.subr.bf16.mxu0 0
  %431 = vmatpush1.bf16.xpose.msra.mxu0 0
  %432 = vmatprep.subr.bf16.mxu0 0
  %433 = vmatpush1.bf16.xpose.msra.mxu0 0
  %434 = vmatprep.subr.bf16.mxu0 0
  %435 = vmatpush1.bf16.xpose.msra.mxu0 0
  %436 = vmatprep.subr.bf16.mxu0 0
  %437 = vmatpush1.bf16.xpose.msra.mxu0 0
  %438 = vmatprep.subr.bf16.mxu0 0
  %439 = vmatpush1.bf16.xpose.msra.mxu0 0
  %440 = vmatprep.subr.bf16.mxu0 0
  %441 = vmatpush1.bf16.xpose.msra.mxu0 0
  %442 = vmatprep.subr.bf16.mxu0 0
  %443 = vmatpush1.bf16.xpose.msra.mxu0 0
  %444 = vmatprep.subr.bf16.mxu0 0
  %445 = vmatpush1.bf16.xpose.msra.mxu0 0
  %446 = vmatprep.subr.bf16.mxu0 0
  %447 = vmatpush1.bf16.xpose.msra.mxu0 0
  %448 = vmatprep.subr.bf16.mxu0 0
  %449 = vmatpush1.bf16.xpose.msra.mxu0 0
  %450 = vmatprep.subr.bf16.mxu0 0
  %451 = vmatpush1.bf16.xpose.msra.mxu0 0
  %452 = vmatprep.mubr.bf16.mxu0 0
  %453 = vmatmul.mubr.bf16.gmra.mrb[0].mxu0 %v94
  %v454 = vpop.f32.mrb[0].mxu0
  %v455 = vadd.f32 0.0, %v454
  %v456 = vpop.f32.mrb[0].mxu0
  %v457 = vpop.f32.mrb[0].mxu0
  %v458 = vadd.f32 0.0, %v457
  %v459 = vpop.f32.mrb[0].mxu0
  %460 = vmatprep.mubr.bf16.mxu0 0
  %461 = vmatmul.mubr.bf16.gmra.mrb[0].mxu0 %v97
  %v462 = vpop.f32.mrb[0].mxu0
  %v463 = vadd.f32 0.0, %v462
  %v464 = vpop.f32.mrb[0].mxu0
  %v465 = vpop.f32.mrb[0].mxu0
  %v466 = vadd.f32 0.0, %v465
  %v467 = vpop.f32.mrb[0].mxu0
  %468 = vmatprep.mubr.bf16.mxu0 0
  %469 = vmatmul.mubr.bf16.gmra.mrb[0].mxu0 %v100
  %v470 = vpop.f32.mrb[0].mxu0
  %v471 = vadd.f32 0.0, %v470
  %v472 = vpop.f32.mrb[0].mxu0
  %v473 = vpop.f32.mrb[0].mxu0
  %v474 = vadd.f32 0.0, %v473
  %v475 = vpop.f32.mrb[0].mxu0
  %476 = vmatprep.mubr.bf16.mxu0 0
  %477 = vmatmul.mubr.bf16.gmra.mrb[0].mxu0 %v103
  %v478 = vpop.f32.mrb[0].mxu0
  %v479 = vadd.f32 0.0, %v478
  %v480 = vpop.f32.mrb[0].mxu0
  %v481 = vpop.f32.mrb[0].mxu0
  %v482 = vadd.f32 0.0, %v481
  %v483 = vpop.f32.mrb[0].mxu0
  %484 = vmatprep.mubr.bf16.mxu0 0
  %485 = vmatmul.mubr.bf16.gmra.mrb[0].mxu0 %v106
  %v486 = vpop.f32.mrb[0].mxu0
  %v487 = vadd.f32 0.0, %v486
  %v488 = vpop.f32.mrb[0].mxu0
  %v489 = vpop.f32.mrb[0].mxu0
  %v490 = vadd.f32 0.0, %v489
  %v491 = vpop.f32.mrb[0].mxu0
  %492 = vmatprep.mubr.bf16.mxu0 0
  %493 = vmatmul.mubr.bf16.gmra.mrb[0].mxu0 %v109
  %v494 = vpop.f32.mrb[0].mxu0
  %v495 = vadd.f32 0.0, %v494
  %v496 = vpop.f32.mrb[0].mxu0
  %v497 = vpop.f32.mrb[0].mxu0
  %v498 = vadd.f32 0.0, %v497
  %v499 = vpop.f32.mrb[0].mxu0
  %500 = vmatprep.mubr.bf16.mxu0 0
  %501 = vmatmul.mubr.bf16.gmra.mrb[0].mxu0 %v112
  %v502 = vpop.f32.mrb[0].mxu0
  %v503 = vadd.f32 0.0, %v502
  %v504 = vpop.f32.mrb[0].mxu0
  %v505 = vpop.f32.mrb[0].mxu0
  %v506 = vadd.f32 0.0, %v505
  %v507 = vpop.f32.mrb[0].mxu0
  %508 = vmatprep.mubr.bf16.mxu0 0
  %509 = vmatmul.mubr.bf16.gmra.mrb[0].mxu0 %v115
  %v510 = vpop.f32.mrb[0].mxu0
  %v511 = vadd.f32 0.0, %v510
  %v512 = vpop.f32.mrb[0].mxu0
  %v513 = vpop.f32.mrb[0].mxu0
  %v514 = vadd.f32 0.0, %v513
  %v515 = vpop.f32.mrb[0].mxu0
  %516 = vdwg.mxu0
  %v518 = vsel %vm92, %v48, 0
  %520 = vmatprep.subr.bf16.mxu0 0
  %521 = vmatpush1.bf16.xpose.msra.mxu0 %v518
  %522 = vmatprep.subr.bf16.mxu0 0
  %523 = vmatpush1.bf16.xpose.msra.mxu0 0
  %524 = vmatprep.subr.bf16.mxu0 0
  %525 = vmatpush1.bf16.xpose.msra.mxu0 0
  %526 = vmatprep.subr.bf16.mxu0 0
  %527 = vmatpush1.bf16.xpose.msra.mxu0 0
  %528 = vmatprep.subr.bf16.mxu0 0
  %529 = vmatpush1.bf16.xpose.msra.mxu0 0
  %530 = vmatprep.subr.bf16.mxu0 0
  %531 = vmatpush1.bf16.xpose.msra.mxu0 0
  %532 = vmatprep.subr.bf16.mxu0 0
  %533 = vmatpush1.bf16.xpose.msra.mxu0 0
  %534 = vmatprep.subr.bf16.mxu0 0
  %535 = vmatpush1.bf16.xpose.msra.mxu0 0
  %536 = vmatprep.subr.bf16.mxu0 0
  %537 = vmatpush1.bf16.xpose.msra.mxu0 0
  %538 = vmatprep.subr.bf16.mxu0 0
  %539 = vmatpush1.bf16.xpose.msra.mxu0 0
  %540 = vmatprep.subr.bf16.mxu0 0
  %541 = vmatpush1.bf16.xpose.msra.mxu0 0
  %542 = vmatprep.subr.bf16.mxu0 0
  %543 = vmatpush1.bf16.xpose.msra.mxu0 0
  %544 = vmatprep.subr.bf16.mxu0 0
  %545 = vmatpush1.bf16.xpose.msra.mxu0 0
  %546 = vmatprep.subr.bf16.mxu0 0
  %547 = vmatpush1.bf16.xpose.msra.mxu0 0
  %548 = vmatprep.subr.bf16.mxu0 0
  %549 = vmatpush1.bf16.xpose.msra.mxu0 0
  %550 = vmatprep.subr.bf16.mxu0 0
  %551 = vmatpush1.bf16.xpose.msra.mxu0 0
  %552 = vmatprep.mubr.bf16.mxu0 0
  %553 = vmatmul.mubr.bf16.gmra.mrb[0].mxu0 %v94
  %v554 = vpop.f32.mrb[0].mxu0
  %v555 = vadd.f32 0.0, %v554
  %v556 = vpop.f32.mrb[0].mxu0
  %v557 = vpop.f32.mrb[0].mxu0
  %v558 = vadd.f32 0.0, %v557
  %v559 = vpop.f32.mrb[0].mxu0
  %560 = vmatprep.mubr.bf16.mxu0 0
  %561 = vmatmul.mubr.bf16.gmra.mrb[0].mxu0 %v97
  %v562 = vpop.f32.mrb[0].mxu0
  %v563 = vadd.f32 0.0, %v562
  %v564 = vpop.f32.mrb[0].mxu0
  %v565 = vpop.f32.mrb[0].mxu0
  %v566 = vadd.f32 0.0, %v565
  %v567 = vpop.f32.mrb[0].mxu0
  %568 = vmatprep.mubr.bf16.mxu0 0
  %569 = vmatmul.mubr.bf16.gmra.mrb[0].mxu0 %v100
  %v570 = vpop.f32.mrb[0].mxu0
  %v571 = vadd.f32 0.0, %v570
  %v572 = vpop.f32.mrb[0].mxu0
  %v573 = vpop.f32.mrb[0].mxu0
  %v574 = vadd.f32 0.0, %v573
  %v575 = vpop.f32.mrb[0].mxu0
  %576 = vmatprep.mubr.bf16.mxu0 0
  %577 = vmatmul.mubr.bf16.gmra.mrb[0].mxu0 %v103
  %v578 = vpop.f32.mrb[0].mxu0
  %v579 = vadd.f32 0.0, %v578
  %v580 = vpop.f32.mrb[0].mxu0
  %v581 = vpop.f32.mrb[0].mxu0
  %v582 = vadd.f32 0.0, %v581
  %v583 = vpop.f32.mrb[0].mxu0
  %584 = vmatprep.mubr.bf16.mxu0 0
  %585 = vmatmul.mubr.bf16.gmra.mrb[0].mxu0 %v106
  %v586 = vpop.f32.mrb[0].mxu0
  %v587 = vadd.f32 0.0, %v586
  %v588 = vpop.f32.mrb[0].mxu0
  %v589 = vpop.f32.mrb[0].mxu0
  %v590 = vadd.f32 0.0, %v589
  %v591 = vpop.f32.mrb[0].mxu0
  %592 = vmatprep.mubr.bf16.mxu0 0
  %593 = vmatmul.mubr.bf16.gmra.mrb[0].mxu0 %v109
  %v594 = vpop.f32.mrb[0].mxu0
  %v595 = vadd.f32 0.0, %v594
  %v596 = vpop.f32.mrb[0].mxu0
  %v597 = vpop.f32.mrb[0].mxu0
  %v598 = vadd.f32 0.0, %v597
  %v599 = vpop.f32.mrb[0].mxu0
  %600 = vmatprep.mubr.bf16.mxu0 0
  %601 = vmatmul.mubr.bf16.gmra.mrb[0].mxu0 %v112
  %v602 = vpop.f32.mrb[0].mxu0
  %v603 = vadd.f32 0.0, %v602
  %v604 = vpop.f32.mrb[0].mxu0
  %v605 = vpop.f32.mrb[0].mxu0
  %v606 = vadd.f32 0.0, %v605
  %v607 = vpop.f32.mrb[0].mxu0
  %608 = vmatprep.mubr.bf16.mxu0 0
  %609 = vmatmul.mubr.bf16.gmra.mrb[0].mxu0 %v115
  %v610 = vpop.f32.mrb[0].mxu0
  %v611 = vadd.f32 0.0, %v610
  %v612 = vpop.f32.mrb[0].mxu0
  %v613 = vpop.f32.mrb[0].mxu0
  %v614 = vadd.f32 0.0, %v613
  %v615 = vpop.f32.mrb[0].mxu0
  %616 = vdwg.mxu0
  %v618 = vsel %vm92, %v49, 0
  %620 = vmatprep.subr.bf16.mxu0 0
  %621 = vmatpush1.bf16.xpose.msra.mxu0 %v618
  %622 = vmatprep.subr.bf16.mxu0 0
  %623 = vmatpush1.bf16.xpose.msra.mxu0 0
  %624 = vmatprep.subr.bf16.mxu0 0
  %625 = vmatpush1.bf16.xpose.msra.mxu0 0
  %626 = vmatprep.subr.bf16.mxu0 0
  %627 = vmatpush1.bf16.xpose.msra.mxu0 0
  %628 = vmatprep.subr.bf16.mxu0 0
  %629 = vmatpush1.bf16.xpose.msra.mxu0 0
  %630 = vmatprep.subr.bf16.mxu0 0
  %631 = vmatpush1.bf16.xpose.msra.mxu0 0
  %632 = vmatprep.subr.bf16.mxu0 0
  %633 = vmatpush1.bf16.xpose.msra.mxu0 0
  %634 = vmatprep.subr.bf16.mxu0 0
  %635 = vmatpush1.bf16.xpose.msra.mxu0 0
  %636 = vmatprep.subr.bf16.mxu0 0
  %637 = vmatpush1.bf16.xpose.msra.mxu0 0
  %638 = vmatprep.subr.bf16.mxu0 0
  %639 = vmatpush1.bf16.xpose.msra.mxu0 0
  %640 = vmatprep.subr.bf16.mxu0 0
  %641 = vmatpush1.bf16.xpose.msra.mxu0 0
  %642 = vmatprep.subr.bf16.mxu0 0
  %643 = vmatpush1.bf16.xpose.msra.mxu0 0
  %644 = vmatprep.subr.bf16.mxu0 0
  %645 = vmatpush1.bf16.xpose.msra.mxu0 0
  %646 = vmatprep.subr.bf16.mxu0 0
  %647 = vmatpush1.bf16.xpose.msra.mxu0 0
  %648 = vmatprep.subr.bf16.mxu0 0
  %649 = vmatpush1.bf16.xpose.msra.mxu0 0
  %650 = vmatprep.subr.bf16.mxu0 0
  %651 = vmatpush1.bf16.xpose.msra.mxu0 0
  %652 = vmatprep.mubr.bf16.mxu0 0
  %653 = vmatmul.mubr.bf16.gmra.mrb[0].mxu0 %v94
  %v654 = vpop.f32.mrb[0].mxu0
  %v655 = vadd.f32 0.0, %v654
  %v656 = vpop.f32.mrb[0].mxu0
  %v657 = vpop.f32.mrb[0].mxu0
  %v658 = vadd.f32 0.0, %v657
  %v659 = vpop.f32.mrb[0].mxu0
  %660 = vmatprep.mubr.bf16.mxu0 0
  %661 = vmatmul.mubr.bf16.gmra.mrb[0].mxu0 %v97
  %v662 = vpop.f32.mrb[0].mxu0
  %v663 = vadd.f32 0.0, %v662
  %v664 = vpop.f32.mrb[0].mxu0
  %v665 = vpop.f32.mrb[0].mxu0
  %v666 = vadd.f32 0.0, %v665
  %v667 = vpop.f32.mrb[0].mxu0
  %668 = vmatprep.mubr.bf16.mxu0 0
  %669 = vmatmul.mubr.bf16.gmra.mrb[0].mxu0 %v100
  %v670 = vpop.f32.mrb[0].mxu0
  %v671 = vadd.f32 0.0, %v670
  %v672 = vpop.f32.mrb[0].mxu0
  %v673 = vpop.f32.mrb[0].mxu0
  %v674 = vadd.f32 0.0, %v673
  %v675 = vpop.f32.mrb[0].mxu0
  %676 = vmatprep.mubr.bf16.mxu0 0
  %677 = vmatmul.mubr.bf16.gmra.mrb[0].mxu0 %v103
  %v678 = vpop.f32.mrb[0].mxu0
  %v679 = vadd.f32 0.0, %v678
  %v680 = vpop.f32.mrb[0].mxu0
  %v681 = vpop.f32.mrb[0].mxu0
  %v682 = vadd.f32 0.0, %v681
  %v683 = vpop.f32.mrb[0].mxu0
  %684 = vmatprep.mubr.bf16.mxu0 0
  %685 = vmatmul.mubr.bf16.gmra.mrb[0].mxu0 %v106
  %v686 = vpop.f32.mrb[0].mxu0
  %v687 = vadd.f32 0.0, %v686
  %v688 = vpop.f32.mrb[0].mxu0
  %v689 = vpop.f32.mrb[0].mxu0
  %v690 = vadd.f32 0.0, %v689
  %v691 = vpop.f32.mrb[0].mxu0
  %692 = vmatprep.mubr.bf16.mxu0 0
  %693 = vmatmul.mubr.bf16.gmra.mrb[0].mxu0 %v109
  %v694 = vpop.f32.mrb[0].mxu0
  %v695 = vadd.f32 0.0, %v694
  %v696 = vpop.f32.mrb[0].mxu0
  %v697 = vpop.f32.mrb[0].mxu0
  %v698 = vadd.f32 0.0, %v697
  %v699 = vpop.f32.mrb[0].mxu0
  %700 = vmatprep.mubr.bf16.mxu0 0
  %701 = vmatmul.mubr.bf16.gmra.mrb[0].mxu0 %v112
  %v702 = vpop.f32.mrb[0].mxu0
  %v703 = vadd.f32 0.0, %v702
  %v704 = vpop.f32.mrb[0].mxu0
  %v705 = vpop.f32.mrb[0].mxu0
  %v706 = vadd.f32 0.0, %v705
  %v707 = vpop.f32.mrb[0].mxu0
  %708 = vmatprep.mubr.bf16.mxu0 0
  %709 = vmatmul.mubr.bf16.gmra.mrb[0].mxu0 %v115
  %v710 = vpop.f32.mrb[0].mxu0
  %v711 = vadd.f32 0.0, %v710
  %v712 = vpop.f32.mrb[0].mxu0
  %v713 = vpop.f32.mrb[0].mxu0
  %v714 = vadd.f32 0.0, %v713
  %v715 = vpop.f32.mrb[0].mxu0
  %716 = vdwg.mxu0
  %v718 = vsel %vm92, %v50, 0
  %720 = vmatprep.subr.bf16.mxu0 0
  %721 = vmatpush1.bf16.xpose.msra.mxu0 %v718
  %722 = vmatprep.subr.bf16.mxu0 0
  %723 = vmatpush1.bf16.xpose.msra.mxu0 0
  %724 = vmatprep.subr.bf16.mxu0 0
  %725 = vmatpush1.bf16.xpose.msra.mxu0 0
  %726 = vmatprep.subr.bf16.mxu0 0
  %727 = vmatpush1.bf16.xpose.msra.mxu0 0
  %728 = vmatprep.subr.bf16.mxu0 0
  %729 = vmatpush1.bf16.xpose.msra.mxu0 0
  %730 = vmatprep.subr.bf16.mxu0 0
  %731 = vmatpush1.bf16.xpose.msra.mxu0 0
  %732 = vmatprep.subr.bf16.mxu0 0
  %733 = vmatpush1.bf16.xpose.msra.mxu0 0
  %734 = vmatprep.subr.bf16.mxu0 0
  %735 = vmatpush1.bf16.xpose.msra.mxu0 0
  %736 = vmatprep.subr.bf16.mxu0 0
  %737 = vmatpush1.bf16.xpose.msra.mxu0 0
  %738 = vmatprep.subr.bf16.mxu0 0
  %739 = vmatpush1.bf16.xpose.msra.mxu0 0
  %740 = vmatprep.subr.bf16.mxu0 0
  %741 = vmatpush1.bf16.xpose.msra.mxu0 0
  %742 = vmatprep.subr.bf16.mxu0 0
  %743 = vmatpush1.bf16.xpose.msra.mxu0 0
  %744 = vmatprep.subr.bf16.mxu0 0
  %745 = vmatpush1.bf16.xpose.msra.mxu0 0
  %746 = vmatprep.subr.bf16.mxu0 0
  %747 = vmatpush1.bf16.xpose.msra.mxu0 0
  %748 = vmatprep.subr.bf16.mxu0 0
  %749 = vmatpush1.bf16.xpose.msra.mxu0 0
  %750 = vmatprep.subr.bf16.mxu0 0
  %751 = vmatpush1.bf16.xpose.msra.mxu0 0
  %752 = vmatprep.mubr.bf16.mxu0 0
  %753 = vmatmul.mubr.bf16.gmra.mrb[0].mxu0 %v94
  %v754 = vpop.f32.mrb[0].mxu0
  %v755 = vadd.f32 0.0, %v754
  %v756 = vpop.f32.mrb[0].mxu0
  %v757 = vpop.f32.mrb[0].mxu0
  %v758 = vadd.f32 0.0, %v757
  %v759 = vpop.f32.mrb[0].mxu0
  %760 = vmatprep.mubr.bf16.mxu0 0
  %761 = vmatmul.mubr.bf16.gmra.mrb[0].mxu0 %v97
  %v762 = vpop.f32.mrb[0].mxu0
  %v763 = vadd.f32 0.0, %v762
  %v764 = vpop.f32.mrb[0].mxu0
  %v765 = vpop.f32.mrb[0].mxu0
  %v766 = vadd.f32 0.0, %v765
  %v767 = vpop.f32.mrb[0].mxu0
  %768 = vmatprep.mubr.bf16.mxu0 0
  %769 = vmatmul.mubr.bf16.gmra.mrb[0].mxu0 %v100
  %v770 = vpop.f32.mrb[0].mxu0
  %v771 = vadd.f32 0.0, %v770
  %v772 = vpop.f32.mrb[0].mxu0
  %v773 = vpop.f32.mrb[0].mxu0
  %v774 = vadd.f32 0.0, %v773
  %v775 = vpop.f32.mrb[0].mxu0
  %776 = vmatprep.mubr.bf16.mxu0 0
  %777 = vmatmul.mubr.bf16.gmra.mrb[0].mxu0 %v103
  %v778 = vpop.f32.mrb[0].mxu0
  %v779 = vadd.f32 0.0, %v778
  %v780 = vpop.f32.mrb[0].mxu0
  %v781 = vpop.f32.mrb[0].mxu0
  %v782 = vadd.f32 0.0, %v781
  %v783 = vpop.f32.mrb[0].mxu0
  %784 = vmatprep.mubr.bf16.mxu0 0
  %785 = vmatmul.mubr.bf16.gmra.mrb[0].mxu0 %v106
  %v786 = vpop.f32.mrb[0].mxu0
  %v787 = vadd.f32 0.0, %v786
  %v788 = vpop.f32.mrb[0].mxu0
  %v789 = vpop.f32.mrb[0].mxu0
  %v790 = vadd.f32 0.0, %v789
  %v791 = vpop.f32.mrb[0].mxu0
  %792 = vmatprep.mubr.bf16.mxu0 0
  %793 = vmatmul.mubr.bf16.gmra.mrb[0].mxu0 %v109
  %v794 = vpop.f32.mrb[0].mxu0
  %v795 = vadd.f32 0.0, %v794
  %v796 = vpop.f32.mrb[0].mxu0
  %v797 = vpop.f32.mrb[0].mxu0
  %v798 = vadd.f32 0.0, %v797
  %v799 = vpop.f32.mrb[0].mxu0
  %800 = vmatprep.mubr.bf16.mxu0 0
  %801 = vmatmul.mubr.bf16.gmra.mrb[0].mxu0 %v112
  %v802 = vpop.f32.mrb[0].mxu0
  %v803 = vadd.f32 0.0, %v802
  %v804 = vpop.f32.mrb[0].mxu0
  %v805 = vpop.f32.mrb[0].mxu0
  %v806 = vadd.f32 0.0, %v805
  %v807 = vpop.f32.mrb[0].mxu0
  %808 = vmatprep.mubr.bf16.mxu0 0
  %809 = vmatmul.mubr.bf16.gmra.mrb[0].mxu0 %v115
  %v810 = vpop.f32.mrb[0].mxu0
  %v811 = vadd.f32 0.0, %v810
  %v812 = vpop.f32.mrb[0].mxu0
  %v813 = vpop.f32.mrb[0].mxu0
  %v814 = vadd.f32 0.0, %v813
  %v815 = vpop.f32.mrb[0].mxu0
  %816 = vdwg.mxu0
  %v818 = vsel %vm92, %v51, 0
  %820 = vmatprep.subr.bf16.mxu0 0
  %821 = vmatpush1.bf16.xpose.msra.mxu0 %v818
  %822 = vmatprep.subr.bf16.mxu0 0
  %823 = vmatpush1.bf16.xpose.msra.mxu0 0
  %824 = vmatprep.subr.bf16.mxu0 0
  %825 = vmatpush1.bf16.xpose.msra.mxu0 0
  %826 = vmatprep.subr.bf16.mxu0 0
  %827 = vmatpush1.bf16.xpose.msra.mxu0 0
  %828 = vmatprep.subr.bf16.mxu0 0
  %829 = vmatpush1.bf16.xpose.msra.mxu0 0
  %830 = vmatprep.subr.bf16.mxu0 0
  %831 = vmatpush1.bf16.xpose.msra.mxu0 0
  %832 = vmatprep.subr.bf16.mxu0 0
  %833 = vmatpush1.bf16.xpose.msra.mxu0 0
  %834 = vmatprep.subr.bf16.mxu0 0
  %835 = vmatpush1.bf16.xpose.msra.mxu0 0
  %836 = vmatprep.subr.bf16.mxu0 0
  %837 = vmatpush1.bf16.xpose.msra.mxu0 0
  %838 = vmatprep.subr.bf16.mxu0 0
  %839 = vmatpush1.bf16.xpose.msra.mxu0 0
  %840 = vmatprep.subr.bf16.mxu0 0
  %841 = vmatpush1.bf16.xpose.msra.mxu0 0
  %842 = vmatprep.subr.bf16.mxu0 0
  %843 = vmatpush1.bf16.xpose.msra.mxu0 0
  %844 = vmatprep.subr.bf16.mxu0 0
  %845 = vmatpush1.bf16.xpose.msra.mxu0 0
  %846 = vmatprep.subr.bf16.mxu0 0
  %847 = vmatpush1.bf16.xpose.msra.mxu0 0
  %848 = vmatprep.subr.bf16.mxu0 0
  %849 = vmatpush1.bf16.xpose.msra.mxu0 0
  %850 = vmatprep.subr.bf16.mxu0 0
  %851 = vmatpush1.bf16.xpose.msra.mxu0 0
  %852 = vmatprep.mubr.bf16.mxu0 0
  %853 = vmatmul.mubr.bf16.gmra.mrb[0].mxu0 %v94
  %v854 = vpop.f32.mrb[0].mxu0
  %v855 = vadd.f32 0.0, %v854
  %v856 = vpop.f32.mrb[0].mxu0
  %v857 = vpop.f32.mrb[0].mxu0
  %v858 = vadd.f32 0.0, %v857
  %v859 = vpop.f32.mrb[0].mxu0
  %860 = vmatprep.mubr.bf16.mxu0 0
  %861 = vmatmul.mubr.bf16.gmra.mrb[0].mxu0 %v97
  %v862 = vpop.f32.mrb[0].mxu0
  %v863 = vadd.f32 0.0, %v862
  %v864 = vpop.f32.mrb[0].mxu0
  %v865 = vpop.f32.mrb[0].mxu0
  %v866 = vadd.f32 0.0, %v865
  %v867 = vpop.f32.mrb[0].mxu0
  %868 = vmatprep.mubr.bf16.mxu0 0
  %869 = vmatmul.mubr.bf16.gmra.mrb[0].mxu0 %v100
  %v870 = vpop.f32.mrb[0].mxu0
  %v871 = vadd.f32 0.0, %v870
  %v872 = vpop.f32.mrb[0].mxu0
  %v873 = vpop.f32.mrb[0].mxu0
  %v874 = vadd.f32 0.0, %v873
  %v875 = vpop.f32.mrb[0].mxu0
  %876 = vmatprep.mubr.bf16.mxu0 0
  %877 = vmatmul.mubr.bf16.gmra.mrb[0].mxu0 %v103
  %v878 = vpop.f32.mrb[0].mxu0
  %v879 = vadd.f32 0.0, %v878
  %v880 = vpop.f32.mrb[0].mxu0
  %v881 = vpop.f32.mrb[0].mxu0
  %v882 = vadd.f32 0.0, %v881
  %v883 = vpop.f32.mrb[0].mxu0
  %884 = vmatprep.mubr.bf16.mxu0 0
  %885 = vmatmul.mubr.bf16.gmra.mrb[0].mxu0 %v106
  %v886 = vpop.f32.mrb[0].mxu0
  %v887 = vadd.f32 0.0, %v886
  %v888 = vpop.f32.mrb[0].mxu0
  %v889 = vpop.f32.mrb[0].mxu0
  %v890 = vadd.f32 0.0, %v889
  %v891 = vpop.f32.mrb[0].mxu0
  %892 = vmatprep.mubr.bf16.mxu0 0
  %893 = vmatmul.mubr.bf16.gmra.mrb[0].mxu0 %v109
  %v894 = vpop.f32.mrb[0].mxu0
  %v895 = vadd.f32 0.0, %v894
  %v896 = vpop.f32.mrb[0].mxu0
  %v897 = vpop.f32.mrb[0].mxu0
  %v898 = vadd.f32 0.0, %v897
  %v899 = vpop.f32.mrb[0].mxu0
  %900 = vmatprep.mubr.bf16.mxu0 0
  %901 = vmatmul.mubr.bf16.gmra.mrb[0].mxu0 %v112
  %v902 = vpop.f32.mrb[0].mxu0
  %v903 = vadd.f32 0.0, %v902
  %v904 = vpop.f32.mrb[0].mxu0
  %v905 = vpop.f32.mrb[0].mxu0
  %v906 = vadd.f32 0.0, %v905
  %v907 = vpop.f32.mrb[0].mxu0
  %908 = vmatprep.mubr.bf16.mxu0 0
  %909 = vmatmul.mubr.bf16.gmra.mrb[0].mxu0 %v115
  %v910 = vpop.f32.mrb[0].mxu0
  %v911 = vadd.f32 0.0, %v910
  %v912 = vpop.f32.mrb[0].mxu0
  %v913 = vpop.f32.mrb[0].mxu0
  %v914 = vadd.f32 0.0, %v913
  %v915 = vpop.f32.mrb[0].mxu0
  %916 = vdwg.mxu0
  %v917 = vld [vmem:[%s3] sm:$0x3]
  %v918 = vld [vmem:[%s3 + $0x2] sm:$0x3]
  %v919 = vld [vmem:[%s3 + $0x4] sm:$0x3]
  %v920 = vld [vmem:[%s3 + $0x6] sm:$0x3]
  %v921 = vld [vmem:[%s3 + $0x8] sm:$0x3]
  %v922 = vld [vmem:[%s3 + $0xa] sm:$0x3]
  %v923 = vld [vmem:[%s3 + $0xc] sm:$0x3]
  %v924 = vld [vmem:[%s3 + $0xe] sm:$0x3]
  %v929 = vunpack.c.l.b16 %v40
  %v930 = vunpack.c.l.b16 %v41
  %v931 = vunpack.c.l.b16 %v42
  %v932 = vunpack.c.l.b16 %v43
  %v933 = vpack.c.b16 %v930, %v929
  %v934 = vpack.c.b16 %v932, %v931
  %v938 = vsel %vm92, %v917, 0
  %940 = vmatprep.subr.bf16.mxu0 0
  %941 = vmatpush1.bf16.msra.mxu0 %v933
  %942 = vmatprep.subr.bf16.mxu0 0
  %943 = vmatpush1.bf16.msra.mxu0 %v934
  %944 = vmatprep.subr.bf16.mxu0 0
  %945 = vmatpush1.bf16.msra.mxu0 0
  %946 = vmatprep.subr.bf16.mxu0 0
  %947 = vmatpush1.bf16.msra.mxu0 0
  %948 = vmatprep.subr.bf16.mxu0 0
  %949 = vmatpush1.bf16.msra.mxu0 0
  %950 = vmatprep.subr.bf16.mxu0 0
  %951 = vmatpush1.bf16.msra.mxu0 0
  %952 = vmatprep.subr.bf16.mxu0 0
  %953 = vmatpush1.bf16.msra.mxu0 0
  %954 = vmatprep.subr.bf16.mxu0 0
  %955 = vmatpush1.bf16.msra.mxu0 0
  %956 = vmatprep.subr.bf16.mxu0 0
  %957 = vmatpush1.bf16.msra.mxu0 0
  %958 = vmatprep.subr.bf16.mxu0 0
  %959 = vmatpush1.bf16.msra.mxu0 0
  %960 = vmatprep.subr.bf16.mxu0 0
  %961 = vmatpush1.bf16.msra.mxu0 0
  %962 = vmatprep.subr.bf16.mxu0 0
  %963 = vmatpush1.bf16.msra.mxu0 0
  %964 = vmatprep.subr.bf16.mxu0 0
  %965 = vmatpush1.bf16.msra.mxu0 0
  %966 = vmatprep.subr.bf16.mxu0 0
  %967 = vmatpush1.bf16.msra.mxu0 0
  %968 = vmatprep.subr.bf16.mxu0 0
  %969 = vmatpush1.bf16.msra.mxu0 0
  %970 = vmatprep.subr.bf16.mxu0 0
  %971 = vmatpush1.bf16.msra.mxu0 0
  %972 = vmatprep.mubr.bf16.mxu0 0
  %973 = vmatmul.mubr.bf16.gmra.mrb[0].mxu0 %v938
  %v974 = vpop.f32.mrb[0].mxu0
  %v975 = vadd.f32 0.0, %v974
  %v976 = vpop.f32.mrb[0].mxu0
  %v977 = vpop.f32.mrb[0].mxu0
  %v978 = vpop.f32.mrb[0].mxu0
  %979 = vdwg.mxu0
  %v981 = vsel %vm92, %v918, 0
  %983 = vmatprep.subr.bf16.mxu0 0
  %984 = vmatpush1.bf16.msra.mxu0 %v933
  %985 = vmatprep.subr.bf16.mxu0 0
  %986 = vmatpush1.bf16.msra.mxu0 %v934
  %987 = vmatprep.subr.bf16.mxu0 0
  %988 = vmatpush1.bf16.msra.mxu0 0
  %989 = vmatprep.subr.bf16.mxu0 0
  %990 = vmatpush1.bf16.msra.mxu0 0
  %991 = vmatprep.subr.bf16.mxu0 0
  %992 = vmatpush1.bf16.msra.mxu0 0
  %993 = vmatprep.subr.bf16.mxu0 0
  %994 = vmatpush1.bf16.msra.mxu0 0
  %995 = vmatprep.subr.bf16.mxu0 0
  %996 = vmatpush1.bf16.msra.mxu0 0
  %997 = vmatprep.subr.bf16.mxu0 0
  %998 = vmatpush1.bf16.msra.mxu0 0
  %999 = vmatprep.subr.bf16.mxu0 0
  %1000 = vmatpush1.bf16.msra.mxu0 0
  %1001 = vmatprep.subr.bf16.mxu0 0
  %1002 = vmatpush1.bf16.msra.mxu0 0
  %1003 = vmatprep.subr.bf16.mxu0 0
  %1004 = vmatpush1.bf16.msra.mxu0 0
  %1005 = vmatprep.subr.bf16.mxu0 0
  %1006 = vmatpush1.bf16.msra.mxu0 0
  %1007 = vmatprep.subr.bf16.mxu0 0
  %1008 = vmatpush1.bf16.msra.mxu0 0
  %1009 = vmatprep.subr.bf16.mxu0 0
  %1010 = vmatpush1.bf16.msra.mxu0 0
  %1011 = vmatprep.subr.bf16.mxu0 0
  %1012 = vmatpush1.bf16.msra.mxu0 0
  %1013 = vmatprep.subr.bf16.mxu0 0
  %1014 = vmatpush1.bf16.msra.mxu0 0
  %1015 = vmatprep.mubr.bf16.mxu0 0
  %1016 = vmatmul.mubr.bf16.gmra.mrb[0].mxu0 %v981
  %v1017 = vpop.f32.mrb[0].mxu0
  %v1018 = vadd.f32 0.0, %v1017
  %v1019 = vpop.f32.mrb[0].mxu0
  %v1020 = vpop.f32.mrb[0].mxu0
  %v1021 = vpop.f32.mrb[0].mxu0
  %1022 = vdwg.mxu0
  %v1024 = vsel %vm92, %v919, 0
  %1026 = vmatprep.subr.bf16.mxu0 0
  %1027 = vmatpush1.bf16.msra.mxu0 %v933
  %1028 = vmatprep.subr.bf16.mxu0 0
  %1029 = vmatpush1.bf16.msra.mxu0 %v934
  %1030 = vmatprep.subr.bf16.mxu0 0
  %1031 = vmatpush1.bf16.msra.mxu0 0
  %1032 = vmatprep.subr.bf16.mxu0 0
  %1033 = vmatpush1.bf16.msra.mxu0 0
  %1034 = vmatprep.subr.bf16.mxu0 0
  %1035 = vmatpush1.bf16.msra.mxu0 0
  %1036 = vmatprep.subr.bf16.mxu0 0
  %1037 = vmatpush1.bf16.msra.mxu0 0
  %1038 = vmatprep.subr.bf16.mxu0 0
  %1039 = vmatpush1.bf16.msra.mxu0 0
  %1040 = vmatprep.subr.bf16.mxu0 0
  %1041 = vmatpush1.bf16.msra.mxu0 0
  %1042 = vmatprep.subr.bf16.mxu0 0
  %1043 = vmatpush1.bf16.msra.mxu0 0
  %1044 = vmatprep.subr.bf16.mxu0 0
  %1045 = vmatpush1.bf16.msra.mxu0 0
  %1046 = vmatprep.subr.bf16.mxu0 0
  %1047 = vmatpush1.bf16.msra.mxu0 0
  %1048 = vmatprep.subr.bf16.mxu0 0
  %1049 = vmatpush1.bf16.msra.mxu0 0
  %1050 = vmatprep.subr.bf16.mxu0 0
  %1051 = vmatpush1.bf16.msra.mxu0 0
  %1052 = vmatprep.subr.bf16.mxu0 0
  %1053 = vmatpush1.bf16.msra.mxu0 0
  %1054 = vmatprep.subr.bf16.mxu0 0
  %1055 = vmatpush1.bf16.msra.mxu0 0
  %1056 = vmatprep.subr.bf16.mxu0 0
  %1057 = vmatpush1.bf16.msra.mxu0 0
  %1058 = vmatprep.mubr.bf16.mxu0 0
  %1059 = vmatmul.mubr.bf16.gmra.mrb[0].mxu0 %v1024
  %v1060 = vpop.f32.mrb[0].mxu0
  %v1061 = vadd.f32 0.0, %v1060
  %v1062 = vpop.f32.mrb[0].mxu0
  %v1063 = vpop.f32.mrb[0].mxu0
  %v1064 = vpop.f32.mrb[0].mxu0
  %1065 = vdwg.mxu0
  %v1067 = vsel %vm92, %v920, 0
  %1069 = vmatprep.subr.bf16.mxu0 0
  %1070 = vmatpush1.bf16.msra.mxu0 %v933
  %1071 = vmatprep.subr.bf16.mxu0 0
  %1072 = vmatpush1.bf16.msra.mxu0 %v934
  %1073 = vmatprep.subr.bf16.mxu0 0
  %1074 = vmatpush1.bf16.msra.mxu0 0
  %1075 = vmatprep.subr.bf16.mxu0 0
  %1076 = vmatpush1.bf16.msra.mxu0 0
  %1077 = vmatprep.subr.bf16.mxu0 0
  %1078 = vmatpush1.bf16.msra.mxu0 0
  %1079 = vmatprep.subr.bf16.mxu0 0
  %1080 = vmatpush1.bf16.msra.mxu0 0
  %1081 = vmatprep.subr.bf16.mxu0 0
  %1082 = vmatpush1.bf16.msra.mxu0 0
  %1083 = vmatprep.subr.bf16.mxu0 0
  %1084 = vmatpush1.bf16.msra.mxu0 0
  %1085 = vmatprep.subr.bf16.mxu0 0
  %1086 = vmatpush1.bf16.msra.mxu0 0
  %1087 = vmatprep.subr.bf16.mxu0 0
  %1088 = vmatpush1.bf16.msra.mxu0 0
  %1089 = vmatprep.subr.bf16.mxu0 0
  %1090 = vmatpush1.bf16.msra.mxu0 0
  %1091 = vmatprep.subr.bf16.mxu0 0
  %1092 = vmatpush1.bf16.msra.mxu0 0
  %1093 = vmatprep.subr.bf16.mxu0 0
  %1094 = vmatpush1.bf16.msra.mxu0 0
  %1095 = vmatprep.subr.bf16.mxu0 0
  %1096 = vmatpush1.bf16.msra.mxu0 0
  %1097 = vmatprep.subr.bf16.mxu0 0
  %1098 = vmatpush1.bf16.msra.mxu0 0
  %1099 = vmatprep.subr.bf16.mxu0 0
  %1100 = vmatpush1.bf16.msra.mxu0 0
  %1101 = vmatprep.mubr.bf16.mxu0 0
  %1102 = vmatmul.mubr.bf16.gmra.mrb[0].mxu0 %v1067
  %v1103 = vpop.f32.mrb[0].mxu0
  %v1104 = vadd.f32 0.0, %v1103
  %v1105 = vpop.f32.mrb[0].mxu0
  %v1106 = vpop.f32.mrb[0].mxu0
  %v1107 = vpop.f32.mrb[0].mxu0
  %1108 = vdwg.mxu0
  %v1110 = vsel %vm92, %v921, 0
  %1112 = vmatprep.subr.bf16.mxu0 0
  %1113 = vmatpush1.bf16.msra.mxu0 %v933
  %1114 = vmatprep.subr.bf16.mxu0 0
  %1115 = vmatpush1.bf16.msra.mxu0 %v934
  %1116 = vmatprep.subr.bf16.mxu0 0
  %1117 = vmatpush1.bf16.msra.mxu0 0
  %1118 = vmatprep.subr.bf16.mxu0 0
  %1119 = vmatpush1.bf16.msra.mxu0 0
  %1120 = vmatprep.subr.bf16.mxu0 0
  %1121 = vmatpush1.bf16.msra.mxu0 0
  %1122 = vmatprep.subr.bf16.mxu0 0
  %1123 = vmatpush1.bf16.msra.mxu0 0
  %1124 = vmatprep.subr.bf16.mxu0 0
  %1125 = vmatpush1.bf16.msra.mxu0 0
  %1126 = vmatprep.subr.bf16.mxu0 0
  %1127 = vmatpush1.bf16.msra.mxu0 0
  %1128 = vmatprep.subr.bf16.mxu0 0
  %1129 = vmatpush1.bf16.msra.mxu0 0
  %1130 = vmatprep.subr.bf16.mxu0 0
  %1131 = vmatpush1.bf16.msra.mxu0 0
  %1132 = vmatprep.subr.bf16.mxu0 0
  %1133 = vmatpush1.bf16.msra.mxu0 0
  %1134 = vmatprep.subr.bf16.mxu0 0
  %1135 = vmatpush1.bf16.msra.mxu0 0
  %1136 = vmatprep.subr.bf16.mxu0 0
  %1137 = vmatpush1.bf16.msra.mxu0 0
  %1138 = vmatprep.subr.bf16.mxu0 0
  %1139 = vmatpush1.bf16.msra.mxu0 0
  %1140 = vmatprep.subr.bf16.mxu0 0
  %1141 = vmatpush1.bf16.msra.mxu0 0
  %1142 = vmatprep.subr.bf16.mxu0 0
  %1143 = vmatpush1.bf16.msra.mxu0 0
  %1144 = vmatprep.mubr.bf16.mxu0 0
  %1145 = vmatmul.mubr.bf16.gmra.mrb[0].mxu0 %v1110
  %v1146 = vpop.f32.mrb[0].mxu0
  %v1147 = vadd.f32 0.0, %v1146
  %v1148 = vpop.f32.mrb[0].mxu0
  %v1149 = vpop.f32.mrb[0].mxu0
  %v1150 = vpop.f32.mrb[0].mxu0
  %1151 = vdwg.mxu0
  %v1153 = vsel %vm92, %v922, 0
  %1155 = vmatprep.subr.bf16.mxu0 0
  %1156 = vmatpush1.bf16.msra.mxu0 %v933
  %1157 = vmatprep.subr.bf16.mxu0 0
  %1158 = vmatpush1.bf16.msra.mxu0 %v934
  %1159 = vmatprep.subr.bf16.mxu0 0
  %1160 = vmatpush1.bf16.msra.mxu0 0
  %1161 = vmatprep.subr.bf16.mxu0 0
  %1162 = vmatpush1.bf16.msra.mxu0 0
  %1163 = vmatprep.subr.bf16.mxu0 0
  %1164 = vmatpush1.bf16.msra.mxu0 0
  %1165 = vmatprep.subr.bf16.mxu0 0
  %1166 = vmatpush1.bf16.msra.mxu0 0
  %1167 = vmatprep.subr.bf16.mxu0 0
  %1168 = vmatpush1.bf16.msra.mxu0 0
  %1169 = vmatprep.subr.bf16.mxu0 0
  %1170 = vmatpush1.bf16.msra.mxu0 0
  %1171 = vmatprep.subr.bf16.mxu0 0
  %1172 = vmatpush1.bf16.msra.mxu0 0
  %1173 = vmatprep.subr.bf16.mxu0 0
  %1174 = vmatpush1.bf16.msra.mxu0 0
  %1175 = vmatprep.subr.bf16.mxu0 0
  %1176 = vmatpush1.bf16.msra.mxu0 0
  %1177 = vmatprep.subr.bf16.mxu0 0
  %1178 = vmatpush1.bf16.msra.mxu0 0
  %1179 = vmatprep.subr.bf16.mxu0 0
  %1180 = vmatpush1.bf16.msra.mxu0 0
  %1181 = vmatprep.subr.bf16.mxu0 0
  %1182 = vmatpush1.bf16.msra.mxu0 0
  %1183 = vmatprep.subr.bf16.mxu0 0
  %1184 = vmatpush1.bf16.msra.mxu0 0
  %1185 = vmatprep.subr.bf16.mxu0 0
  %1186 = vmatpush1.bf16.msra.mxu0 0
  %1187 = vmatprep.mubr.bf16.mxu0 0
  %1188 = vmatmul.mubr.bf16.gmra.mrb[0].mxu0 %v1153
  %v1189 = vpop.f32.mrb[0].mxu0
  %v1190 = vadd.f32 0.0, %v1189
  %v1191 = vpop.f32.mrb[0].mxu0
  %v1192 = vpop.f32.mrb[0].mxu0
  %v1193 = vpop.f32.mrb[0].mxu0
  %1194 = vdwg.mxu0
  %v1196 = vsel %vm92, %v923, 0
  %1198 = vmatprep.subr.bf16.mxu0 0
  %1199 = vmatpush1.bf16.msra.mxu0 %v933
  %1200 = vmatprep.subr.bf16.mxu0 0
  %1201 = vmatpush1.bf16.msra.mxu0 %v934
  %1202 = vmatprep.subr.bf16.mxu0 0
  %1203 = vmatpush1.bf16.msra.mxu0 0
  %1204 = vmatprep.subr.bf16.mxu0 0
  %1205 = vmatpush1.bf16.msra.mxu0 0
  %1206 = vmatprep.subr.bf16.mxu0 0
  %1207 = vmatpush1.bf16.msra.mxu0 0
  %1208 = vmatprep.subr.bf16.mxu0 0
  %1209 = vmatpush1.bf16.msra.mxu0 0
  %1210 = vmatprep.subr.bf16.mxu0 0
  %1211 = vmatpush1.bf16.msra.mxu0 0
  %1212 = vmatprep.subr.bf16.mxu0 0
  %1213 = vmatpush1.bf16.msra.mxu0 0
  %1214 = vmatprep.subr.bf16.mxu0 0
  %1215 = vmatpush1.bf16.msra.mxu0 0
  %1216 = vmatprep.subr.bf16.mxu0 0
  %1217 = vmatpush1.bf16.msra.mxu0 0
  %1218 = vmatprep.subr.bf16.mxu0 0
  %1219 = vmatpush1.bf16.msra.mxu0 0
  %1220 = vmatprep.subr.bf16.mxu0 0
  %1221 = vmatpush1.bf16.msra.mxu0 0
  %1222 = vmatprep.subr.bf16.mxu0 0
  %1223 = vmatpush1.bf16.msra.mxu0 0
  %1224 = vmatprep.subr.bf16.mxu0 0
  %1225 = vmatpush1.bf16.msra.mxu0 0
  %1226 = vmatprep.subr.bf16.mxu0 0
  %1227 = vmatpush1.bf16.msra.mxu0 0
  %1228 = vmatprep.subr.bf16.mxu0 0
  %1229 = vmatpush1.bf16.msra.mxu0 0
  %1230 = vmatprep.mubr.bf16.mxu0 0
  %1231 = vmatmul.mubr.bf16.gmra.mrb[0].mxu0 %v1196
  %v1232 = vpop.f32.mrb[0].mxu0
  %v1233 = vadd.f32 0.0, %v1232
  %v1234 = vpop.f32.mrb[0].mxu0
  %v1235 = vpop.f32.mrb[0].mxu0
  %v1236 = vpop.f32.mrb[0].mxu0
  %1237 = vdwg.mxu0
  %v1239 = vsel %vm92, %v924, 0
  %1241 = vmatprep.subr.bf16.mxu0 0
  %1242 = vmatpush1.bf16.msra.mxu0 %v933
  %1243 = vmatprep.subr.bf16.mxu0 0
  %1244 = vmatpush1.bf16.msra.mxu0 %v934
  %1245 = vmatprep.subr.bf16.mxu0 0
  %1246 = vmatpush1.bf16.msra.mxu0 0
  %1247 = vmatprep.subr.bf16.mxu0 0
  %1248 = vmatpush1.bf16.msra.mxu0 0
  %1249 = vmatprep.subr.bf16.mxu0 0
  %1250 = vmatpush1.bf16.msra.mxu0 0
  %1251 = vmatprep.subr.bf16.mxu0 0
  %1252 = vmatpush1.bf16.msra.mxu0 0
  %1253 = vmatprep.subr.bf16.mxu0 0
  %1254 = vmatpush1.bf16.msra.mxu0 0
  %1255 = vmatprep.subr.bf16.mxu0 0
  %1256 = vmatpush1.bf16.msra.mxu0 0
  %1257 = vmatprep.subr.bf16.mxu0 0
  %1258 = vmatpush1.bf16.msra.mxu0 0
  %1259 = vmatprep.subr.bf16.mxu0 0
  %1260 = vmatpush1.bf16.msra.mxu0 0
  %1261 = vmatprep.subr.bf16.mxu0 0
  %1262 = vmatpush1.bf16.msra.mxu0 0
  %1263 = vmatprep.subr.bf16.mxu0 0
  %1264 = vmatpush1.bf16.msra.mxu0 0
  %1265 = vmatprep.subr.bf16.mxu0 0
  %1266 = vmatpush1.bf16.msra.mxu0 0
  %1267 = vmatprep.subr.bf16.mxu0 0
  %1268 = vmatpush1.bf16.msra.mxu0 0
  %1269 = vmatprep.subr.bf16.mxu0 0
  %1270 = vmatpush1.bf16.msra.mxu0 0
  %1271 = vmatprep.subr.bf16.mxu0 0
  %1272 = vmatpush1.bf16.msra.mxu0 0
  %1273 = vmatprep.mubr.bf16.mxu0 0
  %1274 = vmatmul.mubr.bf16.gmra.mrb[0].mxu0 %v1239
  %v1275 = vpop.f32.mrb[0].mxu0
  %v1276 = vadd.f32 0.0, %v1275
  %v1277 = vpop.f32.mrb[0].mxu0
  %v1278 = vpop.f32.mrb[0].mxu0
  %v1279 = vpop.f32.mrb[0].mxu0
  %1280 = vdwg.mxu0
  %v1281 = vld [vmem:[%s4] sm:$0x3]
  %v1282 = vld [vmem:[%s4 + $0x2] sm:$0x3]
  %v1283 = vld [vmem:[%s4 + $0x4] sm:$0x3]
  %v1284 = vld [vmem:[%s4 + $0x6] sm:$0x3]
  %v1285 = vld [vmem:[%s4 + $0x8] sm:$0x3]
  %v1286 = vld [vmem:[%s4 + $0xa] sm:$0x3]
  %v1287 = vld [vmem:[%s4 + $0xc] sm:$0x3]
  %v1288 = vld [vmem:[%s4 + $0xe] sm:$0x3]
  %v1290 = vsel %vm92, %v1281, 0
  %1292 = vmatprep.subr.bf16.mxu0 0
  %1293 = vmatpush1.bf16.msra.mxu0 %v933
  %1294 = vmatprep.subr.bf16.mxu0 0
  %1295 = vmatpush1.bf16.msra.mxu0 %v934
  %1296 = vmatprep.subr.bf16.mxu0 0
  %1297 = vmatpush1.bf16.msra.mxu0 0
  %1298 = vmatprep.subr.bf16.mxu0 0
  %1299 = vmatpush1.bf16.msra.mxu0 0
  %1300 = vmatprep.subr.bf16.mxu0 0
  %1301 = vmatpush1.bf16.msra.mxu0 0
  %1302 = vmatprep.subr.bf16.mxu0 0
  %1303 = vmatpush1.bf16.msra.mxu0 0
  %1304 = vmatprep.subr.bf16.mxu0 0
  %1305 = vmatpush1.bf16.msra.mxu0 0
  %1306 = vmatprep.subr.bf16.mxu0 0
  %1307 = vmatpush1.bf16.msra.mxu0 0
  %1308 = vmatprep.subr.bf16.mxu0 0
  %1309 = vmatpush1.bf16.msra.mxu0 0
  %1310 = vmatprep.subr.bf16.mxu0 0
  %1311 = vmatpush1.bf16.msra.mxu0 0
  %1312 = vmatprep.subr.bf16.mxu0 0
  %1313 = vmatpush1.bf16.msra.mxu0 0
  %1314 = vmatprep.subr.bf16.mxu0 0
  %1315 = vmatpush1.bf16.msra.mxu0 0
  %1316 = vmatprep.subr.bf16.mxu0 0
  %1317 = vmatpush1.bf16.msra.mxu0 0
  %1318 = vmatprep.subr.bf16.mxu0 0
  %1319 = vmatpush1.bf16.msra.mxu0 0
  %1320 = vmatprep.subr.bf16.mxu0 0
  %1321 = vmatpush1.bf16.msra.mxu0 0
  %1322 = vmatprep.subr.bf16.mxu0 0
  %1323 = vmatpush1.bf16.msra.mxu0 0
  %1324 = vmatprep.mubr.bf16.mxu0 0
  %1325 = vmatmul.mubr.bf16.gmra.mrb[0].mxu0 %v1290
  %v1326 = vpop.f32.mrb[0].mxu0
  %v1327 = vadd.f32 0.0, %v1326
  %v1328 = vpop.f32.mrb[0].mxu0
  %v1329 = vpop.f32.mrb[0].mxu0
  %v1330 = vpop.f32.mrb[0].mxu0
  %1331 = vdwg.mxu0
  %v1333 = vsel %vm92, %v1282, 0
  %1335 = vmatprep.subr.bf16.mxu0 0
  %1336 = vmatpush1.bf16.msra.mxu0 %v933
  %1337 = vmatprep.subr.bf16.mxu0 0
  %1338 = vmatpush1.bf16.msra.mxu0 %v934
  %1339 = vmatprep.subr.bf16.mxu0 0
  %1340 = vmatpush1.bf16.msra.mxu0 0
  %1341 = vmatprep.subr.bf16.mxu0 0
  %1342 = vmatpush1.bf16.msra.mxu0 0
  %1343 = vmatprep.subr.bf16.mxu0 0
  %1344 = vmatpush1.bf16.msra.mxu0 0
  %1345 = vmatprep.subr.bf16.mxu0 0
  %1346 = vmatpush1.bf16.msra.mxu0 0
  %1347 = vmatprep.subr.bf16.mxu0 0
  %1348 = vmatpush1.bf16.msra.mxu0 0
  %1349 = vmatprep.subr.bf16.mxu0 0
  %1350 = vmatpush1.bf16.msra.mxu0 0
  %1351 = vmatprep.subr.bf16.mxu0 0
  %1352 = vmatpush1.bf16.msra.mxu0 0
  %1353 = vmatprep.subr.bf16.mxu0 0
  %1354 = vmatpush1.bf16.msra.mxu0 0
  %1355 = vmatprep.subr.bf16.mxu0 0
  %1356 = vmatpush1.bf16.msra.mxu0 0
  %1357 = vmatprep.subr.bf16.mxu0 0
  %1358 = vmatpush1.bf16.msra.mxu0 0
  %1359 = vmatprep.subr.bf16.mxu0 0
  %1360 = vmatpush1.bf16.msra.mxu0 0
  %1361 = vmatprep.subr.bf16.mxu0 0
  %1362 = vmatpush1.bf16.msra.mxu0 0
  %1363 = vmatprep.subr.bf16.mxu0 0
  %1364 = vmatpush1.bf16.msra.mxu0 0
  %1365 = vmatprep.subr.bf16.mxu0 0
  %1366 = vmatpush1.bf16.msra.mxu0 0
  %1367 = vmatprep.mubr.bf16.mxu0 0
  %1368 = vmatmul.mubr.bf16.gmra.mrb[0].mxu0 %v1333
  %v1369 = vpop.f32.mrb[0].mxu0
  %v1370 = vadd.f32 0.0, %v1369
  %v1371 = vpop.f32.mrb[0].mxu0
  %v1372 = vpop.f32.mrb[0].mxu0
  %v1373 = vpop.f32.mrb[0].mxu0
  %1374 = vdwg.mxu0
  %v1376 = vsel %vm92, %v1283, 0
  %1378 = vmatprep.subr.bf16.mxu0 0
  %1379 = vmatpush1.bf16.msra.mxu0 %v933
  %1380 = vmatprep.subr.bf16.mxu0 0
  %1381 = vmatpush1.bf16.msra.mxu0 %v934
  %1382 = vmatprep.subr.bf16.mxu0 0
  %1383 = vmatpush1.bf16.msra.mxu0 0
  %1384 = vmatprep.subr.bf16.mxu0 0
  %1385 = vmatpush1.bf16.msra.mxu0 0
  %1386 = vmatprep.subr.bf16.mxu0 0
  %1387 = vmatpush1.bf16.msra.mxu0 0
  %1388 = vmatprep.subr.bf16.mxu0 0
  %1389 = vmatpush1.bf16.msra.mxu0 0
  %1390 = vmatprep.subr.bf16.mxu0 0
  %1391 = vmatpush1.bf16.msra.mxu0 0
  %1392 = vmatprep.subr.bf16.mxu0 0
  %1393 = vmatpush1.bf16.msra.mxu0 0
  %1394 = vmatprep.subr.bf16.mxu0 0
  %1395 = vmatpush1.bf16.msra.mxu0 0
  %1396 = vmatprep.subr.bf16.mxu0 0
  %1397 = vmatpush1.bf16.msra.mxu0 0
  %1398 = vmatprep.subr.bf16.mxu0 0
  %1399 = vmatpush1.bf16.msra.mxu0 0
  %1400 = vmatprep.subr.bf16.mxu0 0
  %1401 = vmatpush1.bf16.msra.mxu0 0
  %1402 = vmatprep.subr.bf16.mxu0 0
  %1403 = vmatpush1.bf16.msra.mxu0 0
  %1404 = vmatprep.subr.bf16.mxu0 0
  %1405 = vmatpush1.bf16.msra.mxu0 0
  %1406 = vmatprep.subr.bf16.mxu0 0
  %1407 = vmatpush1.bf16.msra.mxu0 0
  %1408 = vmatprep.subr.bf16.mxu0 0
  %1409 = vmatpush1.bf16.msra.mxu0 0
  %1410 = vmatprep.mubr.bf16.mxu0 0
  %1411 = vmatmul.mubr.bf16.gmra.mrb[0].mxu0 %v1376
  %v1412 = vpop.f32.mrb[0].mxu0
  %v1413 = vadd.f32 0.0, %v1412
  %v1414 = vpop.f32.mrb[0].mxu0
  %v1415 = vpop.f32.mrb[0].mxu0
  %v1416 = vpop.f32.mrb[0].mxu0
  %1417 = vdwg.mxu0
  %v1419 = vsel %vm92, %v1284, 0
  %1421 = vmatprep.subr.bf16.mxu0 0
  %1422 = vmatpush1.bf16.msra.mxu0 %v933
  %1423 = vmatprep.subr.bf16.mxu0 0
  %1424 = vmatpush1.bf16.msra.mxu0 %v934
  %1425 = vmatprep.subr.bf16.mxu0 0
  %1426 = vmatpush1.bf16.msra.mxu0 0
  %1427 = vmatprep.subr.bf16.mxu0 0
  %1428 = vmatpush1.bf16.msra.mxu0 0
  %1429 = vmatprep.subr.bf16.mxu0 0
  %1430 = vmatpush1.bf16.msra.mxu0 0
  %1431 = vmatprep.subr.bf16.mxu0 0
  %1432 = vmatpush1.bf16.msra.mxu0 0
  %1433 = vmatprep.subr.bf16.mxu0 0
  %1434 = vmatpush1.bf16.msra.mxu0 0
  %1435 = vmatprep.subr.bf16.mxu0 0
  %1436 = vmatpush1.bf16.msra.mxu0 0
  %1437 = vmatprep.subr.bf16.mxu0 0
  %1438 = vmatpush1.bf16.msra.mxu0 0
  %1439 = vmatprep.subr.bf16.mxu0 0
  %1440 = vmatpush1.bf16.msra.mxu0 0
  %1441 = vmatprep.subr.bf16.mxu0 0
  %1442 = vmatpush1.bf16.msra.mxu0 0
  %1443 = vmatprep.subr.bf16.mxu0 0
  %1444 = vmatpush1.bf16.msra.mxu0 0
  %1445 = vmatprep.subr.bf16.mxu0 0
  %1446 = vmatpush1.bf16.msra.mxu0 0
  %1447 = vmatprep.subr.bf16.mxu0 0
  %1448 = vmatpush1.bf16.msra.mxu0 0
  %1449 = vmatprep.subr.bf16.mxu0 0
  %1450 = vmatpush1.bf16.msra.mxu0 0
  %1451 = vmatprep.subr.bf16.mxu0 0
  %1452 = vmatpush1.bf16.msra.mxu0 0
  %1453 = vmatprep.mubr.bf16.mxu0 0
  %1454 = vmatmul.mubr.bf16.gmra.mrb[0].mxu0 %v1419
  %v1455 = vpop.f32.mrb[0].mxu0
  %v1456 = vadd.f32 0.0, %v1455
  %v1457 = vpop.f32.mrb[0].mxu0
  %v1458 = vpop.f32.mrb[0].mxu0
  %v1459 = vpop.f32.mrb[0].mxu0
  %1460 = vdwg.mxu0
  %v1462 = vsel %vm92, %v1285, 0
  %1464 = vmatprep.subr.bf16.mxu0 0
  %1465 = vmatpush1.bf16.msra.mxu0 %v933
  %1466 = vmatprep.subr.bf16.mxu0 0
  %1467 = vmatpush1.bf16.msra.mxu0 %v934
  %1468 = vmatprep.subr.bf16.mxu0 0
  %1469 = vmatpush1.bf16.msra.mxu0 0
  %1470 = vmatprep.subr.bf16.mxu0 0
  %1471 = vmatpush1.bf16.msra.mxu0 0
  %1472 = vmatprep.subr.bf16.mxu0 0
  %1473 = vmatpush1.bf16.msra.mxu0 0
  %1474 = vmatprep.subr.bf16.mxu0 0
  %1475 = vmatpush1.bf16.msra.mxu0 0
  %1476 = vmatprep.subr.bf16.mxu0 0
  %1477 = vmatpush1.bf16.msra.mxu0 0
  %1478 = vmatprep.subr.bf16.mxu0 0
  %1479 = vmatpush1.bf16.msra.mxu0 0
  %1480 = vmatprep.subr.bf16.mxu0 0
  %1481 = vmatpush1.bf16.msra.mxu0 0
  %1482 = vmatprep.subr.bf16.mxu0 0
  %1483 = vmatpush1.bf16.msra.mxu0 0
  %1484 = vmatprep.subr.bf16.mxu0 0
  %1485 = vmatpush1.bf16.msra.mxu0 0
  %1486 = vmatprep.subr.bf16.mxu0 0
  %1487 = vmatpush1.bf16.msra.mxu0 0
  %1488 = vmatprep.subr.bf16.mxu0 0
  %1489 = vmatpush1.bf16.msra.mxu0 0
  %1490 = vmatprep.subr.bf16.mxu0 0
  %1491 = vmatpush1.bf16.msra.mxu0 0
  %1492 = vmatprep.subr.bf16.mxu0 0
  %1493 = vmatpush1.bf16.msra.mxu0 0
  %1494 = vmatprep.subr.bf16.mxu0 0
  %1495 = vmatpush1.bf16.msra.mxu0 0
  %1496 = vmatprep.mubr.bf16.mxu0 0
  %1497 = vmatmul.mubr.bf16.gmra.mrb[0].mxu0 %v1462
  %v1498 = vpop.f32.mrb[0].mxu0
  %v1499 = vadd.f32 0.0, %v1498
  %v1500 = vpop.f32.mrb[0].mxu0
  %v1501 = vpop.f32.mrb[0].mxu0
  %v1502 = vpop.f32.mrb[0].mxu0
  %1503 = vdwg.mxu0
  %v1505 = vsel %vm92, %v1286, 0
  %1507 = vmatprep.subr.bf16.mxu0 0
  %1508 = vmatpush1.bf16.msra.mxu0 %v933
  %1509 = vmatprep.subr.bf16.mxu0 0
  %1510 = vmatpush1.bf16.msra.mxu0 %v934
  %1511 = vmatprep.subr.bf16.mxu0 0
  %1512 = vmatpush1.bf16.msra.mxu0 0
  %1513 = vmatprep.subr.bf16.mxu0 0
  %1514 = vmatpush1.bf16.msra.mxu0 0
  %1515 = vmatprep.subr.bf16.mxu0 0
  %1516 = vmatpush1.bf16.msra.mxu0 0
  %1517 = vmatprep.subr.bf16.mxu0 0
  %1518 = vmatpush1.bf16.msra.mxu0 0
  %1519 = vmatprep.subr.bf16.mxu0 0
  %1520 = vmatpush1.bf16.msra.mxu0 0
  %1521 = vmatprep.subr.bf16.mxu0 0
  %1522 = vmatpush1.bf16.msra.mxu0 0
  %1523 = vmatprep.subr.bf16.mxu0 0
  %1524 = vmatpush1.bf16.msra.mxu0 0
  %1525 = vmatprep.subr.bf16.mxu0 0
  %1526 = vmatpush1.bf16.msra.mxu0 0
  %1527 = vmatprep.subr.bf16.mxu0 0
  %1528 = vmatpush1.bf16.msra.mxu0 0
  %1529 = vmatprep.subr.bf16.mxu0 0
  %1530 = vmatpush1.bf16.msra.mxu0 0
  %1531 = vmatprep.subr.bf16.mxu0 0
  %1532 = vmatpush1.bf16.msra.mxu0 0
  %1533 = vmatprep.subr.bf16.mxu0 0
  %1534 = vmatpush1.bf16.msra.mxu0 0
  %1535 = vmatprep.subr.bf16.mxu0 0
  %1536 = vmatpush1.bf16.msra.mxu0 0
  %1537 = vmatprep.subr.bf16.mxu0 0
  %1538 = vmatpush1.bf16.msra.mxu0 0
  %1539 = vmatprep.mubr.bf16.mxu0 0
  %1540 = vmatmul.mubr.bf16.gmra.mrb[0].mxu0 %v1505
  %v1541 = vpop.f32.mrb[0].mxu0
  %v1542 = vadd.f32 0.0, %v1541
  %v1543 = vpop.f32.mrb[0].mxu0
  %v1544 = vpop.f32.mrb[0].mxu0
  %v1545 = vpop.f32.mrb[0].mxu0
  %1546 = vdwg.mxu0
  %v1548 = vsel %vm92, %v1287, 0
  %1550 = vmatprep.subr.bf16.mxu0 0
  %1551 = vmatpush1.bf16.msra.mxu0 %v933
  %1552 = vmatprep.subr.bf16.mxu0 0
  %1553 = vmatpush1.bf16.msra.mxu0 %v934
  %1554 = vmatprep.subr.bf16.mxu0 0
  %1555 = vmatpush1.bf16.msra.mxu0 0
  %1556 = vmatprep.subr.bf16.mxu0 0
  %1557 = vmatpush1.bf16.msra.mxu0 0
  %1558 = vmatprep.subr.bf16.mxu0 0
  %1559 = vmatpush1.bf16.msra.mxu0 0
  %1560 = vmatprep.subr.bf16.mxu0 0
  %1561 = vmatpush1.bf16.msra.mxu0 0
  %1562 = vmatprep.subr.bf16.mxu0 0
  %1563 = vmatpush1.bf16.msra.mxu0 0
  %1564 = vmatprep.subr.bf16.mxu0 0
  %1565 = vmatpush1.bf16.msra.mxu0 0
  %1566 = vmatprep.subr.bf16.mxu0 0
  %1567 = vmatpush1.bf16.msra.mxu0 0
  %1568 = vmatprep.subr.bf16.mxu0 0
  %1569 = vmatpush1.bf16.msra.mxu0 0
  %1570 = vmatprep.subr.bf16.mxu0 0
  %1571 = vmatpush1.bf16.msra.mxu0 0
  %1572 = vmatprep.subr.bf16.mxu0 0
  %1573 = vmatpush1.bf16.msra.mxu0 0
  %1574 = vmatprep.subr.bf16.mxu0 0
  %1575 = vmatpush1.bf16.msra.mxu0 0
  %1576 = vmatprep.subr.bf16.mxu0 0
  %1577 = vmatpush1.bf16.msra.mxu0 0
  %1578 = vmatprep.subr.bf16.mxu0 0
  %1579 = vmatpush1.bf16.msra.mxu0 0
  %1580 = vmatprep.subr.bf16.mxu0 0
  %1581 = vmatpush1.bf16.msra.mxu0 0
  %1582 = vmatprep.mubr.bf16.mxu0 0
  %1583 = vmatmul.mubr.bf16.gmra.mrb[0].mxu0 %v1548
  %v1584 = vpop.f32.mrb[0].mxu0
  %v1585 = vadd.f32 0.0, %v1584
  %v1586 = vpop.f32.mrb[0].mxu0
  %v1587 = vpop.f32.mrb[0].mxu0
  %v1588 = vpop.f32.mrb[0].mxu0
  %1589 = vdwg.mxu0
  %v1591 = vsel %vm92, %v1288, 0
  %1593 = vmatprep.subr.bf16.mxu0 0
  %1594 = vmatpush1.bf16.msra.mxu0 %v933
  %1595 = vmatprep.subr.bf16.mxu0 0
  %1596 = vmatpush1.bf16.msra.mxu0 %v934
  %1597 = vmatprep.subr.bf16.mxu0 0
  %1598 = vmatpush1.bf16.msra.mxu0 0
  %1599 = vmatprep.subr.bf16.mxu0 0
  %1600 = vmatpush1.bf16.msra.mxu0 0
  %1601 = vmatprep.subr.bf16.mxu0 0
  %1602 = vmatpush1.bf16.msra.mxu0 0
  %1603 = vmatprep.subr.bf16.mxu0 0
  %1604 = vmatpush1.bf16.msra.mxu0 0
  %1605 = vmatprep.subr.bf16.mxu0 0
  %1606 = vmatpush1.bf16.msra.mxu0 0
  %1607 = vmatprep.subr.bf16.mxu0 0
  %1608 = vmatpush1.bf16.msra.mxu0 0
  %1609 = vmatprep.subr.bf16.mxu0 0
  %1610 = vmatpush1.bf16.msra.mxu0 0
  %1611 = vmatprep.subr.bf16.mxu0 0
  %1612 = vmatpush1.bf16.msra.mxu0 0
  %1613 = vmatprep.subr.bf16.mxu0 0
  %1614 = vmatpush1.bf16.msra.mxu0 0
  %1615 = vmatprep.subr.bf16.mxu0 0
  %1616 = vmatpush1.bf16.msra.mxu0 0
  %1617 = vmatprep.subr.bf16.mxu0 0
  %1618 = vmatpush1.bf16.msra.mxu0 0
  %1619 = vmatprep.subr.bf16.mxu0 0
  %1620 = vmatpush1.bf16.msra.mxu0 0
  %1621 = vmatprep.subr.bf16.mxu0 0
  %1622 = vmatpush1.bf16.msra.mxu0 0
  %1623 = vmatprep.subr.bf16.mxu0 0
  %1624 = vmatpush1.bf16.msra.mxu0 0
  %1625 = vmatprep.mubr.bf16.mxu0 0
  %1626 = vmatmul.mubr.bf16.gmra.mrb[0].mxu0 %v1591
  %v1627 = vpop.f32.mrb[0].mxu0
  %v1628 = vadd.f32 0.0, %v1627
  %v1629 = vpop.f32.mrb[0].mxu0
  %v1630 = vpop.f32.mrb[0].mxu0
  %v1631 = vpop.f32.mrb[0].mxu0
  %1632 = vdwg.mxu0
  %v1633 = vpack.c.bf16 %v158, %v155
  %v1634 = vpack.c.bf16 %v166, %v163
  %v1635 = vpack.c.bf16 %v174, %v171
  %v1636 = vpack.c.bf16 %v182, %v179
  %v1637 = vpack.c.bf16 %v190, %v187
  %v1638 = vpack.c.bf16 %v198, %v195
  %v1639 = vpack.c.bf16 %v206, %v203
  %v1640 = vpack.c.bf16 %v214, %v211
  %v1641 = vpack.c.bf16 %v258, %v255
  %v1642 = vpack.c.bf16 %v266, %v263
  %v1643 = vpack.c.bf16 %v274, %v271
  %v1644 = vpack.c.bf16 %v282, %v279
  %v1645 = vpack.c.bf16 %v290, %v287
  %v1646 = vpack.c.bf16 %v298, %v295
  %v1647 = vpack.c.bf16 %v306, %v303
  %v1648 = vpack.c.bf16 %v314, %v311
  %v1649 = vpack.c.bf16 %v358, %v355
  %v1650 = vpack.c.bf16 %v366, %v363
  %v1651 = vpack.c.bf16 %v374, %v371
  %v1652 = vpack.c.bf16 %v382, %v379
  %v1653 = vpack.c.bf16 %v390, %v387
  %v1654 = vpack.c.bf16 %v398, %v395
  %v1655 = vpack.c.bf16 %v406, %v403
  %v1656 = vpack.c.bf16 %v414, %v411
  %v1657 = vpack.c.bf16 %v458, %v455
  %v1658 = vpack.c.bf16 %v466, %v463
  %v1659 = vpack.c.bf16 %v474, %v471
  %v1660 = vpack.c.bf16 %v482, %v479
  %v1661 = vpack.c.bf16 %v490, %v487
  %v1662 = vpack.c.bf16 %v498, %v495
  %v1663 = vpack.c.bf16 %v506, %v503
  %v1664 = vpack.c.bf16 %v514, %v511
  %v1665 = vpack.c.bf16 %v558, %v555
  %v1666 = vpack.c.bf16 %v566, %v563
  %v1667 = vpack.c.bf16 %v574, %v571
  %v1668 = vpack.c.bf16 %v582, %v579
  %v1669 = vpack.c.bf16 %v590, %v587
  %v1670 = vpack.c.bf16 %v598, %v595
  %v1671 = vpack.c.bf16 %v606, %v603
  %v1672 = vpack.c.bf16 %v614, %v611
  %v1673 = vpack.c.bf16 %v658, %v655
  %v1674 = vpack.c.bf16 %v666, %v663
  %v1675 = vpack.c.bf16 %v674, %v671
  %v1676 = vpack.c.bf16 %v682, %v679
  %v1677 = vpack.c.bf16 %v690, %v687
  %v1678 = vpack.c.bf16 %v698, %v695
  %v1679 = vpack.c.bf16 %v706, %v703
  %v1680 = vpack.c.bf16 %v714, %v711
  %v1681 = vpack.c.bf16 %v758, %v755
  %v1682 = vpack.c.bf16 %v766, %v763
  %v1683 = vpack.c.bf16 %v774, %v771
  %v1684 = vpack.c.bf16 %v782, %v779
  %v1685 = vpack.c.bf16 %v790, %v787
  %v1686 = vpack.c.bf16 %v798, %v795
  %v1687 = vpack.c.bf16 %v806, %v803
  %v1688 = vpack.c.bf16 %v814, %v811
  %v1689 = vpack.c.bf16 %v858, %v855
  %v1690 = vpack.c.bf16 %v866, %v863
  %v1691 = vpack.c.bf16 %v874, %v871
  %v1692 = vpack.c.bf16 %v882, %v879
  %v1693 = vpack.c.bf16 %v890, %v887
  %v1694 = vpack.c.bf16 %v898, %v895
  %v1695 = vpack.c.bf16 %v906, %v903
  %v1696 = vpack.c.bf16 %v914, %v911
  %v1697 = vpack.c.bf16 %v975, %v975
  %v1698 = vpack.c.bf16 %v1018, %v1018
  %v1699 = vpack.c.bf16 %v1061, %v1061
  %v1700 = vpack.c.bf16 %v1104, %v1104
  %v1701 = vpack.c.bf16 %v1147, %v1147
  %v1702 = vpack.c.bf16 %v1190, %v1190
  %v1703 = vpack.c.bf16 %v1233, %v1233
  %v1704 = vpack.c.bf16 %v1276, %v1276
  %v1705 = vpack.c.bf16 %v1327, %v1327
  %v1706 = vpack.c.bf16 %v1370, %v1370
  %v1707 = vpack.c.bf16 %v1413, %v1413
  %v1708 = vpack.c.bf16 %v1456, %v1456
  %v1709 = vpack.c.bf16 %v1499, %v1499
  %v1710 = vpack.c.bf16 %v1542, %v1542
  %v1711 = vpack.c.bf16 %v1585, %v1585
  %v1712 = vpack.c.bf16 %v1628, %v1628
  %v1713 = vld [vmem:[%s5] sm:$0xff]
  %v1714 = vld [vmem:[%s5 + $0x8] sm:$0xff]
  %v1715 = vld [vmem:[%s5 + $0x10] sm:$0xff]
  %v1716 = vld [vmem:[%s5 + $0x18] sm:$0xff]
  %v1717 = vld [vmem:[%s5 + $0x20] sm:$0xff]
  %v1718 = vld [vmem:[%s5 + $0x28] sm:$0xff]
  %v1719 = vld [vmem:[%s5 + $0x30] sm:$0xff]
  %v1720 = vld [vmem:[%s5 + $0x38] sm:$0xff]
  %v1721 = vld [vmem:[%s5 + $0x40] sm:$0xff]
  %v1722 = vld [vmem:[%s5 + $0x48] sm:$0xff]
  %v1723 = vld [vmem:[%s5 + $0x50] sm:$0xff]
  %v1724 = vld [vmem:[%s5 + $0x58] sm:$0xff]
  %v1725 = vld [vmem:[%s5 + $0x60] sm:$0xff]
  %v1726 = vld [vmem:[%s5 + $0x68] sm:$0xff]
  %v1727 = vld [vmem:[%s5 + $0x70] sm:$0xff]
  %v1728 = vld [vmem:[%s5 + $0x78] sm:$0xff]
  %vm1729 = vcmask 31744
  %v1731 = vsel %vm1729, %v1633, 0
  %v1734 = vsel %vm1729, %v1634, 0
  %v1737 = vsel %vm1729, %v1635, 0
  %v1740 = vsel %vm1729, %v1636, 0
  %v1743 = vsel %vm1729, %v1637, 0
  %v1746 = vsel %vm1729, %v1638, 0
  %v1749 = vsel %vm1729, %v1639, 0
  %v1752 = vsel %vm1729, %v1640, 0
  %vm1754 = vcmask 1041408
  %v1756 = vsel %vm1754, %v1697, 0
  %1758 = vmatprep.subr.bf16.mxu0 0
  %1759 = vmatpush1.bf16.msra.mxu0 %v1756
  %1760 = vmatprep.subr.bf16.mxu0 0
  %1761 = vmatpush1.bf16.msra.mxu0 0
  %1762 = vmatprep.subr.bf16.mxu0 0
  %1763 = vmatpush1.bf16.msra.mxu0 0
  %1764 = vmatprep.subr.bf16.mxu0 0
  %1765 = vmatpush1.bf16.msra.mxu0 0
  %1766 = vmatprep.subr.bf16.mxu0 0
  %1767 = vmatpush1.bf16.msra.mxu0 0
  %1768 = vmatprep.subr.bf16.mxu0 0
  %1769 = vmatpush1.bf16.msra.mxu0 0
  %1770 = vmatprep.subr.bf16.mxu0 0
  %1771 = vmatpush1.bf16.msra.mxu0 0
  %1772 = vmatprep.subr.bf16.mxu0 0
  %1773 = vmatpush1.bf16.msra.mxu0 0
  %1774 = vmatprep.subr.bf16.mxu0 0
  %1775 = vmatpush1.bf16.msra.mxu0 0
  %1776 = vmatprep.subr.bf16.mxu0 0
  %1777 = vmatpush1.bf16.msra.mxu0 0
  %1778 = vmatprep.subr.bf16.mxu0 0
  %1779 = vmatpush1.bf16.msra.mxu0 0
  %1780 = vmatprep.subr.bf16.mxu0 0
  %1781 = vmatpush1.bf16.msra.mxu0 0
  %1782 = vmatprep.subr.bf16.mxu0 0
  %1783 = vmatpush1.bf16.msra.mxu0 0
  %1784 = vmatprep.subr.bf16.mxu0 0
  %1785 = vmatpush1.bf16.msra.mxu0 0
  %1786 = vmatprep.subr.bf16.mxu0 0
  %1787 = vmatpush1.bf16.msra.mxu0 0
  %1788 = vmatprep.subr.bf16.mxu0 0
  %1789 = vmatpush1.bf16.msra.mxu0 0
  %1790 = vmatprep.mubr.bf16.mxu0 0
  %1791 = vmatmul.mubr.bf16.gmra.mrb[0].mxu0 %v1731
  %v1792 = vpop.f32.mrb[0].mxu0
  %v1793 = vadd.f32 %v1713, %v1792
  %v1794 = vpop.f32.mrb[0].mxu0
  %v1795 = vpop.f32.mrb[0].mxu0
  %v1796 = vadd.f32 %v1714, %v1795
  %v1797 = vpop.f32.mrb[0].mxu0
  %1798 = vmatprep.mubr.bf16.mxu0 0
  %1799 = vmatmul.mubr.bf16.gmra.mrb[0].mxu0 %v1734
  %v1800 = vpop.f32.mrb[0].mxu0
  %v1801 = vadd.f32 %v1715, %v1800
  %v1802 = vpop.f32.mrb[0].mxu0
  %v1803 = vpop.f32.mrb[0].mxu0
  %v1804 = vadd.f32 %v1716, %v1803
  %v1805 = vpop.f32.mrb[0].mxu0
  %1806 = vmatprep.mubr.bf16.mxu0 0
  %1807 = vmatmul.mubr.bf16.gmra.mrb[0].mxu0 %v1737
  %v1808 = vpop.f32.mrb[0].mxu0
  %v1809 = vadd.f32 %v1717, %v1808
  %v1810 = vpop.f32.mrb[0].mxu0
  %v1811 = vpop.f32.mrb[0].mxu0
  %v1812 = vadd.f32 %v1718, %v1811
  %v1813 = vpop.f32.mrb[0].mxu0
  %1814 = vmatprep.mubr.bf16.mxu0 0
  %1815 = vmatmul.mubr.bf16.gmra.mrb[0].mxu0 %v1740
  %v1816 = vpop.f32.mrb[0].mxu0
  %v1817 = vadd.f32 %v1719, %v1816
  %v1818 = vpop.f32.mrb[0].mxu0
  %v1819 = vpop.f32.mrb[0].mxu0
  %v1820 = vadd.f32 %v1720, %v1819
  %v1821 = vpop.f32.mrb[0].mxu0
  %1822 = vmatprep.mubr.bf16.mxu0 0
  %1823 = vmatmul.mubr.bf16.gmra.mrb[0].mxu0 %v1743
  %v1824 = vpop.f32.mrb[0].mxu0
  %v1825 = vadd.f32 %v1721, %v1824
  %v1826 = vpop.f32.mrb[0].mxu0
  %v1827 = vpop.f32.mrb[0].mxu0
  %v1828 = vadd.f32 %v1722, %v1827
  %v1829 = vpop.f32.mrb[0].mxu0
  %1830 = vmatprep.mubr.bf16.mxu0 0
  %1831 = vmatmul.mubr.bf16.gmra.mrb[0].mxu0 %v1746
  %v1832 = vpop.f32.mrb[0].mxu0
  %v1833 = vadd.f32 %v1723, %v1832
  %v1834 = vpop.f32.mrb[0].mxu0
  %v1835 = vpop.f32.mrb[0].mxu0
  %v1836 = vadd.f32 %v1724, %v1835
  %v1837 = vpop.f32.mrb[0].mxu0
  %1838 = vmatprep.mubr.bf16.mxu0 0
  %1839 = vmatmul.mubr.bf16.gmra.mrb[0].mxu0 %v1749
  %v1840 = vpop.f32.mrb[0].mxu0
  %v1841 = vadd.f32 %v1725, %v1840
  %v1842 = vpop.f32.mrb[0].mxu0
  %v1843 = vpop.f32.mrb[0].mxu0
  %v1844 = vadd.f32 %v1726, %v1843
  %v1845 = vpop.f32.mrb[0].mxu0
  %1846 = vmatprep.mubr.bf16.mxu0 0
  %1847 = vmatmul.mubr.bf16.gmra.mrb[0].mxu0 %v1752
  %v1848 = vpop.f32.mrb[0].mxu0
  %v1849 = vadd.f32 %v1727, %v1848
  %v1850 = vpop.f32.mrb[0].mxu0
  %v1851 = vpop.f32.mrb[0].mxu0
  %v1852 = vadd.f32 %v1728, %v1851
  %v1853 = vpop.f32.mrb[0].mxu0
  %1854 = vdwg.mxu0
  %v1856 = vsel %vm1729, %v1641, 0
  %v1859 = vsel %vm1729, %v1642, 0
  %v1862 = vsel %vm1729, %v1643, 0
  %v1865 = vsel %vm1729, %v1644, 0
  %v1868 = vsel %vm1729, %v1645, 0
  %v1871 = vsel %vm1729, %v1646, 0
  %v1874 = vsel %vm1729, %v1647, 0
  %v1877 = vsel %vm1729, %v1648, 0
  %v1880 = vsel %vm1754, %v1698, 0
  %1882 = vmatprep.subr.bf16.mxu0 0
  %1883 = vmatpush1.bf16.msra.mxu0 %v1880
  %1884 = vmatprep.subr.bf16.mxu0 0
  %1885 = vmatpush1.bf16.msra.mxu0 0
  %1886 = vmatprep.subr.bf16.mxu0 0
  %1887 = vmatpush1.bf16.msra.mxu0 0
  %1888 = vmatprep.subr.bf16.mxu0 0
  %1889 = vmatpush1.bf16.msra.mxu0 0
  %1890 = vmatprep.subr.bf16.mxu0 0
  %1891 = vmatpush1.bf16.msra.mxu0 0
  %1892 = vmatprep.subr.bf16.mxu0 0
  %1893 = vmatpush1.bf16.msra.mxu0 0
  %1894 = vmatprep.subr.bf16.mxu0 0
  %1895 = vmatpush1.bf16.msra.mxu0 0
  %1896 = vmatprep.subr.bf16.mxu0 0
  %1897 = vmatpush1.bf16.msra.mxu0 0
  %1898 = vmatprep.subr.bf16.mxu0 0
  %1899 = vmatpush1.bf16.msra.mxu0 0
  %1900 = vmatprep.subr.bf16.mxu0 0
  %1901 = vmatpush1.bf16.msra.mxu0 0
  %1902 = vmatprep.subr.bf16.mxu0 0
  %1903 = vmatpush1.bf16.msra.mxu0 0
  %1904 = vmatprep.subr.bf16.mxu0 0
  %1905 = vmatpush1.bf16.msra.mxu0 0
  %1906 = vmatprep.subr.bf16.mxu0 0
  %1907 = vmatpush1.bf16.msra.mxu0 0
  %1908 = vmatprep.subr.bf16.mxu0 0
  %1909 = vmatpush1.bf16.msra.mxu0 0
  %1910 = vmatprep.subr.bf16.mxu0 0
  %1911 = vmatpush1.bf16.msra.mxu0 0
  %1912 = vmatprep.subr.bf16.mxu0 0
  %1913 = vmatpush1.bf16.msra.mxu0 0
  %1914 = vmatprep.mubr.bf16.mxu0 0
  %1915 = vmatmul.mubr.bf16.gmra.mrb[0].mxu0 %v1856
  %v1916 = vpop.f32.mrb[0].mxu0
  %v1917 = vadd.f32 %v1713, %v1916
  %v1918 = vpop.f32.mrb[0].mxu0
  %v1919 = vpop.f32.mrb[0].mxu0
  %v1920 = vadd.f32 %v1714, %v1919
  %v1921 = vpop.f32.mrb[0].mxu0
  %1922 = vmatprep.mubr.bf16.mxu0 0
  %1923 = vmatmul.mubr.bf16.gmra.mrb[0].mxu0 %v1859
  %v1924 = vpop.f32.mrb[0].mxu0
  %v1925 = vadd.f32 %v1715, %v1924
  %v1926 = vpop.f32.mrb[0].mxu0
  %v1927 = vpop.f32.mrb[0].mxu0
  %v1928 = vadd.f32 %v1716, %v1927
  %v1929 = vpop.f32.mrb[0].mxu0
  %1930 = vmatprep.mubr.bf16.mxu0 0
  %1931 = vmatmul.mubr.bf16.gmra.mrb[0].mxu0 %v1862
  %v1932 = vpop.f32.mrb[0].mxu0
  %v1933 = vadd.f32 %v1717, %v1932
  %v1934 = vpop.f32.mrb[0].mxu0
  %v1935 = vpop.f32.mrb[0].mxu0
  %v1936 = vadd.f32 %v1718, %v1935
  %v1937 = vpop.f32.mrb[0].mxu0
  %1938 = vmatprep.mubr.bf16.mxu0 0
  %1939 = vmatmul.mubr.bf16.gmra.mrb[0].mxu0 %v1865
  %v1940 = vpop.f32.mrb[0].mxu0
  %v1941 = vadd.f32 %v1719, %v1940
  %v1942 = vpop.f32.mrb[0].mxu0
  %v1943 = vpop.f32.mrb[0].mxu0
  %v1944 = vadd.f32 %v1720, %v1943
  %v1945 = vpop.f32.mrb[0].mxu0
  %1946 = vmatprep.mubr.bf16.mxu0 0
  %1947 = vmatmul.mubr.bf16.gmra.mrb[0].mxu0 %v1868
  %v1948 = vpop.f32.mrb[0].mxu0
  %v1949 = vadd.f32 %v1721, %v1948
  %v1950 = vpop.f32.mrb[0].mxu0
  %v1951 = vpop.f32.mrb[0].mxu0
  %v1952 = vadd.f32 %v1722, %v1951
  %v1953 = vpop.f32.mrb[0].mxu0
  %1954 = vmatprep.mubr.bf16.mxu0 0
  %1955 = vmatmul.mubr.bf16.gmra.mrb[0].mxu0 %v1871
  %v1956 = vpop.f32.mrb[0].mxu0
  %v1957 = vadd.f32 %v1723, %v1956
  %v1958 = vpop.f32.mrb[0].mxu0
  %v1959 = vpop.f32.mrb[0].mxu0
  %v1960 = vadd.f32 %v1724, %v1959
  %v1961 = vpop.f32.mrb[0].mxu0
  %1962 = vmatprep.mubr.bf16.mxu0 0
  %1963 = vmatmul.mubr.bf16.gmra.mrb[0].mxu0 %v1874
  %v1964 = vpop.f32.mrb[0].mxu0
  %v1965 = vadd.f32 %v1725, %v1964
  %v1966 = vpop.f32.mrb[0].mxu0
  %v1967 = vpop.f32.mrb[0].mxu0
  %v1968 = vadd.f32 %v1726, %v1967
  %v1969 = vpop.f32.mrb[0].mxu0
  %1970 = vmatprep.mubr.bf16.mxu0 0
  %1971 = vmatmul.mubr.bf16.gmra.mrb[0].mxu0 %v1877
  %v1972 = vpop.f32.mrb[0].mxu0
  %v1973 = vadd.f32 %v1727, %v1972
  %v1974 = vpop.f32.mrb[0].mxu0
  %v1975 = vpop.f32.mrb[0].mxu0
  %v1976 = vadd.f32 %v1728, %v1975
  %v1977 = vpop.f32.mrb[0].mxu0
  %1978 = vdwg.mxu0
  %v1980 = vsel %vm1729, %v1649, 0
  %v1983 = vsel %vm1729, %v1650, 0
  %v1986 = vsel %vm1729, %v1651, 0
  %v1989 = vsel %vm1729, %v1652, 0
  %v1992 = vsel %vm1729, %v1653, 0
  %v1995 = vsel %vm1729, %v1654, 0
  %v1998 = vsel %vm1729, %v1655, 0
  %v2001 = vsel %vm1729, %v1656, 0
  %v2004 = vsel %vm1754, %v1699, 0
  %2006 = vmatprep.subr.bf16.mxu0 0
  %2007 = vmatpush1.bf16.msra.mxu0 %v2004
  %2008 = vmatprep.subr.bf16.mxu0 0
  %2009 = vmatpush1.bf16.msra.mxu0 0
  %2010 = vmatprep.subr.bf16.mxu0 0
  %2011 = vmatpush1.bf16.msra.mxu0 0
  %2012 = vmatprep.subr.bf16.mxu0 0
  %2013 = vmatpush1.bf16.msra.mxu0 0
  %2014 = vmatprep.subr.bf16.mxu0 0
  %2015 = vmatpush1.bf16.msra.mxu0 0
  %2016 = vmatprep.subr.bf16.mxu0 0
  %2017 = vmatpush1.bf16.msra.mxu0 0
  %2018 = vmatprep.subr.bf16.mxu0 0
  %2019 = vmatpush1.bf16.msra.mxu0 0
  %2020 = vmatprep.subr.bf16.mxu0 0
  %2021 = vmatpush1.bf16.msra.mxu0 0
  %2022 = vmatprep.subr.bf16.mxu0 0
  %2023 = vmatpush1.bf16.msra.mxu0 0
  %2024 = vmatprep.subr.bf16.mxu0 0
  %2025 = vmatpush1.bf16.msra.mxu0 0
  %2026 = vmatprep.subr.bf16.mxu0 0
  %2027 = vmatpush1.bf16.msra.mxu0 0
  %2028 = vmatprep.subr.bf16.mxu0 0
  %2029 = vmatpush1.bf16.msra.mxu0 0
  %2030 = vmatprep.subr.bf16.mxu0 0
  %2031 = vmatpush1.bf16.msra.mxu0 0
  %2032 = vmatprep.subr.bf16.mxu0 0
  %2033 = vmatpush1.bf16.msra.mxu0 0
  %2034 = vmatprep.subr.bf16.mxu0 0
  %2035 = vmatpush1.bf16.msra.mxu0 0
  %2036 = vmatprep.subr.bf16.mxu0 0
  %2037 = vmatpush1.bf16.msra.mxu0 0
  %2038 = vmatprep.mubr.bf16.mxu0 0
  %2039 = vmatmul.mubr.bf16.gmra.mrb[0].mxu0 %v1980
  %v2040 = vpop.f32.mrb[0].mxu0
  %v2041 = vadd.f32 %v1713, %v2040
  %v2042 = vpop.f32.mrb[0].mxu0
  %v2043 = vpop.f32.mrb[0].mxu0
  %v2044 = vadd.f32 %v1714, %v2043
  %v2045 = vpop.f32.mrb[0].mxu0
  %2046 = vmatprep.mubr.bf16.mxu0 0
  %2047 = vmatmul.mubr.bf16.gmra.mrb[0].mxu0 %v1983
  %v2048 = vpop.f32.mrb[0].mxu0
  %v2049 = vadd.f32 %v1715, %v2048
  %v2050 = vpop.f32.mrb[0].mxu0
  %v2051 = vpop.f32.mrb[0].mxu0
  %v2052 = vadd.f32 %v1716, %v2051
  %v2053 = vpop.f32.mrb[0].mxu0
  %2054 = vmatprep.mubr.bf16.mxu0 0
  %2055 = vmatmul.mubr.bf16.gmra.mrb[0].mxu0 %v1986
  %v2056 = vpop.f32.mrb[0].mxu0
  %v2057 = vadd.f32 %v1717, %v2056
  %v2058 = vpop.f32.mrb[0].mxu0
  %v2059 = vpop.f32.mrb[0].mxu0
  %v2060 = vadd.f32 %v1718, %v2059
  %v2061 = vpop.f32.mrb[0].mxu0
  %2062 = vmatprep.mubr.bf16.mxu0 0
  %2063 = vmatmul.mubr.bf16.gmra.mrb[0].mxu0 %v1989
  %v2064 = vpop.f32.mrb[0].mxu0
  %v2065 = vadd.f32 %v1719, %v2064
  %v2066 = vpop.f32.mrb[0].mxu0
  %v2067 = vpop.f32.mrb[0].mxu0
  %v2068 = vadd.f32 %v1720, %v2067
  %v2069 = vpop.f32.mrb[0].mxu0
  %2070 = vmatprep.mubr.bf16.mxu0 0
  %2071 = vmatmul.mubr.bf16.gmra.mrb[0].mxu0 %v1992
  %v2072 = vpop.f32.mrb[0].mxu0
  %v2073 = vadd.f32 %v1721, %v2072
  %v2074 = vpop.f32.mrb[0].mxu0
  %v2075 = vpop.f32.mrb[0].mxu0
  %v2076 = vadd.f32 %v1722, %v2075
  %v2077 = vpop.f32.mrb[0].mxu0
  %2078 = vmatprep.mubr.bf16.mxu0 0
  %2079 = vmatmul.mubr.bf16.gmra.mrb[0].mxu0 %v1995
  %v2080 = vpop.f32.mrb[0].mxu0
  %v2081 = vadd.f32 %v1723, %v2080
  %v2082 = vpop.f32.mrb[0].mxu0
  %v2083 = vpop.f32.mrb[0].mxu0
  %v2084 = vadd.f32 %v1724, %v2083
  %v2085 = vpop.f32.mrb[0].mxu0
  %2086 = vmatprep.mubr.bf16.mxu0 0
  %2087 = vmatmul.mubr.bf16.gmra.mrb[0].mxu0 %v1998
  %v2088 = vpop.f32.mrb[0].mxu0
  %v2089 = vadd.f32 %v1725, %v2088
  %v2090 = vpop.f32.mrb[0].mxu0
  %v2091 = vpop.f32.mrb[0].mxu0
  %v2092 = vadd.f32 %v1726, %v2091
  %v2093 = vpop.f32.mrb[0].mxu0
  %2094 = vmatprep.mubr.bf16.mxu0 0
  %2095 = vmatmul.mubr.bf16.gmra.mrb[0].mxu0 %v2001
  %v2096 = vpop.f32.mrb[0].mxu0
  %v2097 = vadd.f32 %v1727, %v2096
  %v2098 = vpop.f32.mrb[0].mxu0
  %v2099 = vpop.f32.mrb[0].mxu0
  %v2100 = vadd.f32 %v1728, %v2099
  %v2101 = vpop.f32.mrb[0].mxu0
  %2102 = vdwg.mxu0
  %v2104 = vsel %vm1729, %v1657, 0
  %v2107 = vsel %vm1729, %v1658, 0
  %v2110 = vsel %vm1729, %v1659, 0
  %v2113 = vsel %vm1729, %v1660, 0
  %v2116 = vsel %vm1729, %v1661, 0
  %v2119 = vsel %vm1729, %v1662, 0
  %v2122 = vsel %vm1729, %v1663, 0
  %v2125 = vsel %vm1729, %v1664, 0
  %v2128 = vsel %vm1754, %v1700, 0
  %2130 = vmatprep.subr.bf16.mxu0 0
  %2131 = vmatpush1.bf16.msra.mxu0 %v2128
  %2132 = vmatprep.subr.bf16.mxu0 0
  %2133 = vmatpush1.bf16.msra.mxu0 0
  %2134 = vmatprep.subr.bf16.mxu0 0
  %2135 = vmatpush1.bf16.msra.mxu0 0
  %2136 = vmatprep.subr.bf16.mxu0 0
  %2137 = vmatpush1.bf16.msra.mxu0 0
  %2138 = vmatprep.subr.bf16.mxu0 0
  %2139 = vmatpush1.bf16.msra.mxu0 0
  %2140 = vmatprep.subr.bf16.mxu0 0
  %2141 = vmatpush1.bf16.msra.mxu0 0
  %2142 = vmatprep.subr.bf16.mxu0 0
  %2143 = vmatpush1.bf16.msra.mxu0 0
  %2144 = vmatprep.subr.bf16.mxu0 0
  %2145 = vmatpush1.bf16.msra.mxu0 0
  %2146 = vmatprep.subr.bf16.mxu0 0
  %2147 = vmatpush1.bf16.msra.mxu0 0
  %2148 = vmatprep.subr.bf16.mxu0 0
  %2149 = vmatpush1.bf16.msra.mxu0 0
  %2150 = vmatprep.subr.bf16.mxu0 0
  %2151 = vmatpush1.bf16.msra.mxu0 0
  %2152 = vmatprep.subr.bf16.mxu0 0
  %2153 = vmatpush1.bf16.msra.mxu0 0
  %2154 = vmatprep.subr.bf16.mxu0 0
  %2155 = vmatpush1.bf16.msra.mxu0 0
  %2156 = vmatprep.subr.bf16.mxu0 0
  %2157 = vmatpush1.bf16.msra.mxu0 0
  %2158 = vmatprep.subr.bf16.mxu0 0
  %2159 = vmatpush1.bf16.msra.mxu0 0
  %2160 = vmatprep.subr.bf16.mxu0 0
  %2161 = vmatpush1.bf16.msra.mxu0 0
  %2162 = vmatprep.mubr.bf16.mxu0 0
  %2163 = vmatmul.mubr.bf16.gmra.mrb[0].mxu0 %v2104
  %v2164 = vpop.f32.mrb[0].mxu0
  %v2165 = vadd.f32 %v1713, %v2164
  %v2166 = vpop.f32.mrb[0].mxu0
  %v2167 = vpop.f32.mrb[0].mxu0
  %v2168 = vadd.f32 %v1714, %v2167
  %v2169 = vpop.f32.mrb[0].mxu0
  %2170 = vmatprep.mubr.bf16.mxu0 0
  %2171 = vmatmul.mubr.bf16.gmra.mrb[0].mxu0 %v2107
  %v2172 = vpop.f32.mrb[0].mxu0
  %v2173 = vadd.f32 %v1715, %v2172
  %v2174 = vpop.f32.mrb[0].mxu0
  %v2175 = vpop.f32.mrb[0].mxu0
  %v2176 = vadd.f32 %v1716, %v2175
  %v2177 = vpop.f32.mrb[0].mxu0
  %2178 = vmatprep.mubr.bf16.mxu0 0
  %2179 = vmatmul.mubr.bf16.gmra.mrb[0].mxu0 %v2110
  %v2180 = vpop.f32.mrb[0].mxu0
  %v2181 = vadd.f32 %v1717, %v2180
  %v2182 = vpop.f32.mrb[0].mxu0
  %v2183 = vpop.f32.mrb[0].mxu0
  %v2184 = vadd.f32 %v1718, %v2183
  %v2185 = vpop.f32.mrb[0].mxu0
  %2186 = vmatprep.mubr.bf16.mxu0 0
  %2187 = vmatmul.mubr.bf16.gmra.mrb[0].mxu0 %v2113
  %v2188 = vpop.f32.mrb[0].mxu0
  %v2189 = vadd.f32 %v1719, %v2188
  %v2190 = vpop.f32.mrb[0].mxu0
  %v2191 = vpop.f32.mrb[0].mxu0
  %v2192 = vadd.f32 %v1720, %v2191
  %v2193 = vpop.f32.mrb[0].mxu0
  %2194 = vmatprep.mubr.bf16.mxu0 0
  %2195 = vmatmul.mubr.bf16.gmra.mrb[0].mxu0 %v2116
  %v2196 = vpop.f32.mrb[0].mxu0
  %v2197 = vadd.f32 %v1721, %v2196
  %v2198 = vpop.f32.mrb[0].mxu0
  %v2199 = vpop.f32.mrb[0].mxu0
  %v2200 = vadd.f32 %v1722, %v2199
  %v2201 = vpop.f32.mrb[0].mxu0
  %2202 = vmatprep.mubr.bf16.mxu0 0
  %2203 = vmatmul.mubr.bf16.gmra.mrb[0].mxu0 %v2119
  %v2204 = vpop.f32.mrb[0].mxu0
  %v2205 = vadd.f32 %v1723, %v2204
  %v2206 = vpop.f32.mrb[0].mxu0
  %v2207 = vpop.f32.mrb[0].mxu0
  %v2208 = vadd.f32 %v1724, %v2207
  %v2209 = vpop.f32.mrb[0].mxu0
  %2210 = vmatprep.mubr.bf16.mxu0 0
  %2211 = vmatmul.mubr.bf16.gmra.mrb[0].mxu0 %v2122
  %v2212 = vpop.f32.mrb[0].mxu0
  %v2213 = vadd.f32 %v1725, %v2212
  %v2214 = vpop.f32.mrb[0].mxu0
  %v2215 = vpop.f32.mrb[0].mxu0
  %v2216 = vadd.f32 %v1726, %v2215
  %v2217 = vpop.f32.mrb[0].mxu0
  %2218 = vmatprep.mubr.bf16.mxu0 0
  %2219 = vmatmul.mubr.bf16.gmra.mrb[0].mxu0 %v2125
  %v2220 = vpop.f32.mrb[0].mxu0
  %v2221 = vadd.f32 %v1727, %v2220
  %v2222 = vpop.f32.mrb[0].mxu0
  %v2223 = vpop.f32.mrb[0].mxu0
  %v2224 = vadd.f32 %v1728, %v2223
  %v2225 = vpop.f32.mrb[0].mxu0
  %2226 = vdwg.mxu0
  %v2228 = vsel %vm1729, %v1665, 0
  %v2231 = vsel %vm1729, %v1666, 0
  %v2234 = vsel %vm1729, %v1667, 0
  %v2237 = vsel %vm1729, %v1668, 0
  %v2240 = vsel %vm1729, %v1669, 0
  %v2243 = vsel %vm1729, %v1670, 0
  %v2246 = vsel %vm1729, %v1671, 0
  %v2249 = vsel %vm1729, %v1672, 0
  %v2252 = vsel %vm1754, %v1701, 0
  %2254 = vmatprep.subr.bf16.mxu0 0
  %2255 = vmatpush1.bf16.msra.mxu0 %v2252
  %2256 = vmatprep.subr.bf16.mxu0 0
  %2257 = vmatpush1.bf16.msra.mxu0 0
  %2258 = vmatprep.subr.bf16.mxu0 0
  %2259 = vmatpush1.bf16.msra.mxu0 0
  %2260 = vmatprep.subr.bf16.mxu0 0
  %2261 = vmatpush1.bf16.msra.mxu0 0
  %2262 = vmatprep.subr.bf16.mxu0 0
  %2263 = vmatpush1.bf16.msra.mxu0 0
  %2264 = vmatprep.subr.bf16.mxu0 0
  %2265 = vmatpush1.bf16.msra.mxu0 0
  %2266 = vmatprep.subr.bf16.mxu0 0
  %2267 = vmatpush1.bf16.msra.mxu0 0
  %2268 = vmatprep.subr.bf16.mxu0 0
  %2269 = vmatpush1.bf16.msra.mxu0 0
  %2270 = vmatprep.subr.bf16.mxu0 0
  %2271 = vmatpush1.bf16.msra.mxu0 0
  %2272 = vmatprep.subr.bf16.mxu0 0
  %2273 = vmatpush1.bf16.msra.mxu0 0
  %2274 = vmatprep.subr.bf16.mxu0 0
  %2275 = vmatpush1.bf16.msra.mxu0 0
  %2276 = vmatprep.subr.bf16.mxu0 0
  %2277 = vmatpush1.bf16.msra.mxu0 0
  %2278 = vmatprep.subr.bf16.mxu0 0
  %2279 = vmatpush1.bf16.msra.mxu0 0
  %2280 = vmatprep.subr.bf16.mxu0 0
  %2281 = vmatpush1.bf16.msra.mxu0 0
  %2282 = vmatprep.subr.bf16.mxu0 0
  %2283 = vmatpush1.bf16.msra.mxu0 0
  %2284 = vmatprep.subr.bf16.mxu0 0
  %2285 = vmatpush1.bf16.msra.mxu0 0
  %2286 = vmatprep.mubr.bf16.mxu0 0
  %2287 = vmatmul.mubr.bf16.gmra.mrb[0].mxu0 %v2228
  %v2288 = vpop.f32.mrb[0].mxu0
  %v2289 = vadd.f32 %v1713, %v2288
  %v2290 = vpop.f32.mrb[0].mxu0
  %v2291 = vpop.f32.mrb[0].mxu0
  %v2292 = vadd.f32 %v1714, %v2291
  %v2293 = vpop.f32.mrb[0].mxu0
  %2294 = vmatprep.mubr.bf16.mxu0 0
  %2295 = vmatmul.mubr.bf16.gmra.mrb[0].mxu0 %v2231
  %v2296 = vpop.f32.mrb[0].mxu0
  %v2297 = vadd.f32 %v1715, %v2296
  %v2298 = vpop.f32.mrb[0].mxu0
  %v2299 = vpop.f32.mrb[0].mxu0
  %v2300 = vadd.f32 %v1716, %v2299
  %v2301 = vpop.f32.mrb[0].mxu0
  %2302 = vmatprep.mubr.bf16.mxu0 0
  %2303 = vmatmul.mubr.bf16.gmra.mrb[0].mxu0 %v2234
  %v2304 = vpop.f32.mrb[0].mxu0
  %v2305 = vadd.f32 %v1717, %v2304
  %v2306 = vpop.f32.mrb[0].mxu0
  %v2307 = vpop.f32.mrb[0].mxu0
  %v2308 = vadd.f32 %v1718, %v2307
  %v2309 = vpop.f32.mrb[0].mxu0
  %2310 = vmatprep.mubr.bf16.mxu0 0
  %2311 = vmatmul.mubr.bf16.gmra.mrb[0].mxu0 %v2237
  %v2312 = vpop.f32.mrb[0].mxu0
  %v2313 = vadd.f32 %v1719, %v2312
  %v2314 = vpop.f32.mrb[0].mxu0
  %v2315 = vpop.f32.mrb[0].mxu0
  %v2316 = vadd.f32 %v1720, %v2315
  %v2317 = vpop.f32.mrb[0].mxu0
  %2318 = vmatprep.mubr.bf16.mxu0 0
  %2319 = vmatmul.mubr.bf16.gmra.mrb[0].mxu0 %v2240
  %v2320 = vpop.f32.mrb[0].mxu0
  %v2321 = vadd.f32 %v1721, %v2320
  %v2322 = vpop.f32.mrb[0].mxu0
  %v2323 = vpop.f32.mrb[0].mxu0
  %v2324 = vadd.f32 %v1722, %v2323
  %v2325 = vpop.f32.mrb[0].mxu0
  %2326 = vmatprep.mubr.bf16.mxu0 0
  %2327 = vmatmul.mubr.bf16.gmra.mrb[0].mxu0 %v2243
  %v2328 = vpop.f32.mrb[0].mxu0
  %v2329 = vadd.f32 %v1723, %v2328
  %v2330 = vpop.f32.mrb[0].mxu0
  %v2331 = vpop.f32.mrb[0].mxu0
  %v2332 = vadd.f32 %v1724, %v2331
  %v2333 = vpop.f32.mrb[0].mxu0
  %2334 = vmatprep.mubr.bf16.mxu0 0
  %2335 = vmatmul.mubr.bf16.gmra.mrb[0].mxu0 %v2246
  %v2336 = vpop.f32.mrb[0].mxu0
  %v2337 = vadd.f32 %v1725, %v2336
  %v2338 = vpop.f32.mrb[0].mxu0
  %v2339 = vpop.f32.mrb[0].mxu0
  %v2340 = vadd.f32 %v1726, %v2339
  %v2341 = vpop.f32.mrb[0].mxu0
  %2342 = vmatprep.mubr.bf16.mxu0 0
  %2343 = vmatmul.mubr.bf16.gmra.mrb[0].mxu0 %v2249
  %v2344 = vpop.f32.mrb[0].mxu0
  %v2345 = vadd.f32 %v1727, %v2344
  %v2346 = vpop.f32.mrb[0].mxu0
  %v2347 = vpop.f32.mrb[0].mxu0
  %v2348 = vadd.f32 %v1728, %v2347
  %v2349 = vpop.f32.mrb[0].mxu0
  %2350 = vdwg.mxu0
  %v2352 = vsel %vm1729, %v1673, 0
  %v2355 = vsel %vm1729, %v1674, 0
  %v2358 = vsel %vm1729, %v1675, 0
  %v2361 = vsel %vm1729, %v1676, 0
  %v2364 = vsel %vm1729, %v1677, 0
  %v2367 = vsel %vm1729, %v1678, 0
  %v2370 = vsel %vm1729, %v1679, 0
  %v2373 = vsel %vm1729, %v1680, 0
  %v2376 = vsel %vm1754, %v1702, 0
  %2378 = vmatprep.subr.bf16.mxu0 0
  %2379 = vmatpush1.bf16.msra.mxu0 %v2376
  %2380 = vmatprep.subr.bf16.mxu0 0
  %2381 = vmatpush1.bf16.msra.mxu0 0
  %2382 = vmatprep.subr.bf16.mxu0 0
  %2383 = vmatpush1.bf16.msra.mxu0 0
  %2384 = vmatprep.subr.bf16.mxu0 0
  %2385 = vmatpush1.bf16.msra.mxu0 0
  %2386 = vmatprep.subr.bf16.mxu0 0
  %2387 = vmatpush1.bf16.msra.mxu0 0
  %2388 = vmatprep.subr.bf16.mxu0 0
  %2389 = vmatpush1.bf16.msra.mxu0 0
  %2390 = vmatprep.subr.bf16.mxu0 0
  %2391 = vmatpush1.bf16.msra.mxu0 0
  %2392 = vmatprep.subr.bf16.mxu0 0
  %2393 = vmatpush1.bf16.msra.mxu0 0
  %2394 = vmatprep.subr.bf16.mxu0 0
  %2395 = vmatpush1.bf16.msra.mxu0 0
  %2396 = vmatprep.subr.bf16.mxu0 0
  %2397 = vmatpush1.bf16.msra.mxu0 0
  %2398 = vmatprep.subr.bf16.mxu0 0
  %2399 = vmatpush1.bf16.msra.mxu0 0
  %2400 = vmatprep.subr.bf16.mxu0 0
  %2401 = vmatpush1.bf16.msra.mxu0 0
  %2402 = vmatprep.subr.bf16.mxu0 0
  %2403 = vmatpush1.bf16.msra.mxu0 0
  %2404 = vmatprep.subr.bf16.mxu0 0
  %2405 = vmatpush1.bf16.msra.mxu0 0
  %2406 = vmatprep.subr.bf16.mxu0 0
  %2407 = vmatpush1.bf16.msra.mxu0 0
  %2408 = vmatprep.subr.bf16.mxu0 0
  %2409 = vmatpush1.bf16.msra.mxu0 0
  %2410 = vmatprep.mubr.bf16.mxu0 0
  %2411 = vmatmul.mubr.bf16.gmra.mrb[0].mxu0 %v2352
  %v2412 = vpop.f32.mrb[0].mxu0
  %v2413 = vadd.f32 %v1713, %v2412
  %v2414 = vpop.f32.mrb[0].mxu0
  %v2415 = vpop.f32.mrb[0].mxu0
  %v2416 = vadd.f32 %v1714, %v2415
  %v2417 = vpop.f32.mrb[0].mxu0
  %2418 = vmatprep.mubr.bf16.mxu0 0
  %2419 = vmatmul.mubr.bf16.gmra.mrb[0].mxu0 %v2355
  %v2420 = vpop.f32.mrb[0].mxu0
  %v2421 = vadd.f32 %v1715, %v2420
  %v2422 = vpop.f32.mrb[0].mxu0
  %v2423 = vpop.f32.mrb[0].mxu0
  %v2424 = vadd.f32 %v1716, %v2423
  %v2425 = vpop.f32.mrb[0].mxu0
  %2426 = vmatprep.mubr.bf16.mxu0 0
  %2427 = vmatmul.mubr.bf16.gmra.mrb[0].mxu0 %v2358
  %v2428 = vpop.f32.mrb[0].mxu0
  %v2429 = vadd.f32 %v1717, %v2428
  %v2430 = vpop.f32.mrb[0].mxu0
  %v2431 = vpop.f32.mrb[0].mxu0
  %v2432 = vadd.f32 %v1718, %v2431
  %v2433 = vpop.f32.mrb[0].mxu0
  %2434 = vmatprep.mubr.bf16.mxu0 0
  %2435 = vmatmul.mubr.bf16.gmra.mrb[0].mxu0 %v2361
  %v2436 = vpop.f32.mrb[0].mxu0
  %v2437 = vadd.f32 %v1719, %v2436
  %v2438 = vpop.f32.mrb[0].mxu0
  %v2439 = vpop.f32.mrb[0].mxu0
  %v2440 = vadd.f32 %v1720, %v2439
  %v2441 = vpop.f32.mrb[0].mxu0
  %2442 = vmatprep.mubr.bf16.mxu0 0
  %2443 = vmatmul.mubr.bf16.gmra.mrb[0].mxu0 %v2364
  %v2444 = vpop.f32.mrb[0].mxu0
  %v2445 = vadd.f32 %v1721, %v2444
  %v2446 = vpop.f32.mrb[0].mxu0
  %v2447 = vpop.f32.mrb[0].mxu0
  %v2448 = vadd.f32 %v1722, %v2447
  %v2449 = vpop.f32.mrb[0].mxu0
  %2450 = vmatprep.mubr.bf16.mxu0 0
  %2451 = vmatmul.mubr.bf16.gmra.mrb[0].mxu0 %v2367
  %v2452 = vpop.f32.mrb[0].mxu0
  %v2453 = vadd.f32 %v1723, %v2452
  %v2454 = vpop.f32.mrb[0].mxu0
  %v2455 = vpop.f32.mrb[0].mxu0
  %v2456 = vadd.f32 %v1724, %v2455
  %v2457 = vpop.f32.mrb[0].mxu0
  %2458 = vmatprep.mubr.bf16.mxu0 0
  %2459 = vmatmul.mubr.bf16.gmra.mrb[0].mxu0 %v2370
  %v2460 = vpop.f32.mrb[0].mxu0
  %v2461 = vadd.f32 %v1725, %v2460
  %v2462 = vpop.f32.mrb[0].mxu0
  %v2463 = vpop.f32.mrb[0].mxu0
  %v2464 = vadd.f32 %v1726, %v2463
  %v2465 = vpop.f32.mrb[0].mxu0
  %2466 = vmatprep.mubr.bf16.mxu0 0
  %2467 = vmatmul.mubr.bf16.gmra.mrb[0].mxu0 %v2373
  %v2468 = vpop.f32.mrb[0].mxu0
  %v2469 = vadd.f32 %v1727, %v2468
  %v2470 = vpop.f32.mrb[0].mxu0
  %v2471 = vpop.f32.mrb[0].mxu0
  %v2472 = vadd.f32 %v1728, %v2471
  %v2473 = vpop.f32.mrb[0].mxu0
  %2474 = vdwg.mxu0
  %v2476 = vsel %vm1729, %v1681, 0
  %v2479 = vsel %vm1729, %v1682, 0
  %v2482 = vsel %vm1729, %v1683, 0
  %v2485 = vsel %vm1729, %v1684, 0
  %v2488 = vsel %vm1729, %v1685, 0
  %v2491 = vsel %vm1729, %v1686, 0
  %v2494 = vsel %vm1729, %v1687, 0
  %v2497 = vsel %vm1729, %v1688, 0
  %v2500 = vsel %vm1754, %v1703, 0
  %2502 = vmatprep.subr.bf16.mxu0 0
  %2503 = vmatpush1.bf16.msra.mxu0 %v2500
  %2504 = vmatprep.subr.bf16.mxu0 0
  %2505 = vmatpush1.bf16.msra.mxu0 0
  %2506 = vmatprep.subr.bf16.mxu0 0
  %2507 = vmatpush1.bf16.msra.mxu0 0
  %2508 = vmatprep.subr.bf16.mxu0 0
  %2509 = vmatpush1.bf16.msra.mxu0 0
  %2510 = vmatprep.subr.bf16.mxu0 0
  %2511 = vmatpush1.bf16.msra.mxu0 0
  %2512 = vmatprep.subr.bf16.mxu0 0
  %2513 = vmatpush1.bf16.msra.mxu0 0
  %2514 = vmatprep.subr.bf16.mxu0 0
  %2515 = vmatpush1.bf16.msra.mxu0 0
  %2516 = vmatprep.subr.bf16.mxu0 0
  %2517 = vmatpush1.bf16.msra.mxu0 0
  %2518 = vmatprep.subr.bf16.mxu0 0
  %2519 = vmatpush1.bf16.msra.mxu0 0
  %2520 = vmatprep.subr.bf16.mxu0 0
  %2521 = vmatpush1.bf16.msra.mxu0 0
  %2522 = vmatprep.subr.bf16.mxu0 0
  %2523 = vmatpush1.bf16.msra.mxu0 0
  %2524 = vmatprep.subr.bf16.mxu0 0
  %2525 = vmatpush1.bf16.msra.mxu0 0
  %2526 = vmatprep.subr.bf16.mxu0 0
  %2527 = vmatpush1.bf16.msra.mxu0 0
  %2528 = vmatprep.subr.bf16.mxu0 0
  %2529 = vmatpush1.bf16.msra.mxu0 0
  %2530 = vmatprep.subr.bf16.mxu0 0
  %2531 = vmatpush1.bf16.msra.mxu0 0
  %2532 = vmatprep.subr.bf16.mxu0 0
  %2533 = vmatpush1.bf16.msra.mxu0 0
  %2534 = vmatprep.mubr.bf16.mxu0 0
  %2535 = vmatmul.mubr.bf16.gmra.mrb[0].mxu0 %v2476
  %v2536 = vpop.f32.mrb[0].mxu0
  %v2537 = vadd.f32 %v1713, %v2536
  %v2538 = vpop.f32.mrb[0].mxu0
  %v2539 = vpop.f32.mrb[0].mxu0
  %v2540 = vadd.f32 %v1714, %v2539
  %v2541 = vpop.f32.mrb[0].mxu0
  %2542 = vmatprep.mubr.bf16.mxu0 0
  %2543 = vmatmul.mubr.bf16.gmra.mrb[0].mxu0 %v2479
  %v2544 = vpop.f32.mrb[0].mxu0
  %v2545 = vadd.f32 %v1715, %v2544
  %v2546 = vpop.f32.mrb[0].mxu0
  %v2547 = vpop.f32.mrb[0].mxu0
  %v2548 = vadd.f32 %v1716, %v2547
  %v2549 = vpop.f32.mrb[0].mxu0
  %2550 = vmatprep.mubr.bf16.mxu0 0
  %2551 = vmatmul.mubr.bf16.gmra.mrb[0].mxu0 %v2482
  %v2552 = vpop.f32.mrb[0].mxu0
  %v2553 = vadd.f32 %v1717, %v2552
  %v2554 = vpop.f32.mrb[0].mxu0
  %v2555 = vpop.f32.mrb[0].mxu0
  %v2556 = vadd.f32 %v1718, %v2555
  %v2557 = vpop.f32.mrb[0].mxu0
  %2558 = vmatprep.mubr.bf16.mxu0 0
  %2559 = vmatmul.mubr.bf16.gmra.mrb[0].mxu0 %v2485
  %v2560 = vpop.f32.mrb[0].mxu0
  %v2561 = vadd.f32 %v1719, %v2560
  %v2562 = vpop.f32.mrb[0].mxu0
  %v2563 = vpop.f32.mrb[0].mxu0
  %v2564 = vadd.f32 %v1720, %v2563
  %v2565 = vpop.f32.mrb[0].mxu0
  %2566 = vmatprep.mubr.bf16.mxu0 0
  %2567 = vmatmul.mubr.bf16.gmra.mrb[0].mxu0 %v2488
  %v2568 = vpop.f32.mrb[0].mxu0
  %v2569 = vadd.f32 %v1721, %v2568
  %v2570 = vpop.f32.mrb[0].mxu0
  %v2571 = vpop.f32.mrb[0].mxu0
  %v2572 = vadd.f32 %v1722, %v2571
  %v2573 = vpop.f32.mrb[0].mxu0
  %2574 = vmatprep.mubr.bf16.mxu0 0
  %2575 = vmatmul.mubr.bf16.gmra.mrb[0].mxu0 %v2491
  %v2576 = vpop.f32.mrb[0].mxu0
  %v2577 = vadd.f32 %v1723, %v2576
  %v2578 = vpop.f32.mrb[0].mxu0
  %v2579 = vpop.f32.mrb[0].mxu0
  %v2580 = vadd.f32 %v1724, %v2579
  %v2581 = vpop.f32.mrb[0].mxu0
  %2582 = vmatprep.mubr.bf16.mxu0 0
  %2583 = vmatmul.mubr.bf16.gmra.mrb[0].mxu0 %v2494
  %v2584 = vpop.f32.mrb[0].mxu0
  %v2585 = vadd.f32 %v1725, %v2584
  %v2586 = vpop.f32.mrb[0].mxu0
  %v2587 = vpop.f32.mrb[0].mxu0
  %v2588 = vadd.f32 %v1726, %v2587
  %v2589 = vpop.f32.mrb[0].mxu0
  %2590 = vmatprep.mubr.bf16.mxu0 0
  %2591 = vmatmul.mubr.bf16.gmra.mrb[0].mxu0 %v2497
  %v2592 = vpop.f32.mrb[0].mxu0
  %v2593 = vadd.f32 %v1727, %v2592
  %v2594 = vpop.f32.mrb[0].mxu0
  %v2595 = vpop.f32.mrb[0].mxu0
  %v2596 = vadd.f32 %v1728, %v2595
  %v2597 = vpop.f32.mrb[0].mxu0
  %2598 = vdwg.mxu0
  %v2600 = vsel %vm1729, %v1689, 0
  %v2603 = vsel %vm1729, %v1690, 0
  %v2606 = vsel %vm1729, %v1691, 0
  %v2609 = vsel %vm1729, %v1692, 0
  %v2612 = vsel %vm1729, %v1693, 0
  %v2615 = vsel %vm1729, %v1694, 0
  %v2618 = vsel %vm1729, %v1695, 0
  %v2621 = vsel %vm1729, %v1696, 0
  %v2624 = vsel %vm1754, %v1704, 0
  %2626 = vmatprep.subr.bf16.mxu0 0
  %2627 = vmatpush1.bf16.msra.mxu0 %v2624
  %2628 = vmatprep.subr.bf16.mxu0 0
  %2629 = vmatpush1.bf16.msra.mxu0 0
  %2630 = vmatprep.subr.bf16.mxu0 0
  %2631 = vmatpush1.bf16.msra.mxu0 0
  %2632 = vmatprep.subr.bf16.mxu0 0
  %2633 = vmatpush1.bf16.msra.mxu0 0
  %2634 = vmatprep.subr.bf16.mxu0 0
  %2635 = vmatpush1.bf16.msra.mxu0 0
  %2636 = vmatprep.subr.bf16.mxu0 0
  %2637 = vmatpush1.bf16.msra.mxu0 0
  %2638 = vmatprep.subr.bf16.mxu0 0
  %2639 = vmatpush1.bf16.msra.mxu0 0
  %2640 = vmatprep.subr.bf16.mxu0 0
  %2641 = vmatpush1.bf16.msra.mxu0 0
  %2642 = vmatprep.subr.bf16.mxu0 0
  %2643 = vmatpush1.bf16.msra.mxu0 0
  %2644 = vmatprep.subr.bf16.mxu0 0
  %2645 = vmatpush1.bf16.msra.mxu0 0
  %2646 = vmatprep.subr.bf16.mxu0 0
  %2647 = vmatpush1.bf16.msra.mxu0 0
  %2648 = vmatprep.subr.bf16.mxu0 0
  %2649 = vmatpush1.bf16.msra.mxu0 0
  %2650 = vmatprep.subr.bf16.mxu0 0
  %2651 = vmatpush1.bf16.msra.mxu0 0
  %2652 = vmatprep.subr.bf16.mxu0 0
  %2653 = vmatpush1.bf16.msra.mxu0 0
  %2654 = vmatprep.subr.bf16.mxu0 0
  %2655 = vmatpush1.bf16.msra.mxu0 0
  %2656 = vmatprep.subr.bf16.mxu0 0
  %2657 = vmatpush1.bf16.msra.mxu0 0
  %2658 = vmatprep.mubr.bf16.mxu0 0
  %2659 = vmatmul.mubr.bf16.gmra.mrb[0].mxu0 %v2600
  %v2660 = vpop.f32.mrb[0].mxu0
  %v2661 = vadd.f32 %v1713, %v2660
  %v2662 = vpop.f32.mrb[0].mxu0
  %v2663 = vpop.f32.mrb[0].mxu0
  %v2664 = vadd.f32 %v1714, %v2663
  %v2665 = vpop.f32.mrb[0].mxu0
  %2666 = vmatprep.mubr.bf16.mxu0 0
  %2667 = vmatmul.mubr.bf16.gmra.mrb[0].mxu0 %v2603
  %v2668 = vpop.f32.mrb[0].mxu0
  %v2669 = vadd.f32 %v1715, %v2668
  %v2670 = vpop.f32.mrb[0].mxu0
  %v2671 = vpop.f32.mrb[0].mxu0
  %v2672 = vadd.f32 %v1716, %v2671
  %v2673 = vpop.f32.mrb[0].mxu0
  %2674 = vmatprep.mubr.bf16.mxu0 0
  %2675 = vmatmul.mubr.bf16.gmra.mrb[0].mxu0 %v2606
  %v2676 = vpop.f32.mrb[0].mxu0
  %v2677 = vadd.f32 %v1717, %v2676
  %v2678 = vpop.f32.mrb[0].mxu0
  %v2679 = vpop.f32.mrb[0].mxu0
  %v2680 = vadd.f32 %v1718, %v2679
  %v2681 = vpop.f32.mrb[0].mxu0
  %2682 = vmatprep.mubr.bf16.mxu0 0
  %2683 = vmatmul.mubr.bf16.gmra.mrb[0].mxu0 %v2609
  %v2684 = vpop.f32.mrb[0].mxu0
  %v2685 = vadd.f32 %v1719, %v2684
  %v2686 = vpop.f32.mrb[0].mxu0
  %v2687 = vpop.f32.mrb[0].mxu0
  %v2688 = vadd.f32 %v1720, %v2687
  %v2689 = vpop.f32.mrb[0].mxu0
  %2690 = vmatprep.mubr.bf16.mxu0 0
  %2691 = vmatmul.mubr.bf16.gmra.mrb[0].mxu0 %v2612
  %v2692 = vpop.f32.mrb[0].mxu0
  %v2693 = vadd.f32 %v1721, %v2692
  %v2694 = vpop.f32.mrb[0].mxu0
  %v2695 = vpop.f32.mrb[0].mxu0
  %v2696 = vadd.f32 %v1722, %v2695
  %v2697 = vpop.f32.mrb[0].mxu0
  %2698 = vmatprep.mubr.bf16.mxu0 0
  %2699 = vmatmul.mubr.bf16.gmra.mrb[0].mxu0 %v2615
  %v2700 = vpop.f32.mrb[0].mxu0
  %v2701 = vadd.f32 %v1723, %v2700
  %v2702 = vpop.f32.mrb[0].mxu0
  %v2703 = vpop.f32.mrb[0].mxu0
  %v2704 = vadd.f32 %v1724, %v2703
  %v2705 = vpop.f32.mrb[0].mxu0
  %2706 = vmatprep.mubr.bf16.mxu0 0
  %2707 = vmatmul.mubr.bf16.gmra.mrb[0].mxu0 %v2618
  %v2708 = vpop.f32.mrb[0].mxu0
  %v2709 = vadd.f32 %v1725, %v2708
  %v2710 = vpop.f32.mrb[0].mxu0
  %v2711 = vpop.f32.mrb[0].mxu0
  %v2712 = vadd.f32 %v1726, %v2711
  %v2713 = vpop.f32.mrb[0].mxu0
  %2714 = vmatprep.mubr.bf16.mxu0 0
  %2715 = vmatmul.mubr.bf16.gmra.mrb[0].mxu0 %v2621
  %v2716 = vpop.f32.mrb[0].mxu0
  %v2717 = vadd.f32 %v1727, %v2716
  %v2718 = vpop.f32.mrb[0].mxu0
  %v2719 = vpop.f32.mrb[0].mxu0
  %v2720 = vadd.f32 %v1728, %v2719
  %v2721 = vpop.f32.mrb[0].mxu0
  %2722 = vdwg.mxu0
  %2723 = vmax.xlane.f32.xlu0 %v1793
  %v2724 = vpop.xlane.xlu0 %2723
  %2725 = vmax.xlane.f32.xlu0 %v1796
  %v2726 = vpop.xlane.xlu0 %2725
  %2727 = vmax.xlane.f32.xlu0 %v1801
  %v2728 = vpop.xlane.xlu0 %2727
  %2729 = vmax.xlane.f32.xlu0 %v1804
  %v2730 = vpop.xlane.xlu0 %2729
  %2731 = vmax.xlane.f32.xlu0 %v1809
  %v2732 = vpop.xlane.xlu0 %2731
  %2733 = vmax.xlane.f32.xlu0 %v1812
  %v2734 = vpop.xlane.xlu0 %2733
  %2735 = vmax.xlane.f32.xlu0 %v1817
  %v2736 = vpop.xlane.xlu0 %2735
  %2737 = vmax.xlane.f32.xlu0 %v1820
  %v2738 = vpop.xlane.xlu0 %2737
  %2739 = vmax.xlane.f32.xlu0 %v1825
  %v2740 = vpop.xlane.xlu0 %2739
  %2741 = vmax.xlane.f32.xlu0 %v1828
  %v2742 = vpop.xlane.xlu0 %2741
  %2743 = vmax.xlane.f32.xlu0 %v1833
  %v2744 = vpop.xlane.xlu0 %2743
  %2745 = vmax.xlane.f32.xlu0 %v1836
  %v2746 = vpop.xlane.xlu0 %2745
  %2747 = vmax.xlane.f32.xlu0 %v1841
  %v2748 = vpop.xlane.xlu0 %2747
  %2749 = vmax.xlane.f32.xlu0 %v1844
  %v2750 = vpop.xlane.xlu0 %2749
  %2751 = vmax.xlane.f32.xlu0 %v1849
  %v2752 = vpop.xlane.xlu0 %2751
  %2753 = vmax.xlane.f32.xlu0 %v1852
  %v2754 = vpop.xlane.xlu0 %2753
  %2755 = vmax.xlane.f32.xlu0 %v1917
  %v2756 = vpop.xlane.xlu0 %2755
  %2757 = vmax.xlane.f32.xlu0 %v1920
  %v2758 = vpop.xlane.xlu0 %2757
  %2759 = vmax.xlane.f32.xlu0 %v1925
  %v2760 = vpop.xlane.xlu0 %2759
  %2761 = vmax.xlane.f32.xlu0 %v1928
  %v2762 = vpop.xlane.xlu0 %2761
  %2763 = vmax.xlane.f32.xlu0 %v1933
  %v2764 = vpop.xlane.xlu0 %2763
  %2765 = vmax.xlane.f32.xlu0 %v1936
  %v2766 = vpop.xlane.xlu0 %2765
  %2767 = vmax.xlane.f32.xlu0 %v1941
  %v2768 = vpop.xlane.xlu0 %2767
  %2769 = vmax.xlane.f32.xlu0 %v1944
  %v2770 = vpop.xlane.xlu0 %2769
  %2771 = vmax.xlane.f32.xlu0 %v1949
  %v2772 = vpop.xlane.xlu0 %2771
  %2773 = vmax.xlane.f32.xlu0 %v1952
  %v2774 = vpop.xlane.xlu0 %2773
  %2775 = vmax.xlane.f32.xlu0 %v1957
  %v2776 = vpop.xlane.xlu0 %2775
  %2777 = vmax.xlane.f32.xlu0 %v1960
  %v2778 = vpop.xlane.xlu0 %2777
  %2779 = vmax.xlane.f32.xlu0 %v1965
  %v2780 = vpop.xlane.xlu0 %2779
  %2781 = vmax.xlane.f32.xlu0 %v1968
  %v2782 = vpop.xlane.xlu0 %2781
  %2783 = vmax.xlane.f32.xlu0 %v1973
  %v2784 = vpop.xlane.xlu0 %2783
  %2785 = vmax.xlane.f32.xlu0 %v1976
  %v2786 = vpop.xlane.xlu0 %2785
  %2787 = vmax.xlane.f32.xlu0 %v2041
  %v2788 = vpop.xlane.xlu0 %2787
  %2789 = vmax.xlane.f32.xlu0 %v2044
  %v2790 = vpop.xlane.xlu0 %2789
  %2791 = vmax.xlane.f32.xlu0 %v2049
  %v2792 = vpop.xlane.xlu0 %2791
  %2793 = vmax.xlane.f32.xlu0 %v2052
  %v2794 = vpop.xlane.xlu0 %2793
  %2795 = vmax.xlane.f32.xlu0 %v2057
  %v2796 = vpop.xlane.xlu0 %2795
  %2797 = vmax.xlane.f32.xlu0 %v2060
  %v2798 = vpop.xlane.xlu0 %2797
  %2799 = vmax.xlane.f32.xlu0 %v2065
  %v2800 = vpop.xlane.xlu0 %2799
  %2801 = vmax.xlane.f32.xlu0 %v2068
  %v2802 = vpop.xlane.xlu0 %2801
  %2803 = vmax.xlane.f32.xlu0 %v2073
  %v2804 = vpop.xlane.xlu0 %2803
  %2805 = vmax.xlane.f32.xlu0 %v2076
  %v2806 = vpop.xlane.xlu0 %2805
  %2807 = vmax.xlane.f32.xlu0 %v2081
  %v2808 = vpop.xlane.xlu0 %2807
  %2809 = vmax.xlane.f32.xlu0 %v2084
  %v2810 = vpop.xlane.xlu0 %2809
  %2811 = vmax.xlane.f32.xlu0 %v2089
  %v2812 = vpop.xlane.xlu0 %2811
  %2813 = vmax.xlane.f32.xlu0 %v2092
  %v2814 = vpop.xlane.xlu0 %2813
  %2815 = vmax.xlane.f32.xlu0 %v2097
  %v2816 = vpop.xlane.xlu0 %2815
  %2817 = vmax.xlane.f32.xlu0 %v2100
  %v2818 = vpop.xlane.xlu0 %2817
  %2819 = vmax.xlane.f32.xlu0 %v2165
  %v2820 = vpop.xlane.xlu0 %2819
  %2821 = vmax.xlane.f32.xlu0 %v2168
  %v2822 = vpop.xlane.xlu0 %2821
  %2823 = vmax.xlane.f32.xlu0 %v2173
  %v2824 = vpop.xlane.xlu0 %2823
  %2825 = vmax.xlane.f32.xlu0 %v2176
  %v2826 = vpop.xlane.xlu0 %2825
  %2827 = vmax.xlane.f32.xlu0 %v2181
  %v2828 = vpop.xlane.xlu0 %2827
  %2829 = vmax.xlane.f32.xlu0 %v2184
  %v2830 = vpop.xlane.xlu0 %2829
  %2831 = vmax.xlane.f32.xlu0 %v2189
  %v2832 = vpop.xlane.xlu0 %2831
  %2833 = vmax.xlane.f32.xlu0 %v2192
  %v2834 = vpop.xlane.xlu0 %2833
  %2835 = vmax.xlane.f32.xlu0 %v2197
  %v2836 = vpop.xlane.xlu0 %2835
  %2837 = vmax.xlane.f32.xlu0 %v2200
  %v2838 = vpop.xlane.xlu0 %2837
  %2839 = vmax.xlane.f32.xlu0 %v2205
  %v2840 = vpop.xlane.xlu0 %2839
  %2841 = vmax.xlane.f32.xlu0 %v2208
  %v2842 = vpop.xlane.xlu0 %2841
  %2843 = vmax.xlane.f32.xlu0 %v2213
  %v2844 = vpop.xlane.xlu0 %2843
  %2845 = vmax.xlane.f32.xlu0 %v2216
  %v2846 = vpop.xlane.xlu0 %2845
  %2847 = vmax.xlane.f32.xlu0 %v2221
  %v2848 = vpop.xlane.xlu0 %2847
  %2849 = vmax.xlane.f32.xlu0 %v2224
  %v2850 = vpop.xlane.xlu0 %2849
  %2851 = vmax.xlane.f32.xlu0 %v2289
  %v2852 = vpop.xlane.xlu0 %2851
  %2853 = vmax.xlane.f32.xlu0 %v2292
  %v2854 = vpop.xlane.xlu0 %2853
  %2855 = vmax.xlane.f32.xlu0 %v2297
  %v2856 = vpop.xlane.xlu0 %2855
  %2857 = vmax.xlane.f32.xlu0 %v2300
  %v2858 = vpop.xlane.xlu0 %2857
  %2859 = vmax.xlane.f32.xlu0 %v2305
  %v2860 = vpop.xlane.xlu0 %2859
  %2861 = vmax.xlane.f32.xlu0 %v2308
  %v2862 = vpop.xlane.xlu0 %2861
  %2863 = vmax.xlane.f32.xlu0 %v2313
  %v2864 = vpop.xlane.xlu0 %2863
  %2865 = vmax.xlane.f32.xlu0 %v2316
  %v2866 = vpop.xlane.xlu0 %2865
  %2867 = vmax.xlane.f32.xlu0 %v2321
  %v2868 = vpop.xlane.xlu0 %2867
  %2869 = vmax.xlane.f32.xlu0 %v2324
  %v2870 = vpop.xlane.xlu0 %2869
  %2871 = vmax.xlane.f32.xlu0 %v2329
  %v2872 = vpop.xlane.xlu0 %2871
  %2873 = vmax.xlane.f32.xlu0 %v2332
  %v2874 = vpop.xlane.xlu0 %2873
  %2875 = vmax.xlane.f32.xlu0 %v2337
  %v2876 = vpop.xlane.xlu0 %2875
  %2877 = vmax.xlane.f32.xlu0 %v2340
  %v2878 = vpop.xlane.xlu0 %2877
  %2879 = vmax.xlane.f32.xlu0 %v2345
  %v2880 = vpop.xlane.xlu0 %2879
  %2881 = vmax.xlane.f32.xlu0 %v2348
  %v2882 = vpop.xlane.xlu0 %2881
  %2883 = vmax.xlane.f32.xlu0 %v2413
  %v2884 = vpop.xlane.xlu0 %2883
  %2885 = vmax.xlane.f32.xlu0 %v2416
  %v2886 = vpop.xlane.xlu0 %2885
  %2887 = vmax.xlane.f32.xlu0 %v2421
  %v2888 = vpop.xlane.xlu0 %2887
  %2889 = vmax.xlane.f32.xlu0 %v2424
  %v2890 = vpop.xlane.xlu0 %2889
  %2891 = vmax.xlane.f32.xlu0 %v2429
  %v2892 = vpop.xlane.xlu0 %2891
  %2893 = vmax.xlane.f32.xlu0 %v2432
  %v2894 = vpop.xlane.xlu0 %2893
  %2895 = vmax.xlane.f32.xlu0 %v2437
  %v2896 = vpop.xlane.xlu0 %2895
  %2897 = vmax.xlane.f32.xlu0 %v2440
  %v2898 = vpop.xlane.xlu0 %2897
  %2899 = vmax.xlane.f32.xlu0 %v2445
  %v2900 = vpop.xlane.xlu0 %2899
  %2901 = vmax.xlane.f32.xlu0 %v2448
  %v2902 = vpop.xlane.xlu0 %2901
  %2903 = vmax.xlane.f32.xlu0 %v2453
  %v2904 = vpop.xlane.xlu0 %2903
  %2905 = vmax.xlane.f32.xlu0 %v2456
  %v2906 = vpop.xlane.xlu0 %2905
  %2907 = vmax.xlane.f32.xlu0 %v2461
  %v2908 = vpop.xlane.xlu0 %2907
  %2909 = vmax.xlane.f32.xlu0 %v2464
  %v2910 = vpop.xlane.xlu0 %2909
  %2911 = vmax.xlane.f32.xlu0 %v2469
  %v2912 = vpop.xlane.xlu0 %2911
  %2913 = vmax.xlane.f32.xlu0 %v2472
  %v2914 = vpop.xlane.xlu0 %2913
  %2915 = vmax.xlane.f32.xlu0 %v2537
  %v2916 = vpop.xlane.xlu0 %2915
  %2917 = vmax.xlane.f32.xlu0 %v2540
  %v2918 = vpop.xlane.xlu0 %2917
  %2919 = vmax.xlane.f32.xlu0 %v2545
  %v2920 = vpop.xlane.xlu0 %2919
  %2921 = vmax.xlane.f32.xlu0 %v2548
  %v2922 = vpop.xlane.xlu0 %2921
  %2923 = vmax.xlane.f32.xlu0 %v2553
  %v2924 = vpop.xlane.xlu0 %2923
  %2925 = vmax.xlane.f32.xlu0 %v2556
  %v2926 = vpop.xlane.xlu0 %2925
  %2927 = vmax.xlane.f32.xlu0 %v2561
  %v2928 = vpop.xlane.xlu0 %2927
  %2929 = vmax.xlane.f32.xlu0 %v2564
  %v2930 = vpop.xlane.xlu0 %2929
  %2931 = vmax.xlane.f32.xlu0 %v2569
  %v2932 = vpop.xlane.xlu0 %2931
  %2933 = vmax.xlane.f32.xlu0 %v2572
  %v2934 = vpop.xlane.xlu0 %2933
  %2935 = vmax.xlane.f32.xlu0 %v2577
  %v2936 = vpop.xlane.xlu0 %2935
  %2937 = vmax.xlane.f32.xlu0 %v2580
  %v2938 = vpop.xlane.xlu0 %2937
  %2939 = vmax.xlane.f32.xlu0 %v2585
  %v2940 = vpop.xlane.xlu0 %2939
  %2941 = vmax.xlane.f32.xlu0 %v2588
  %v2942 = vpop.xlane.xlu0 %2941
  %2943 = vmax.xlane.f32.xlu0 %v2593
  %v2944 = vpop.xlane.xlu0 %2943
  %2945 = vmax.xlane.f32.xlu0 %v2596
  %v2946 = vpop.xlane.xlu0 %2945
  %2947 = vmax.xlane.f32.xlu0 %v2661
  %v2948 = vpop.xlane.xlu0 %2947
  %2949 = vmax.xlane.f32.xlu0 %v2664
  %v2950 = vpop.xlane.xlu0 %2949
  %2951 = vmax.xlane.f32.xlu0 %v2669
  %v2952 = vpop.xlane.xlu0 %2951
  %2953 = vmax.xlane.f32.xlu0 %v2672
  %v2954 = vpop.xlane.xlu0 %2953
  %2955 = vmax.xlane.f32.xlu0 %v2677
  %v2956 = vpop.xlane.xlu0 %2955
  %2957 = vmax.xlane.f32.xlu0 %v2680
  %v2958 = vpop.xlane.xlu0 %2957
  %2959 = vmax.xlane.f32.xlu0 %v2685
  %v2960 = vpop.xlane.xlu0 %2959
  %2961 = vmax.xlane.f32.xlu0 %v2688
  %v2962 = vpop.xlane.xlu0 %2961
  %2963 = vmax.xlane.f32.xlu0 %v2693
  %v2964 = vpop.xlane.xlu0 %2963
  %2965 = vmax.xlane.f32.xlu0 %v2696
  %v2966 = vpop.xlane.xlu0 %2965
  %2967 = vmax.xlane.f32.xlu0 %v2701
  %v2968 = vpop.xlane.xlu0 %2967
  %2969 = vmax.xlane.f32.xlu0 %v2704
  %v2970 = vpop.xlane.xlu0 %2969
  %2971 = vmax.xlane.f32.xlu0 %v2709
  %v2972 = vpop.xlane.xlu0 %2971
  %2973 = vmax.xlane.f32.xlu0 %v2712
  %v2974 = vpop.xlane.xlu0 %2973
  %2975 = vmax.xlane.f32.xlu0 %v2717
  %v2976 = vpop.xlane.xlu0 %2975
  %2977 = vmax.xlane.f32.xlu0 %v2720
  %v2978 = vpop.xlane.xlu0 %2977
  %v2979 = vsub.f32 %v1793, %v2724
  %v2980 = vsub.f32 %v1796, %v2726
  %v2981 = vsub.f32 %v1801, %v2728
  %v2982 = vsub.f32 %v1804, %v2730
  %v2983 = vsub.f32 %v1809, %v2732
  %v2984 = vsub.f32 %v1812, %v2734
  %v2985 = vsub.f32 %v1817, %v2736
  %v2986 = vsub.f32 %v1820, %v2738
  %v2987 = vsub.f32 %v1825, %v2740
  %v2988 = vsub.f32 %v1828, %v2742
  %v2989 = vsub.f32 %v1833, %v2744
  %v2990 = vsub.f32 %v1836, %v2746
  %v2991 = vsub.f32 %v1841, %v2748
  %v2992 = vsub.f32 %v1844, %v2750
  %v2993 = vsub.f32 %v1849, %v2752
  %v2994 = vsub.f32 %v1852, %v2754
  %v2995 = vsub.f32 %v1917, %v2756
  %v2996 = vsub.f32 %v1920, %v2758
  %v2997 = vsub.f32 %v1925, %v2760
  %v2998 = vsub.f32 %v1928, %v2762
  %v2999 = vsub.f32 %v1933, %v2764
  %v3000 = vsub.f32 %v1936, %v2766
  %v3001 = vsub.f32 %v1941, %v2768
  %v3002 = vsub.f32 %v1944, %v2770
  %v3003 = vsub.f32 %v1949, %v2772
  %v3004 = vsub.f32 %v1952, %v2774
  %v3005 = vsub.f32 %v1957, %v2776
  %v3006 = vsub.f32 %v1960, %v2778
  %v3007 = vsub.f32 %v1965, %v2780
  %v3008 = vsub.f32 %v1968, %v2782
  %v3009 = vsub.f32 %v1973, %v2784
  %v3010 = vsub.f32 %v1976, %v2786
  %v3011 = vsub.f32 %v2041, %v2788
  %v3012 = vsub.f32 %v2044, %v2790
  %v3013 = vsub.f32 %v2049, %v2792
  %v3014 = vsub.f32 %v2052, %v2794
  %v3015 = vsub.f32 %v2057, %v2796
  %v3016 = vsub.f32 %v2060, %v2798
  %v3017 = vsub.f32 %v2065, %v2800
  %v3018 = vsub.f32 %v2068, %v2802
  %v3019 = vsub.f32 %v2073, %v2804
  %v3020 = vsub.f32 %v2076, %v2806
  %v3021 = vsub.f32 %v2081, %v2808
  %v3022 = vsub.f32 %v2084, %v2810
  %v3023 = vsub.f32 %v2089, %v2812
  %v3024 = vsub.f32 %v2092, %v2814
  %v3025 = vsub.f32 %v2097, %v2816
  %v3026 = vsub.f32 %v2100, %v2818
  %v3027 = vsub.f32 %v2165, %v2820
  %v3028 = vsub.f32 %v2168, %v2822
  %v3029 = vsub.f32 %v2173, %v2824
  %v3030 = vsub.f32 %v2176, %v2826
  %v3031 = vsub.f32 %v2181, %v2828
  %v3032 = vsub.f32 %v2184, %v2830
  %v3033 = vsub.f32 %v2189, %v2832
  %v3034 = vsub.f32 %v2192, %v2834
  %v3035 = vsub.f32 %v2197, %v2836
  %v3036 = vsub.f32 %v2200, %v2838
  %v3037 = vsub.f32 %v2205, %v2840
  %v3038 = vsub.f32 %v2208, %v2842
  %v3039 = vsub.f32 %v2213, %v2844
  %v3040 = vsub.f32 %v2216, %v2846
  %v3041 = vsub.f32 %v2221, %v2848
  %v3042 = vsub.f32 %v2224, %v2850
  %v3043 = vsub.f32 %v2289, %v2852
  %v3044 = vsub.f32 %v2292, %v2854
  %v3045 = vsub.f32 %v2297, %v2856
  %v3046 = vsub.f32 %v2300, %v2858
  %v3047 = vsub.f32 %v2305, %v2860
  %v3048 = vsub.f32 %v2308, %v2862
  %v3049 = vsub.f32 %v2313, %v2864
  %v3050 = vsub.f32 %v2316, %v2866
  %v3051 = vsub.f32 %v2321, %v2868
  %v3052 = vsub.f32 %v2324, %v2870
  %v3053 = vsub.f32 %v2329, %v2872
  %v3054 = vsub.f32 %v2332, %v2874
  %v3055 = vsub.f32 %v2337, %v2876
  %v3056 = vsub.f32 %v2340, %v2878
  %v3057 = vsub.f32 %v2345, %v2880
  %v3058 = vsub.f32 %v2348, %v2882
  %v3059 = vsub.f32 %v2413, %v2884
  %v3060 = vsub.f32 %v2416, %v2886
  %v3061 = vsub.f32 %v2421, %v2888
  %v3062 = vsub.f32 %v2424, %v2890
  %v3063 = vsub.f32 %v2429, %v2892
  %v3064 = vsub.f32 %v2432, %v2894
  %v3065 = vsub.f32 %v2437, %v2896
  %v3066 = vsub.f32 %v2440, %v2898
  %v3067 = vsub.f32 %v2445, %v2900
  %v3068 = vsub.f32 %v2448, %v2902
  %v3069 = vsub.f32 %v2453, %v2904
  %v3070 = vsub.f32 %v2456, %v2906
  %v3071 = vsub.f32 %v2461, %v2908
  %v3072 = vsub.f32 %v2464, %v2910
  %v3073 = vsub.f32 %v2469, %v2912
  %v3074 = vsub.f32 %v2472, %v2914
  %v3075 = vsub.f32 %v2537, %v2916
  %v3076 = vsub.f32 %v2540, %v2918
  %v3077 = vsub.f32 %v2545, %v2920
  %v3078 = vsub.f32 %v2548, %v2922
  %v3079 = vsub.f32 %v2553, %v2924
  %v3080 = vsub.f32 %v2556, %v2926
  %v3081 = vsub.f32 %v2561, %v2928
  %v3082 = vsub.f32 %v2564, %v2930
  %v3083 = vsub.f32 %v2569, %v2932
  %v3084 = vsub.f32 %v2572, %v2934
  %v3085 = vsub.f32 %v2577, %v2936
  %v3086 = vsub.f32 %v2580, %v2938
  %v3087 = vsub.f32 %v2585, %v2940
  %v3088 = vsub.f32 %v2588, %v2942
  %v3089 = vsub.f32 %v2593, %v2944
  %v3090 = vsub.f32 %v2596, %v2946
  %v3091 = vsub.f32 %v2661, %v2948
  %v3092 = vsub.f32 %v2664, %v2950
  %v3093 = vsub.f32 %v2669, %v2952
  %v3094 = vsub.f32 %v2672, %v2954
  %v3095 = vsub.f32 %v2677, %v2956
  %v3096 = vsub.f32 %v2680, %v2958
  %v3097 = vsub.f32 %v2685, %v2960
  %v3098 = vsub.f32 %v2688, %v2962
  %v3099 = vsub.f32 %v2693, %v2964
  %v3100 = vsub.f32 %v2696, %v2966
  %v3101 = vsub.f32 %v2701, %v2968
  %v3102 = vsub.f32 %v2704, %v2970
  %v3103 = vsub.f32 %v2709, %v2972
  %v3104 = vsub.f32 %v2712, %v2974
  %v3105 = vsub.f32 %v2717, %v2976
  %v3106 = vsub.f32 %v2720, %v2978
  %v3107 = vmul.f32 %v2979, 1.442695
  %v3108 = vpow.pop %v3107
  %v3109 = vmul.f32 %v2980, 1.442695
  %v3110 = vpow.pop %v3109
  %v3111 = vmul.f32 %v2981, 1.442695
  %v3112 = vpow.pop %v3111
  %v3113 = vmul.f32 %v2982, 1.442695
  %v3114 = vpow.pop %v3113
  %v3115 = vmul.f32 %v2983, 1.442695
  %v3116 = vpow.pop %v3115
  %v3117 = vmul.f32 %v2984, 1.442695
  %v3118 = vpow.pop %v3117
  %v3119 = vmul.f32 %v2985, 1.442695
  %v3120 = vpow.pop %v3119
  %v3121 = vmul.f32 %v2986, 1.442695
  %v3122 = vpow.pop %v3121
  %v3123 = vmul.f32 %v2987, 1.442695
  %v3124 = vpow.pop %v3123
  %v3125 = vmul.f32 %v2988, 1.442695
  %v3126 = vpow.pop %v3125
  %v3127 = vmul.f32 %v2989, 1.442695
  %v3128 = vpow.pop %v3127
  %v3129 = vmul.f32 %v2990, 1.442695
  %v3130 = vpow.pop %v3129
  %v3131 = vmul.f32 %v2991, 1.442695
  %v3132 = vpow.pop %v3131
  %v3133 = vmul.f32 %v2992, 1.442695
  %v3134 = vpow.pop %v3133
  %v3135 = vmul.f32 %v2993, 1.442695
  %v3136 = vpow.pop %v3135
  %v3137 = vmul.f32 %v2994, 1.442695
  %v3138 = vpow.pop %v3137
  %v3139 = vmul.f32 %v2995, 1.442695
  %v3140 = vpow.pop %v3139
  %v3141 = vmul.f32 %v2996, 1.442695
  %v3142 = vpow.pop %v3141
  %v3143 = vmul.f32 %v2997, 1.442695
  %v3144 = vpow.pop %v3143
  %v3145 = vmul.f32 %v2998, 1.442695
  %v3146 = vpow.pop %v3145
  %v3147 = vmul.f32 %v2999, 1.442695
  %v3148 = vpow.pop %v3147
  %v3149 = vmul.f32 %v3000, 1.442695
  %v3150 = vpow.pop %v3149
  %v3151 = vmul.f32 %v3001, 1.442695
  %v3152 = vpow.pop %v3151
  %v3153 = vmul.f32 %v3002, 1.442695
  %v3154 = vpow.pop %v3153
  %v3155 = vmul.f32 %v3003, 1.442695
  %v3156 = vpow.pop %v3155
  %v3157 = vmul.f32 %v3004, 1.442695
  %v3158 = vpow.pop %v3157
  %v3159 = vmul.f32 %v3005, 1.442695
  %v3160 = vpow.pop %v3159
  %v3161 = vmul.f32 %v3006, 1.442695
  %v3162 = vpow.pop %v3161
  %v3163 = vmul.f32 %v3007, 1.442695
  %v3164 = vpow.pop %v3163
  %v3165 = vmul.f32 %v3008, 1.442695
  %v3166 = vpow.pop %v3165
  %v3167 = vmul.f32 %v3009, 1.442695
  %v3168 = vpow.pop %v3167
  %v3169 = vmul.f32 %v3010, 1.442695
  %v3170 = vpow.pop %v3169
  %v3171 = vmul.f32 %v3011, 1.442695
  %v3172 = vpow.pop %v3171
  %v3173 = vmul.f32 %v3012, 1.442695
  %v3174 = vpow.pop %v3173
  %v3175 = vmul.f32 %v3013, 1.442695
  %v3176 = vpow.pop %v3175
  %v3177 = vmul.f32 %v3014, 1.442695
  %v3178 = vpow.pop %v3177
  %v3179 = vmul.f32 %v3015, 1.442695
  %v3180 = vpow.pop %v3179
  %v3181 = vmul.f32 %v3016, 1.442695
  %v3182 = vpow.pop %v3181
  %v3183 = vmul.f32 %v3017, 1.442695
  %v3184 = vpow.pop %v3183
  %v3185 = vmul.f32 %v3018, 1.442695
  %v3186 = vpow.pop %v3185
  %v3187 = vmul.f32 %v3019, 1.442695
  %v3188 = vpow.pop %v3187
  %v3189 = vmul.f32 %v3020, 1.442695
  %v3190 = vpow.pop %v3189
  %v3191 = vmul.f32 %v3021, 1.442695
  %v3192 = vpow.pop %v3191
  %v3193 = vmul.f32 %v3022, 1.442695
  %v3194 = vpow.pop %v3193
  %v3195 = vmul.f32 %v3023, 1.442695
  %v3196 = vpow.pop %v3195
  %v3197 = vmul.f32 %v3024, 1.442695
  %v3198 = vpow.pop %v3197
  %v3199 = vmul.f32 %v3025, 1.442695
  %v3200 = vpow.pop %v3199
  %v3201 = vmul.f32 %v3026, 1.442695
  %v3202 = vpow.pop %v3201
  %v3203 = vmul.f32 %v3027, 1.442695
  %v3204 = vpow.pop %v3203
  %v3205 = vmul.f32 %v3028, 1.442695
  %v3206 = vpow.pop %v3205
  %v3207 = vmul.f32 %v3029, 1.442695
  %v3208 = vpow.pop %v3207
  %v3209 = vmul.f32 %v3030, 1.442695
  %v3210 = vpow.pop %v3209
  %v3211 = vmul.f32 %v3031, 1.442695
  %v3212 = vpow.pop %v3211
  %v3213 = vmul.f32 %v3032, 1.442695
  %v3214 = vpow.pop %v3213
  %v3215 = vmul.f32 %v3033, 1.442695
  %v3216 = vpow.pop %v3215
  %v3217 = vmul.f32 %v3034, 1.442695
  %v3218 = vpow.pop %v3217
  %v3219 = vmul.f32 %v3035, 1.442695
  %v3220 = vpow.pop %v3219
  %v3221 = vmul.f32 %v3036, 1.442695
  %v3222 = vpow.pop %v3221
  %v3223 = vmul.f32 %v3037, 1.442695
  %v3224 = vpow.pop %v3223
  %v3225 = vmul.f32 %v3038, 1.442695
  %v3226 = vpow.pop %v3225
  %v3227 = vmul.f32 %v3039, 1.442695
  %v3228 = vpow.pop %v3227
  %v3229 = vmul.f32 %v3040, 1.442695
  %v3230 = vpow.pop %v3229
  %v3231 = vmul.f32 %v3041, 1.442695
  %v3232 = vpow.pop %v3231
  %v3233 = vmul.f32 %v3042, 1.442695
  %v3234 = vpow.pop %v3233
  %v3235 = vmul.f32 %v3043, 1.442695
  %v3236 = vpow.pop %v3235
  %v3237 = vmul.f32 %v3044, 1.442695
  %v3238 = vpow.pop %v3237
  %v3239 = vmul.f32 %v3045, 1.442695
  %v3240 = vpow.pop %v3239
  %v3241 = vmul.f32 %v3046, 1.442695
  %v3242 = vpow.pop %v3241
  %v3243 = vmul.f32 %v3047, 1.442695
  %v3244 = vpow.pop %v3243
  %v3245 = vmul.f32 %v3048, 1.442695
  %v3246 = vpow.pop %v3245
  %v3247 = vmul.f32 %v3049, 1.442695
  %v3248 = vpow.pop %v3247
  %v3249 = vmul.f32 %v3050, 1.442695
  %v3250 = vpow.pop %v3249
  %v3251 = vmul.f32 %v3051, 1.442695
  %v3252 = vpow.pop %v3251
  %v3253 = vmul.f32 %v3052, 1.442695
  %v3254 = vpow.pop %v3253
  %v3255 = vmul.f32 %v3053, 1.442695
  %v3256 = vpow.pop %v3255
  %v3257 = vmul.f32 %v3054, 1.442695
  %v3258 = vpow.pop %v3257
  %v3259 = vmul.f32 %v3055, 1.442695
  %v3260 = vpow.pop %v3259
  %v3261 = vmul.f32 %v3056, 1.442695
  %v3262 = vpow.pop %v3261
  %v3263 = vmul.f32 %v3057, 1.442695
  %v3264 = vpow.pop %v3263
  %v3265 = vmul.f32 %v3058, 1.442695
  %v3266 = vpow.pop %v3265
  %v3267 = vmul.f32 %v3059, 1.442695
  %v3268 = vpow.pop %v3267
  %v3269 = vmul.f32 %v3060, 1.442695
  %v3270 = vpow.pop %v3269
  %v3271 = vmul.f32 %v3061, 1.442695
  %v3272 = vpow.pop %v3271
  %v3273 = vmul.f32 %v3062, 1.442695
  %v3274 = vpow.pop %v3273
  %v3275 = vmul.f32 %v3063, 1.442695
  %v3276 = vpow.pop %v3275
  %v3277 = vmul.f32 %v3064, 1.442695
  %v3278 = vpow.pop %v3277
  %v3279 = vmul.f32 %v3065, 1.442695
  %v3280 = vpow.pop %v3279
  %v3281 = vmul.f32 %v3066, 1.442695
  %v3282 = vpow.pop %v3281
  %v3283 = vmul.f32 %v3067, 1.442695
  %v3284 = vpow.pop %v3283
  %v3285 = vmul.f32 %v3068, 1.442695
  %v3286 = vpow.pop %v3285
  %v3287 = vmul.f32 %v3069, 1.442695
  %v3288 = vpow.pop %v3287
  %v3289 = vmul.f32 %v3070, 1.442695
  %v3290 = vpow.pop %v3289
  %v3291 = vmul.f32 %v3071, 1.442695
  %v3292 = vpow.pop %v3291
  %v3293 = vmul.f32 %v3072, 1.442695
  %v3294 = vpow.pop %v3293
  %v3295 = vmul.f32 %v3073, 1.442695
  %v3296 = vpow.pop %v3295
  %v3297 = vmul.f32 %v3074, 1.442695
  %v3298 = vpow.pop %v3297
  %v3299 = vmul.f32 %v3075, 1.442695
  %v3300 = vpow.pop %v3299
  %v3301 = vmul.f32 %v3076, 1.442695
  %v3302 = vpow.pop %v3301
  %v3303 = vmul.f32 %v3077, 1.442695
  %v3304 = vpow.pop %v3303
  %v3305 = vmul.f32 %v3078, 1.442695
  %v3306 = vpow.pop %v3305
  %v3307 = vmul.f32 %v3079, 1.442695
  %v3308 = vpow.pop %v3307
  %v3309 = vmul.f32 %v3080, 1.442695
  %v3310 = vpow.pop %v3309
  %v3311 = vmul.f32 %v3081, 1.442695
  %v3312 = vpow.pop %v3311
  %v3313 = vmul.f32 %v3082, 1.442695
  %v3314 = vpow.pop %v3313
  %v3315 = vmul.f32 %v3083, 1.442695
  %v3316 = vpow.pop %v3315
  %v3317 = vmul.f32 %v3084, 1.442695
  %v3318 = vpow.pop %v3317
  %v3319 = vmul.f32 %v3085, 1.442695
  %v3320 = vpow.pop %v3319
  %v3321 = vmul.f32 %v3086, 1.442695
  %v3322 = vpow.pop %v3321
  %v3323 = vmul.f32 %v3087, 1.442695
  %v3324 = vpow.pop %v3323
  %v3325 = vmul.f32 %v3088, 1.442695
  %v3326 = vpow.pop %v3325
  %v3327 = vmul.f32 %v3089, 1.442695
  %v3328 = vpow.pop %v3327
  %v3329 = vmul.f32 %v3090, 1.442695
  %v3330 = vpow.pop %v3329
  %v3331 = vmul.f32 %v3091, 1.442695
  %v3332 = vpow.pop %v3331
  %v3333 = vmul.f32 %v3092, 1.442695
  %v3334 = vpow.pop %v3333
  %v3335 = vmul.f32 %v3093, 1.442695
  %v3336 = vpow.pop %v3335
  %v3337 = vmul.f32 %v3094, 1.442695
  %v3338 = vpow.pop %v3337
  %v3339 = vmul.f32 %v3095, 1.442695
  %v3340 = vpow.pop %v3339
  %v3341 = vmul.f32 %v3096, 1.442695
  %v3342 = vpow.pop %v3341
  %v3343 = vmul.f32 %v3097, 1.442695
  %v3344 = vpow.pop %v3343
  %v3345 = vmul.f32 %v3098, 1.442695
  %v3346 = vpow.pop %v3345
  %v3347 = vmul.f32 %v3099, 1.442695
  %v3348 = vpow.pop %v3347
  %v3349 = vmul.f32 %v3100, 1.442695
  %v3350 = vpow.pop %v3349
  %v3351 = vmul.f32 %v3101, 1.442695
  %v3352 = vpow.pop %v3351
  %v3353 = vmul.f32 %v3102, 1.442695
  %v3354 = vpow.pop %v3353
  %v3355 = vmul.f32 %v3103, 1.442695
  %v3356 = vpow.pop %v3355
  %v3357 = vmul.f32 %v3104, 1.442695
  %v3358 = vpow.pop %v3357
  %v3359 = vmul.f32 %v3105, 1.442695
  %v3360 = vpow.pop %v3359
  %v3361 = vmul.f32 %v3106, 1.442695
  %v3362 = vpow.pop %v3361
  %3363 = vadd.xlane.f32.xlu0 %v3108
  %v3364 = vpop.xlane.xlu0 %3363
  %3365 = vadd.xlane.f32.xlu0 %v3110
  %v3366 = vpop.xlane.xlu0 %3365
  %3367 = vadd.xlane.f32.xlu0 %v3112
  %v3368 = vpop.xlane.xlu0 %3367
  %3369 = vadd.xlane.f32.xlu0 %v3114
  %v3370 = vpop.xlane.xlu0 %3369
  %3371 = vadd.xlane.f32.xlu0 %v3116
  %v3372 = vpop.xlane.xlu0 %3371
  %3373 = vadd.xlane.f32.xlu0 %v3118
  %v3374 = vpop.xlane.xlu0 %3373
  %3375 = vadd.xlane.f32.xlu0 %v3120
  %v3376 = vpop.xlane.xlu0 %3375
  %3377 = vadd.xlane.f32.xlu0 %v3122
  %v3378 = vpop.xlane.xlu0 %3377
  %3379 = vadd.xlane.f32.xlu0 %v3124
  %v3380 = vpop.xlane.xlu0 %3379
  %3381 = vadd.xlane.f32.xlu0 %v3126
  %v3382 = vpop.xlane.xlu0 %3381
  %3383 = vadd.xlane.f32.xlu0 %v3128
  %v3384 = vpop.xlane.xlu0 %3383
  %3385 = vadd.xlane.f32.xlu0 %v3130
  %v3386 = vpop.xlane.xlu0 %3385
  %3387 = vadd.xlane.f32.xlu0 %v3132
  %v3388 = vpop.xlane.xlu0 %3387
  %3389 = vadd.xlane.f32.xlu0 %v3134
  %v3390 = vpop.xlane.xlu0 %3389
  %3391 = vadd.xlane.f32.xlu0 %v3136
  %v3392 = vpop.xlane.xlu0 %3391
  %3393 = vadd.xlane.f32.xlu0 %v3138
  %v3394 = vpop.xlane.xlu0 %3393
  %3395 = vadd.xlane.f32.xlu0 %v3140
  %v3396 = vpop.xlane.xlu0 %3395
  %3397 = vadd.xlane.f32.xlu0 %v3142
  %v3398 = vpop.xlane.xlu0 %3397
  %3399 = vadd.xlane.f32.xlu0 %v3144
  %v3400 = vpop.xlane.xlu0 %3399
  %3401 = vadd.xlane.f32.xlu0 %v3146
  %v3402 = vpop.xlane.xlu0 %3401
  %3403 = vadd.xlane.f32.xlu0 %v3148
  %v3404 = vpop.xlane.xlu0 %3403
  %3405 = vadd.xlane.f32.xlu0 %v3150
  %v3406 = vpop.xlane.xlu0 %3405
  %3407 = vadd.xlane.f32.xlu0 %v3152
  %v3408 = vpop.xlane.xlu0 %3407
  %3409 = vadd.xlane.f32.xlu0 %v3154
  %v3410 = vpop.xlane.xlu0 %3409
  %3411 = vadd.xlane.f32.xlu0 %v3156
  %v3412 = vpop.xlane.xlu0 %3411
  %3413 = vadd.xlane.f32.xlu0 %v3158
  %v3414 = vpop.xlane.xlu0 %3413
  %3415 = vadd.xlane.f32.xlu0 %v3160
  %v3416 = vpop.xlane.xlu0 %3415
  %3417 = vadd.xlane.f32.xlu0 %v3162
  %v3418 = vpop.xlane.xlu0 %3417
  %3419 = vadd.xlane.f32.xlu0 %v3164
  %v3420 = vpop.xlane.xlu0 %3419
  %3421 = vadd.xlane.f32.xlu0 %v3166
  %v3422 = vpop.xlane.xlu0 %3421
  %3423 = vadd.xlane.f32.xlu0 %v3168
  %v3424 = vpop.xlane.xlu0 %3423
  %3425 = vadd.xlane.f32.xlu0 %v3170
  %v3426 = vpop.xlane.xlu0 %3425
  %3427 = vadd.xlane.f32.xlu0 %v3172
  %v3428 = vpop.xlane.xlu0 %3427
  %3429 = vadd.xlane.f32.xlu0 %v3174
  %v3430 = vpop.xlane.xlu0 %3429
  %3431 = vadd.xlane.f32.xlu0 %v3176
  %v3432 = vpop.xlane.xlu0 %3431
  %3433 = vadd.xlane.f32.xlu0 %v3178
  %v3434 = vpop.xlane.xlu0 %3433
  %3435 = vadd.xlane.f32.xlu0 %v3180
  %v3436 = vpop.xlane.xlu0 %3435
  %3437 = vadd.xlane.f32.xlu0 %v3182
  %v3438 = vpop.xlane.xlu0 %3437
  %3439 = vadd.xlane.f32.xlu0 %v3184
  %v3440 = vpop.xlane.xlu0 %3439
  %3441 = vadd.xlane.f32.xlu0 %v3186
  %v3442 = vpop.xlane.xlu0 %3441
  %3443 = vadd.xlane.f32.xlu0 %v3188
  %v3444 = vpop.xlane.xlu0 %3443
  %3445 = vadd.xlane.f32.xlu0 %v3190
  %v3446 = vpop.xlane.xlu0 %3445
  %3447 = vadd.xlane.f32.xlu0 %v3192
  %v3448 = vpop.xlane.xlu0 %3447
  %3449 = vadd.xlane.f32.xlu0 %v3194
  %v3450 = vpop.xlane.xlu0 %3449
  %3451 = vadd.xlane.f32.xlu0 %v3196
  %v3452 = vpop.xlane.xlu0 %3451
  %3453 = vadd.xlane.f32.xlu0 %v3198
  %v3454 = vpop.xlane.xlu0 %3453
  %3455 = vadd.xlane.f32.xlu0 %v3200
  %v3456 = vpop.xlane.xlu0 %3455
  %3457 = vadd.xlane.f32.xlu0 %v3202
  %v3458 = vpop.xlane.xlu0 %3457
  %3459 = vadd.xlane.f32.xlu0 %v3204
  %v3460 = vpop.xlane.xlu0 %3459
  %3461 = vadd.xlane.f32.xlu0 %v3206
  %v3462 = vpop.xlane.xlu0 %3461
  %3463 = vadd.xlane.f32.xlu0 %v3208
  %v3464 = vpop.xlane.xlu0 %3463
  %3465 = vadd.xlane.f32.xlu0 %v3210
  %v3466 = vpop.xlane.xlu0 %3465
  %3467 = vadd.xlane.f32.xlu0 %v3212
  %v3468 = vpop.xlane.xlu0 %3467
  %3469 = vadd.xlane.f32.xlu0 %v3214
  %v3470 = vpop.xlane.xlu0 %3469
  %3471 = vadd.xlane.f32.xlu0 %v3216
  %v3472 = vpop.xlane.xlu0 %3471
  %3473 = vadd.xlane.f32.xlu0 %v3218
  %v3474 = vpop.xlane.xlu0 %3473
  %3475 = vadd.xlane.f32.xlu0 %v3220
  %v3476 = vpop.xlane.xlu0 %3475
  %3477 = vadd.xlane.f32.xlu0 %v3222
  %v3478 = vpop.xlane.xlu0 %3477
  %3479 = vadd.xlane.f32.xlu0 %v3224
  %v3480 = vpop.xlane.xlu0 %3479
  %3481 = vadd.xlane.f32.xlu0 %v3226
  %v3482 = vpop.xlane.xlu0 %3481
  %3483 = vadd.xlane.f32.xlu0 %v3228
  %v3484 = vpop.xlane.xlu0 %3483
  %3485 = vadd.xlane.f32.xlu0 %v3230
  %v3486 = vpop.xlane.xlu0 %3485
  %3487 = vadd.xlane.f32.xlu0 %v3232
  %v3488 = vpop.xlane.xlu0 %3487
  %3489 = vadd.xlane.f32.xlu0 %v3234
  %v3490 = vpop.xlane.xlu0 %3489
  %3491 = vadd.xlane.f32.xlu0 %v3236
  %v3492 = vpop.xlane.xlu0 %3491
  %3493 = vadd.xlane.f32.xlu0 %v3238
  %v3494 = vpop.xlane.xlu0 %3493
  %3495 = vadd.xlane.f32.xlu0 %v3240
  %v3496 = vpop.xlane.xlu0 %3495
  %3497 = vadd.xlane.f32.xlu0 %v3242
  %v3498 = vpop.xlane.xlu0 %3497
  %3499 = vadd.xlane.f32.xlu0 %v3244
  %v3500 = vpop.xlane.xlu0 %3499
  %3501 = vadd.xlane.f32.xlu0 %v3246
  %v3502 = vpop.xlane.xlu0 %3501
  %3503 = vadd.xlane.f32.xlu0 %v3248
  %v3504 = vpop.xlane.xlu0 %3503
  %3505 = vadd.xlane.f32.xlu0 %v3250
  %v3506 = vpop.xlane.xlu0 %3505
  %3507 = vadd.xlane.f32.xlu0 %v3252
  %v3508 = vpop.xlane.xlu0 %3507
  %3509 = vadd.xlane.f32.xlu0 %v3254
  %v3510 = vpop.xlane.xlu0 %3509
  %3511 = vadd.xlane.f32.xlu0 %v3256
  %v3512 = vpop.xlane.xlu0 %3511
  %3513 = vadd.xlane.f32.xlu0 %v3258
  %v3514 = vpop.xlane.xlu0 %3513
  %3515 = vadd.xlane.f32.xlu0 %v3260
  %v3516 = vpop.xlane.xlu0 %3515
  %3517 = vadd.xlane.f32.xlu0 %v3262
  %v3518 = vpop.xlane.xlu0 %3517
  %3519 = vadd.xlane.f32.xlu0 %v3264
  %v3520 = vpop.xlane.xlu0 %3519
  %3521 = vadd.xlane.f32.xlu0 %v3266
  %v3522 = vpop.xlane.xlu0 %3521
  %3523 = vadd.xlane.f32.xlu0 %v3268
  %v3524 = vpop.xlane.xlu0 %3523
  %3525 = vadd.xlane.f32.xlu0 %v3270
  %v3526 = vpop.xlane.xlu0 %3525
  %3527 = vadd.xlane.f32.xlu0 %v3272
  %v3528 = vpop.xlane.xlu0 %3527
  %3529 = vadd.xlane.f32.xlu0 %v3274
  %v3530 = vpop.xlane.xlu0 %3529
  %3531 = vadd.xlane.f32.xlu0 %v3276
  %v3532 = vpop.xlane.xlu0 %3531
  %3533 = vadd.xlane.f32.xlu0 %v3278
  %v3534 = vpop.xlane.xlu0 %3533
  %3535 = vadd.xlane.f32.xlu0 %v3280
  %v3536 = vpop.xlane.xlu0 %3535
  %3537 = vadd.xlane.f32.xlu0 %v3282
  %v3538 = vpop.xlane.xlu0 %3537
  %3539 = vadd.xlane.f32.xlu0 %v3284
  %v3540 = vpop.xlane.xlu0 %3539
  %3541 = vadd.xlane.f32.xlu0 %v3286
  %v3542 = vpop.xlane.xlu0 %3541
  %3543 = vadd.xlane.f32.xlu0 %v3288
  %v3544 = vpop.xlane.xlu0 %3543
  %3545 = vadd.xlane.f32.xlu0 %v3290
  %v3546 = vpop.xlane.xlu0 %3545
  %3547 = vadd.xlane.f32.xlu0 %v3292
  %v3548 = vpop.xlane.xlu0 %3547
  %3549 = vadd.xlane.f32.xlu0 %v3294
  %v3550 = vpop.xlane.xlu0 %3549
  %3551 = vadd.xlane.f32.xlu0 %v3296
  %v3552 = vpop.xlane.xlu0 %3551
  %3553 = vadd.xlane.f32.xlu0 %v3298
  %v3554 = vpop.xlane.xlu0 %3553
  %3555 = vadd.xlane.f32.xlu0 %v3300
  %v3556 = vpop.xlane.xlu0 %3555
  %3557 = vadd.xlane.f32.xlu0 %v3302
  %v3558 = vpop.xlane.xlu0 %3557
  %3559 = vadd.xlane.f32.xlu0 %v3304
  %v3560 = vpop.xlane.xlu0 %3559
  %3561 = vadd.xlane.f32.xlu0 %v3306
  %v3562 = vpop.xlane.xlu0 %3561
  %3563 = vadd.xlane.f32.xlu0 %v3308
  %v3564 = vpop.xlane.xlu0 %3563
  %3565 = vadd.xlane.f32.xlu0 %v3310
  %v3566 = vpop.xlane.xlu0 %3565
  %3567 = vadd.xlane.f32.xlu0 %v3312
  %v3568 = vpop.xlane.xlu0 %3567
  %3569 = vadd.xlane.f32.xlu0 %v3314
  %v3570 = vpop.xlane.xlu0 %3569
  %3571 = vadd.xlane.f32.xlu0 %v3316
  %v3572 = vpop.xlane.xlu0 %3571
  %3573 = vadd.xlane.f32.xlu0 %v3318
  %v3574 = vpop.xlane.xlu0 %3573
  %3575 = vadd.xlane.f32.xlu0 %v3320
  %v3576 = vpop.xlane.xlu0 %3575
  %3577 = vadd.xlane.f32.xlu0 %v3322
  %v3578 = vpop.xlane.xlu0 %3577
  %3579 = vadd.xlane.f32.xlu0 %v3324
  %v3580 = vpop.xlane.xlu0 %3579
  %3581 = vadd.xlane.f32.xlu0 %v3326
  %v3582 = vpop.xlane.xlu0 %3581
  %3583 = vadd.xlane.f32.xlu0 %v3328
  %v3584 = vpop.xlane.xlu0 %3583
  %3585 = vadd.xlane.f32.xlu0 %v3330
  %v3586 = vpop.xlane.xlu0 %3585
  %3587 = vadd.xlane.f32.xlu0 %v3332
  %v3588 = vpop.xlane.xlu0 %3587
  %3589 = vadd.xlane.f32.xlu0 %v3334
  %v3590 = vpop.xlane.xlu0 %3589
  %3591 = vadd.xlane.f32.xlu0 %v3336
  %v3592 = vpop.xlane.xlu0 %3591
  %3593 = vadd.xlane.f32.xlu0 %v3338
  %v3594 = vpop.xlane.xlu0 %3593
  %3595 = vadd.xlane.f32.xlu0 %v3340
  %v3596 = vpop.xlane.xlu0 %3595
  %3597 = vadd.xlane.f32.xlu0 %v3342
  %v3598 = vpop.xlane.xlu0 %3597
  %3599 = vadd.xlane.f32.xlu0 %v3344
  %v3600 = vpop.xlane.xlu0 %3599
  %3601 = vadd.xlane.f32.xlu0 %v3346
  %v3602 = vpop.xlane.xlu0 %3601
  %3603 = vadd.xlane.f32.xlu0 %v3348
  %v3604 = vpop.xlane.xlu0 %3603
  %3605 = vadd.xlane.f32.xlu0 %v3350
  %v3606 = vpop.xlane.xlu0 %3605
  %3607 = vadd.xlane.f32.xlu0 %v3352
  %v3608 = vpop.xlane.xlu0 %3607
  %3609 = vadd.xlane.f32.xlu0 %v3354
  %v3610 = vpop.xlane.xlu0 %3609
  %3611 = vadd.xlane.f32.xlu0 %v3356
  %v3612 = vpop.xlane.xlu0 %3611
  %3613 = vadd.xlane.f32.xlu0 %v3358
  %v3614 = vpop.xlane.xlu0 %3613
  %3615 = vadd.xlane.f32.xlu0 %v3360
  %v3616 = vpop.xlane.xlu0 %3615
  %3617 = vadd.xlane.f32.xlu0 %v3362
  %v3618 = vpop.xlane.xlu0 %3617
  %v3619 = vrcp.pop %v3364
  %v3620 = vrcp.pop %v3366
  %v3621 = vrcp.pop %v3368
  %v3622 = vrcp.pop %v3370
  %v3623 = vrcp.pop %v3372
  %v3624 = vrcp.pop %v3374
  %v3625 = vrcp.pop %v3376
  %v3626 = vrcp.pop %v3378
  %v3627 = vrcp.pop %v3380
  %v3628 = vrcp.pop %v3382
  %v3629 = vrcp.pop %v3384
  %v3630 = vrcp.pop %v3386
  %v3631 = vrcp.pop %v3388
  %v3632 = vrcp.pop %v3390
  %v3633 = vrcp.pop %v3392
  %v3634 = vrcp.pop %v3394
  %v3635 = vrcp.pop %v3396
  %v3636 = vrcp.pop %v3398
  %v3637 = vrcp.pop %v3400
  %v3638 = vrcp.pop %v3402
  %v3639 = vrcp.pop %v3404
  %v3640 = vrcp.pop %v3406
  %v3641 = vrcp.pop %v3408
  %v3642 = vrcp.pop %v3410
  %v3643 = vrcp.pop %v3412
  %v3644 = vrcp.pop %v3414
  %v3645 = vrcp.pop %v3416
  %v3646 = vrcp.pop %v3418
  %v3647 = vrcp.pop %v3420
  %v3648 = vrcp.pop %v3422
  %v3649 = vrcp.pop %v3424
  %v3650 = vrcp.pop %v3426
  %v3651 = vrcp.pop %v3428
  %v3652 = vrcp.pop %v3430
  %v3653 = vrcp.pop %v3432
  %v3654 = vrcp.pop %v3434
  %v3655 = vrcp.pop %v3436
  %v3656 = vrcp.pop %v3438
  %v3657 = vrcp.pop %v3440
  %v3658 = vrcp.pop %v3442
  %v3659 = vrcp.pop %v3444
  %v3660 = vrcp.pop %v3446
  %v3661 = vrcp.pop %v3448
  %v3662 = vrcp.pop %v3450
  %v3663 = vrcp.pop %v3452
  %v3664 = vrcp.pop %v3454
  %v3665 = vrcp.pop %v3456
  %v3666 = vrcp.pop %v3458
  %v3667 = vrcp.pop %v3460
  %v3668 = vrcp.pop %v3462
  %v3669 = vrcp.pop %v3464
  %v3670 = vrcp.pop %v3466
  %v3671 = vrcp.pop %v3468
  %v3672 = vrcp.pop %v3470
  %v3673 = vrcp.pop %v3472
  %v3674 = vrcp.pop %v3474
  %v3675 = vrcp.pop %v3476
  %v3676 = vrcp.pop %v3478
  %v3677 = vrcp.pop %v3480
  %v3678 = vrcp.pop %v3482
  %v3679 = vrcp.pop %v3484
  %v3680 = vrcp.pop %v3486
  %v3681 = vrcp.pop %v3488
  %v3682 = vrcp.pop %v3490
  %v3683 = vrcp.pop %v3492
  %v3684 = vrcp.pop %v3494
  %v3685 = vrcp.pop %v3496
  %v3686 = vrcp.pop %v3498
  %v3687 = vrcp.pop %v3500
  %v3688 = vrcp.pop %v3502
  %v3689 = vrcp.pop %v3504
  %v3690 = vrcp.pop %v3506
  %v3691 = vrcp.pop %v3508
  %v3692 = vrcp.pop %v3510
  %v3693 = vrcp.pop %v3512
  %v3694 = vrcp.pop %v3514
  %v3695 = vrcp.pop %v3516
  %v3696 = vrcp.pop %v3518
  %v3697 = vrcp.pop %v3520
  %v3698 = vrcp.pop %v3522
  %v3699 = vrcp.pop %v3524
  %v3700 = vrcp.pop %v3526
  %v3701 = vrcp.pop %v3528
  %v3702 = vrcp.pop %v3530
  %v3703 = vrcp.pop %v3532
  %v3704 = vrcp.pop %v3534
  %v3705 = vrcp.pop %v3536
  %v3706 = vrcp.pop %v3538
  %v3707 = vrcp.pop %v3540
  %v3708 = vrcp.pop %v3542
  %v3709 = vrcp.pop %v3544
  %v3710 = vrcp.pop %v3546
  %v3711 = vrcp.pop %v3548
  %v3712 = vrcp.pop %v3550
  %v3713 = vrcp.pop %v3552
  %v3714 = vrcp.pop %v3554
  %v3715 = vrcp.pop %v3556
  %v3716 = vrcp.pop %v3558
  %v3717 = vrcp.pop %v3560
  %v3718 = vrcp.pop %v3562
  %v3719 = vrcp.pop %v3564
  %v3720 = vrcp.pop %v3566
  %v3721 = vrcp.pop %v3568
  %v3722 = vrcp.pop %v3570
  %v3723 = vrcp.pop %v3572
  %v3724 = vrcp.pop %v3574
  %v3725 = vrcp.pop %v3576
  %v3726 = vrcp.pop %v3578
  %v3727 = vrcp.pop %v3580
  %v3728 = vrcp.pop %v3582
  %v3729 = vrcp.pop %v3584
  %v3730 = vrcp.pop %v3586
  %v3731 = vrcp.pop %v3588
  %v3732 = vrcp.pop %v3590
  %v3733 = vrcp.pop %v3592
  %v3734 = vrcp.pop %v3594
  %v3735 = vrcp.pop %v3596
  %v3736 = vrcp.pop %v3598
  %v3737 = vrcp.pop %v3600
  %v3738 = vrcp.pop %v3602
  %v3739 = vrcp.pop %v3604
  %v3740 = vrcp.pop %v3606
  %v3741 = vrcp.pop %v3608
  %v3742 = vrcp.pop %v3610
  %v3743 = vrcp.pop %v3612
  %v3744 = vrcp.pop %v3614
  %v3745 = vrcp.pop %v3616
  %v3746 = vrcp.pop %v3618
  %v3747 = vmul.f32 %v3108, %v3619
  %v3748 = vmul.f32 %v3110, %v3620
  %v3749 = vmul.f32 %v3112, %v3621
  %v3750 = vmul.f32 %v3114, %v3622
  %v3751 = vmul.f32 %v3116, %v3623
  %v3752 = vmul.f32 %v3118, %v3624
  %v3753 = vmul.f32 %v3120, %v3625
  %v3754 = vmul.f32 %v3122, %v3626
  %v3755 = vmul.f32 %v3124, %v3627
  %v3756 = vmul.f32 %v3126, %v3628
  %v3757 = vmul.f32 %v3128, %v3629
  %v3758 = vmul.f32 %v3130, %v3630
  %v3759 = vmul.f32 %v3132, %v3631
  %v3760 = vmul.f32 %v3134, %v3632
  %v3761 = vmul.f32 %v3136, %v3633
  %v3762 = vmul.f32 %v3138, %v3634
  %v3763 = vmul.f32 %v3140, %v3635
  %v3764 = vmul.f32 %v3142, %v3636
  %v3765 = vmul.f32 %v3144, %v3637
  %v3766 = vmul.f32 %v3146, %v3638
  %v3767 = vmul.f32 %v3148, %v3639
  %v3768 = vmul.f32 %v3150, %v3640
  %v3769 = vmul.f32 %v3152, %v3641
  %v3770 = vmul.f32 %v3154, %v3642
  %v3771 = vmul.f32 %v3156, %v3643
  %v3772 = vmul.f32 %v3158, %v3644
  %v3773 = vmul.f32 %v3160, %v3645
  %v3774 = vmul.f32 %v3162, %v3646
  %v3775 = vmul.f32 %v3164, %v3647
  %v3776 = vmul.f32 %v3166, %v3648
  %v3777 = vmul.f32 %v3168, %v3649
  %v3778 = vmul.f32 %v3170, %v3650
  %v3779 = vmul.f32 %v3172, %v3651
  %v3780 = vmul.f32 %v3174, %v3652
  %v3781 = vmul.f32 %v3176, %v3653
  %v3782 = vmul.f32 %v3178, %v3654
  %v3783 = vmul.f32 %v3180, %v3655
  %v3784 = vmul.f32 %v3182, %v3656
  %v3785 = vmul.f32 %v3184, %v3657
  %v3786 = vmul.f32 %v3186, %v3658
  %v3787 = vmul.f32 %v3188, %v3659
  %v3788 = vmul.f32 %v3190, %v3660
  %v3789 = vmul.f32 %v3192, %v3661
  %v3790 = vmul.f32 %v3194, %v3662
  %v3791 = vmul.f32 %v3196, %v3663
  %v3792 = vmul.f32 %v3198, %v3664
  %v3793 = vmul.f32 %v3200, %v3665
  %v3794 = vmul.f32 %v3202, %v3666
  %v3795 = vmul.f32 %v3204, %v3667
  %v3796 = vmul.f32 %v3206, %v3668
  %v3797 = vmul.f32 %v3208, %v3669
  %v3798 = vmul.f32 %v3210, %v3670
  %v3799 = vmul.f32 %v3212, %v3671
  %v3800 = vmul.f32 %v3214, %v3672
  %v3801 = vmul.f32 %v3216, %v3673
  %v3802 = vmul.f32 %v3218, %v3674
  %v3803 = vmul.f32 %v3220, %v3675
  %v3804 = vmul.f32 %v3222, %v3676
  %v3805 = vmul.f32 %v3224, %v3677
  %v3806 = vmul.f32 %v3226, %v3678
  %v3807 = vmul.f32 %v3228, %v3679
  %v3808 = vmul.f32 %v3230, %v3680
  %v3809 = vmul.f32 %v3232, %v3681
  %v3810 = vmul.f32 %v3234, %v3682
  %v3811 = vmul.f32 %v3236, %v3683
  %v3812 = vmul.f32 %v3238, %v3684
  %v3813 = vmul.f32 %v3240, %v3685
  %v3814 = vmul.f32 %v3242, %v3686
  %v3815 = vmul.f32 %v3244, %v3687
  %v3816 = vmul.f32 %v3246, %v3688
  %v3817 = vmul.f32 %v3248, %v3689
  %v3818 = vmul.f32 %v3250, %v3690
  %v3819 = vmul.f32 %v3252, %v3691
  %v3820 = vmul.f32 %v3254, %v3692
  %v3821 = vmul.f32 %v3256, %v3693
  %v3822 = vmul.f32 %v3258, %v3694
  %v3823 = vmul.f32 %v3260, %v3695
  %v3824 = vmul.f32 %v3262, %v3696
  %v3825 = vmul.f32 %v3264, %v3697
  %v3826 = vmul.f32 %v3266, %v3698
  %v3827 = vmul.f32 %v3268, %v3699
  %v3828 = vmul.f32 %v3270, %v3700
  %v3829 = vmul.f32 %v3272, %v3701
  %v3830 = vmul.f32 %v3274, %v3702
  %v3831 = vmul.f32 %v3276, %v3703
  %v3832 = vmul.f32 %v3278, %v3704
  %v3833 = vmul.f32 %v3280, %v3705
  %v3834 = vmul.f32 %v3282, %v3706
  %v3835 = vmul.f32 %v3284, %v3707
  %v3836 = vmul.f32 %v3286, %v3708
  %v3837 = vmul.f32 %v3288, %v3709
  %v3838 = vmul.f32 %v3290, %v3710
  %v3839 = vmul.f32 %v3292, %v3711
  %v3840 = vmul.f32 %v3294, %v3712
  %v3841 = vmul.f32 %v3296, %v3713
  %v3842 = vmul.f32 %v3298, %v3714
  %v3843 = vmul.f32 %v3300, %v3715
  %v3844 = vmul.f32 %v3302, %v3716
  %v3845 = vmul.f32 %v3304, %v3717
  %v3846 = vmul.f32 %v3306, %v3718
  %v3847 = vmul.f32 %v3308, %v3719
  %v3848 = vmul.f32 %v3310, %v3720
  %v3849 = vmul.f32 %v3312, %v3721
  %v3850 = vmul.f32 %v3314, %v3722
  %v3851 = vmul.f32 %v3316, %v3723
  %v3852 = vmul.f32 %v3318, %v3724
  %v3853 = vmul.f32 %v3320, %v3725
  %v3854 = vmul.f32 %v3322, %v3726
  %v3855 = vmul.f32 %v3324, %v3727
  %v3856 = vmul.f32 %v3326, %v3728
  %v3857 = vmul.f32 %v3328, %v3729
  %v3858 = vmul.f32 %v3330, %v3730
  %v3859 = vmul.f32 %v3332, %v3731
  %v3860 = vmul.f32 %v3334, %v3732
  %v3861 = vmul.f32 %v3336, %v3733
  %v3862 = vmul.f32 %v3338, %v3734
  %v3863 = vmul.f32 %v3340, %v3735
  %v3864 = vmul.f32 %v3342, %v3736
  %v3865 = vmul.f32 %v3344, %v3737
  %v3866 = vmul.f32 %v3346, %v3738
  %v3867 = vmul.f32 %v3348, %v3739
  %v3868 = vmul.f32 %v3350, %v3740
  %v3869 = vmul.f32 %v3352, %v3741
  %v3870 = vmul.f32 %v3354, %v3742
  %v3871 = vmul.f32 %v3356, %v3743
  %v3872 = vmul.f32 %v3358, %v3744
  %v3873 = vmul.f32 %v3360, %v3745
  %v3874 = vmul.f32 %v3362, %v3746
  %v3875 = vpack.c.bf16 %v3748, %v3747
  %v3876 = vpack.c.bf16 %v3750, %v3749
  %v3877 = vpack.c.bf16 %v3752, %v3751
  %v3878 = vpack.c.bf16 %v3754, %v3753
  %v3879 = vpack.c.bf16 %v3756, %v3755
  %v3880 = vpack.c.bf16 %v3758, %v3757
  %v3881 = vpack.c.bf16 %v3760, %v3759
  %v3882 = vpack.c.bf16 %v3762, %v3761
  %v3883 = vpack.c.bf16 %v3764, %v3763
  %v3884 = vpack.c.bf16 %v3766, %v3765
  %v3885 = vpack.c.bf16 %v3768, %v3767
  %v3886 = vpack.c.bf16 %v3770, %v3769
  %v3887 = vpack.c.bf16 %v3772, %v3771
  %v3888 = vpack.c.bf16 %v3774, %v3773
  %v3889 = vpack.c.bf16 %v3776, %v3775
  %v3890 = vpack.c.bf16 %v3778, %v3777
  %v3891 = vpack.c.bf16 %v3780, %v3779
  %v3892 = vpack.c.bf16 %v3782, %v3781
  %v3893 = vpack.c.bf16 %v3784, %v3783
  %v3894 = vpack.c.bf16 %v3786, %v3785
  %v3895 = vpack.c.bf16 %v3788, %v3787
  %v3896 = vpack.c.bf16 %v3790, %v3789
  %v3897 = vpack.c.bf16 %v3792, %v3791
  %v3898 = vpack.c.bf16 %v3794, %v3793
  %v3899 = vpack.c.bf16 %v3796, %v3795
  %v3900 = vpack.c.bf16 %v3798, %v3797
  %v3901 = vpack.c.bf16 %v3800, %v3799
  %v3902 = vpack.c.bf16 %v3802, %v3801
  %v3903 = vpack.c.bf16 %v3804, %v3803
  %v3904 = vpack.c.bf16 %v3806, %v3805
  %v3905 = vpack.c.bf16 %v3808, %v3807
  %v3906 = vpack.c.bf16 %v3810, %v3809
  %v3907 = vpack.c.bf16 %v3812, %v3811
  %v3908 = vpack.c.bf16 %v3814, %v3813
  %v3909 = vpack.c.bf16 %v3816, %v3815
  %v3910 = vpack.c.bf16 %v3818, %v3817
  %v3911 = vpack.c.bf16 %v3820, %v3819
  %v3912 = vpack.c.bf16 %v3822, %v3821
  %v3913 = vpack.c.bf16 %v3824, %v3823
  %v3914 = vpack.c.bf16 %v3826, %v3825
  %v3915 = vpack.c.bf16 %v3828, %v3827
  %v3916 = vpack.c.bf16 %v3830, %v3829
  %v3917 = vpack.c.bf16 %v3832, %v3831
  %v3918 = vpack.c.bf16 %v3834, %v3833
  %v3919 = vpack.c.bf16 %v3836, %v3835
  %v3920 = vpack.c.bf16 %v3838, %v3837
  %v3921 = vpack.c.bf16 %v3840, %v3839
  %v3922 = vpack.c.bf16 %v3842, %v3841
  %v3923 = vpack.c.bf16 %v3844, %v3843
  %v3924 = vpack.c.bf16 %v3846, %v3845
  %v3925 = vpack.c.bf16 %v3848, %v3847
  %v3926 = vpack.c.bf16 %v3850, %v3849
  %v3927 = vpack.c.bf16 %v3852, %v3851
  %v3928 = vpack.c.bf16 %v3854, %v3853
  %v3929 = vpack.c.bf16 %v3856, %v3855
  %v3930 = vpack.c.bf16 %v3858, %v3857
  %v3931 = vpack.c.bf16 %v3860, %v3859
  %v3932 = vpack.c.bf16 %v3862, %v3861
  %v3933 = vpack.c.bf16 %v3864, %v3863
  %v3934 = vpack.c.bf16 %v3866, %v3865
  %v3935 = vpack.c.bf16 %v3868, %v3867
  %v3936 = vpack.c.bf16 %v3870, %v3869
  %v3937 = vpack.c.bf16 %v3872, %v3871
  %v3938 = vpack.c.bf16 %v3874, %v3873
  %3939 = vmatprep.subr.bf16.mxu0 0
  %3940 = vmatpush1.bf16.xpose.msra.mxu0 %v3875
  %3941 = vmatprep.subr.bf16.mxu0 0
  %3942 = vmatpush1.bf16.xpose.msra.mxu0 %v3876
  %3943 = vmatprep.subr.bf16.mxu0 0
  %3944 = vmatpush1.bf16.xpose.msra.mxu0 %v3877
  %3945 = vmatprep.subr.bf16.mxu0 0
  %3946 = vmatpush1.bf16.xpose.msra.mxu0 %v3878
  %3947 = vmatprep.subr.bf16.mxu0 0
  %3948 = vmatpush1.bf16.xpose.msra.mxu0 %v3879
  %3949 = vmatprep.subr.bf16.mxu0 0
  %3950 = vmatpush1.bf16.xpose.msra.mxu0 %v3880
  %3951 = vmatprep.subr.bf16.mxu0 0
  %3952 = vmatpush1.bf16.xpose.msra.mxu0 %v3881
  %3953 = vmatprep.subr.bf16.mxu0 0
  %3954 = vmatpush1.bf16.xpose.msra.mxu0 %v3882
  %3955 = vmatprep.subr.bf16.mxu0 0
  %3956 = vmatpush1.bf16.xpose.msra.mxu0 0
  %3957 = vmatprep.subr.bf16.mxu0 0
  %3958 = vmatpush1.bf16.xpose.msra.mxu0 0
  %3959 = vmatprep.subr.bf16.mxu0 0
  %3960 = vmatpush1.bf16.xpose.msra.mxu0 0
  %3961 = vmatprep.subr.bf16.mxu0 0
  %3962 = vmatpush1.bf16.xpose.msra.mxu0 0
  %3963 = vmatprep.subr.bf16.mxu0 0
  %3964 = vmatpush1.bf16.xpose.msra.mxu0 0
  %3965 = vmatprep.subr.bf16.mxu0 0
  %3966 = vmatpush1.bf16.xpose.msra.mxu0 0
  %3967 = vmatprep.subr.bf16.mxu0 0
  %3968 = vmatpush1.bf16.xpose.msra.mxu0 0
  %3969 = vmatprep.subr.bf16.mxu0 0
  %3970 = vmatpush1.bf16.xpose.msra.mxu0 0
  %3971 = vmatprep.mubr.bf16.mxu0 0
  %3972 = vmatmul.mubr.bf16.gmra.mrb[0].mxu0 %v1705
  %v3973 = vpop.f32.mrb[0].mxu0
  %v3974 = vadd.f32 0.0, %v3973
  %v3975 = vpop.f32.mrb[0].mxu0
  %v3976 = vpop.f32.mrb[0].mxu0
  %v3977 = vpop.f32.mrb[0].mxu0
  %3978 = vdwg.mxu0
  %3979 = vmatprep.subr.bf16.mxu0 0
  %3980 = vmatpush1.bf16.xpose.msra.mxu0 %v3883
  %3981 = vmatprep.subr.bf16.mxu0 0
  %3982 = vmatpush1.bf16.xpose.msra.mxu0 %v3884
  %3983 = vmatprep.subr.bf16.mxu0 0
  %3984 = vmatpush1.bf16.xpose.msra.mxu0 %v3885
  %3985 = vmatprep.subr.bf16.mxu0 0
  %3986 = vmatpush1.bf16.xpose.msra.mxu0 %v3886
  %3987 = vmatprep.subr.bf16.mxu0 0
  %3988 = vmatpush1.bf16.xpose.msra.mxu0 %v3887
  %3989 = vmatprep.subr.bf16.mxu0 0
  %3990 = vmatpush1.bf16.xpose.msra.mxu0 %v3888
  %3991 = vmatprep.subr.bf16.mxu0 0
  %3992 = vmatpush1.bf16.xpose.msra.mxu0 %v3889
  %3993 = vmatprep.subr.bf16.mxu0 0
  %3994 = vmatpush1.bf16.xpose.msra.mxu0 %v3890
  %3995 = vmatprep.subr.bf16.mxu0 0
  %3996 = vmatpush1.bf16.xpose.msra.mxu0 0
  %3997 = vmatprep.subr.bf16.mxu0 0
  %3998 = vmatpush1.bf16.xpose.msra.mxu0 0
  %3999 = vmatprep.subr.bf16.mxu0 0
  %4000 = vmatpush1.bf16.xpose.msra.mxu0 0
  %4001 = vmatprep.subr.bf16.mxu0 0
  %4002 = vmatpush1.bf16.xpose.msra.mxu0 0
  %4003 = vmatprep.subr.bf16.mxu0 0
  %4004 = vmatpush1.bf16.xpose.msra.mxu0 0
  %4005 = vmatprep.subr.bf16.mxu0 0
  %4006 = vmatpush1.bf16.xpose.msra.mxu0 0
  %4007 = vmatprep.subr.bf16.mxu0 0
  %4008 = vmatpush1.bf16.xpose.msra.mxu0 0
  %4009 = vmatprep.subr.bf16.mxu0 0
  %4010 = vmatpush1.bf16.xpose.msra.mxu0 0
  %4011 = vmatprep.mubr.bf16.mxu0 0
  %4012 = vmatmul.mubr.bf16.gmra.mrb[0].mxu0 %v1706
  %v4013 = vpop.f32.mrb[0].mxu0
  %v4014 = vadd.f32 0.0, %v4013
  %v4015 = vpop.f32.mrb[0].mxu0
  %v4016 = vpop.f32.mrb[0].mxu0
  %v4017 = vpop.f32.mrb[0].mxu0
  %4018 = vdwg.mxu0
  %4019 = vmatprep.subr.bf16.mxu0 0
  %4020 = vmatpush1.bf16.xpose.msra.mxu0 %v3891
  %4021 = vmatprep.subr.bf16.mxu0 0
  %4022 = vmatpush1.bf16.xpose.msra.mxu0 %v3892
  %4023 = vmatprep.subr.bf16.mxu0 0
  %4024 = vmatpush1.bf16.xpose.msra.mxu0 %v3893
  %4025 = vmatprep.subr.bf16.mxu0 0
  %4026 = vmatpush1.bf16.xpose.msra.mxu0 %v3894
  %4027 = vmatprep.subr.bf16.mxu0 0
  %4028 = vmatpush1.bf16.xpose.msra.mxu0 %v3895
  %4029 = vmatprep.subr.bf16.mxu0 0
  %4030 = vmatpush1.bf16.xpose.msra.mxu0 %v3896
  %4031 = vmatprep.subr.bf16.mxu0 0
  %4032 = vmatpush1.bf16.xpose.msra.mxu0 %v3897
  %4033 = vmatprep.subr.bf16.mxu0 0
  %4034 = vmatpush1.bf16.xpose.msra.mxu0 %v3898
  %4035 = vmatprep.subr.bf16.mxu0 0
  %4036 = vmatpush1.bf16.xpose.msra.mxu0 0
  %4037 = vmatprep.subr.bf16.mxu0 0
  %4038 = vmatpush1.bf16.xpose.msra.mxu0 0
  %4039 = vmatprep.subr.bf16.mxu0 0
  %4040 = vmatpush1.bf16.xpose.msra.mxu0 0
  %4041 = vmatprep.subr.bf16.mxu0 0
  %4042 = vmatpush1.bf16.xpose.msra.mxu0 0
  %4043 = vmatprep.subr.bf16.mxu0 0
  %4044 = vmatpush1.bf16.xpose.msra.mxu0 0
  %4045 = vmatprep.subr.bf16.mxu0 0
  %4046 = vmatpush1.bf16.xpose.msra.mxu0 0
  %4047 = vmatprep.subr.bf16.mxu0 0
  %4048 = vmatpush1.bf16.xpose.msra.mxu0 0
  %4049 = vmatprep.subr.bf16.mxu0 0
  %4050 = vmatpush1.bf16.xpose.msra.mxu0 0
  %4051 = vmatprep.mubr.bf16.mxu0 0
  %4052 = vmatmul.mubr.bf16.gmra.mrb[0].mxu0 %v1707
  %v4053 = vpop.f32.mrb[0].mxu0
  %v4054 = vadd.f32 0.0, %v4053
  %v4055 = vpop.f32.mrb[0].mxu0
  %v4056 = vpop.f32.mrb[0].mxu0
  %v4057 = vpop.f32.mrb[0].mxu0
  %4058 = vdwg.mxu0
  %4059 = vmatprep.subr.bf16.mxu0 0
  %4060 = vmatpush1.bf16.xpose.msra.mxu0 %v3899
  %4061 = vmatprep.subr.bf16.mxu0 0
  %4062 = vmatpush1.bf16.xpose.msra.mxu0 %v3900
  %4063 = vmatprep.subr.bf16.mxu0 0
  %4064 = vmatpush1.bf16.xpose.msra.mxu0 %v3901
  %4065 = vmatprep.subr.bf16.mxu0 0
  %4066 = vmatpush1.bf16.xpose.msra.mxu0 %v3902
  %4067 = vmatprep.subr.bf16.mxu0 0
  %4068 = vmatpush1.bf16.xpose.msra.mxu0 %v3903
  %4069 = vmatprep.subr.bf16.mxu0 0
  %4070 = vmatpush1.bf16.xpose.msra.mxu0 %v3904
  %4071 = vmatprep.subr.bf16.mxu0 0
  %4072 = vmatpush1.bf16.xpose.msra.mxu0 %v3905
  %4073 = vmatprep.subr.bf16.mxu0 0
  %4074 = vmatpush1.bf16.xpose.msra.mxu0 %v3906
  %4075 = vmatprep.subr.bf16.mxu0 0
  %4076 = vmatpush1.bf16.xpose.msra.mxu0 0
  %4077 = vmatprep.subr.bf16.mxu0 0
  %4078 = vmatpush1.bf16.xpose.msra.mxu0 0
  %4079 = vmatprep.subr.bf16.mxu0 0
  %4080 = vmatpush1.bf16.xpose.msra.mxu0 0
  %4081 = vmatprep.subr.bf16.mxu0 0
  %4082 = vmatpush1.bf16.xpose.msra.mxu0 0
  %4083 = vmatprep.subr.bf16.mxu0 0
  %4084 = vmatpush1.bf16.xpose.msra.mxu0 0
  %4085 = vmatprep.subr.bf16.mxu0 0
  %4086 = vmatpush1.bf16.xpose.msra.mxu0 0
  %4087 = vmatprep.subr.bf16.mxu0 0
  %4088 = vmatpush1.bf16.xpose.msra.mxu0 0
  %4089 = vmatprep.subr.bf16.mxu0 0
  %4090 = vmatpush1.bf16.xpose.msra.mxu0 0
  %4091 = vmatprep.mubr.bf16.mxu0 0
  %4092 = vmatmul.mubr.bf16.gmra.mrb[0].mxu0 %v1708
  %v4093 = vpop.f32.mrb[0].mxu0
  %v4094 = vadd.f32 0.0, %v4093
  %v4095 = vpop.f32.mrb[0].mxu0
  %v4096 = vpop.f32.mrb[0].mxu0
  %v4097 = vpop.f32.mrb[0].mxu0
  %4098 = vdwg.mxu0
  %4099 = vmatprep.subr.bf16.mxu0 0
  %4100 = vmatpush1.bf16.xpose.msra.mxu0 %v3907
  %4101 = vmatprep.subr.bf16.mxu0 0
  %4102 = vmatpush1.bf16.xpose.msra.mxu0 %v3908
  %4103 = vmatprep.subr.bf16.mxu0 0
  %4104 = vmatpush1.bf16.xpose.msra.mxu0 %v3909
  %4105 = vmatprep.subr.bf16.mxu0 0
  %4106 = vmatpush1.bf16.xpose.msra.mxu0 %v3910
  %4107 = vmatprep.subr.bf16.mxu0 0
  %4108 = vmatpush1.bf16.xpose.msra.mxu0 %v3911
  %4109 = vmatprep.subr.bf16.mxu0 0
  %4110 = vmatpush1.bf16.xpose.msra.mxu0 %v3912
  %4111 = vmatprep.subr.bf16.mxu0 0
  %4112 = vmatpush1.bf16.xpose.msra.mxu0 %v3913
  %4113 = vmatprep.subr.bf16.mxu0 0
  %4114 = vmatpush1.bf16.xpose.msra.mxu0 %v3914
  %4115 = vmatprep.subr.bf16.mxu0 0
  %4116 = vmatpush1.bf16.xpose.msra.mxu0 0
  %4117 = vmatprep.subr.bf16.mxu0 0
  %4118 = vmatpush1.bf16.xpose.msra.mxu0 0
  %4119 = vmatprep.subr.bf16.mxu0 0
  %4120 = vmatpush1.bf16.xpose.msra.mxu0 0
  %4121 = vmatprep.subr.bf16.mxu0 0
  %4122 = vmatpush1.bf16.xpose.msra.mxu0 0
  %4123 = vmatprep.subr.bf16.mxu0 0
  %4124 = vmatpush1.bf16.xpose.msra.mxu0 0
  %4125 = vmatprep.subr.bf16.mxu0 0
  %4126 = vmatpush1.bf16.xpose.msra.mxu0 0
  %4127 = vmatprep.subr.bf16.mxu0 0
  %4128 = vmatpush1.bf16.xpose.msra.mxu0 0
  %4129 = vmatprep.subr.bf16.mxu0 0
  %4130 = vmatpush1.bf16.xpose.msra.mxu0 0
  %4131 = vmatprep.mubr.bf16.mxu0 0
  %4132 = vmatmul.mubr.bf16.gmra.mrb[0].mxu0 %v1709
  %v4133 = vpop.f32.mrb[0].mxu0
  %v4134 = vadd.f32 0.0, %v4133
  %v4135 = vpop.f32.mrb[0].mxu0
  %v4136 = vpop.f32.mrb[0].mxu0
  %v4137 = vpop.f32.mrb[0].mxu0
  %4138 = vdwg.mxu0
  %4139 = vmatprep.subr.bf16.mxu0 0
  %4140 = vmatpush1.bf16.xpose.msra.mxu0 %v3915
  %4141 = vmatprep.subr.bf16.mxu0 0
  %4142 = vmatpush1.bf16.xpose.msra.mxu0 %v3916
  %4143 = vmatprep.subr.bf16.mxu0 0
  %4144 = vmatpush1.bf16.xpose.msra.mxu0 %v3917
  %4145 = vmatprep.subr.bf16.mxu0 0
  %4146 = vmatpush1.bf16.xpose.msra.mxu0 %v3918
  %4147 = vmatprep.subr.bf16.mxu0 0
  %4148 = vmatpush1.bf16.xpose.msra.mxu0 %v3919
  %4149 = vmatprep.subr.bf16.mxu0 0
  %4150 = vmatpush1.bf16.xpose.msra.mxu0 %v3920
  %4151 = vmatprep.subr.bf16.mxu0 0
  %4152 = vmatpush1.bf16.xpose.msra.mxu0 %v3921
  %4153 = vmatprep.subr.bf16.mxu0 0
  %4154 = vmatpush1.bf16.xpose.msra.mxu0 %v3922
  %4155 = vmatprep.subr.bf16.mxu0 0
  %4156 = vmatpush1.bf16.xpose.msra.mxu0 0
  %4157 = vmatprep.subr.bf16.mxu0 0
  %4158 = vmatpush1.bf16.xpose.msra.mxu0 0
  %4159 = vmatprep.subr.bf16.mxu0 0
  %4160 = vmatpush1.bf16.xpose.msra.mxu0 0
  %4161 = vmatprep.subr.bf16.mxu0 0
  %4162 = vmatpush1.bf16.xpose.msra.mxu0 0
  %4163 = vmatprep.subr.bf16.mxu0 0
  %4164 = vmatpush1.bf16.xpose.msra.mxu0 0
  %4165 = vmatprep.subr.bf16.mxu0 0
  %4166 = vmatpush1.bf16.xpose.msra.mxu0 0
  %4167 = vmatprep.subr.bf16.mxu0 0
  %4168 = vmatpush1.bf16.xpose.msra.mxu0 0
  %4169 = vmatprep.subr.bf16.mxu0 0
  %4170 = vmatpush1.bf16.xpose.msra.mxu0 0
  %4171 = vmatprep.mubr.bf16.mxu0 0
  %4172 = vmatmul.mubr.bf16.gmra.mrb[0].mxu0 %v1710
  %v4173 = vpop.f32.mrb[0].mxu0
  %v4174 = vadd.f32 0.0, %v4173
  %v4175 = vpop.f32.mrb[0].mxu0
  %v4176 = vpop.f32.mrb[0].mxu0
  %v4177 = vpop.f32.mrb[0].mxu0
  %4178 = vdwg.mxu0
  %4179 = vmatprep.subr.bf16.mxu0 0
  %4180 = vmatpush1.bf16.xpose.msra.mxu0 %v3923
  %4181 = vmatprep.subr.bf16.mxu0 0
  %4182 = vmatpush1.bf16.xpose.msra.mxu0 %v3924
  %4183 = vmatprep.subr.bf16.mxu0 0
  %4184 = vmatpush1.bf16.xpose.msra.mxu0 %v3925
  %4185 = vmatprep.subr.bf16.mxu0 0
  %4186 = vmatpush1.bf16.xpose.msra.mxu0 %v3926
  %4187 = vmatprep.subr.bf16.mxu0 0
  %4188 = vmatpush1.bf16.xpose.msra.mxu0 %v3927
  %4189 = vmatprep.subr.bf16.mxu0 0
  %4190 = vmatpush1.bf16.xpose.msra.mxu0 %v3928
  %4191 = vmatprep.subr.bf16.mxu0 0
  %4192 = vmatpush1.bf16.xpose.msra.mxu0 %v3929
  %4193 = vmatprep.subr.bf16.mxu0 0
  %4194 = vmatpush1.bf16.xpose.msra.mxu0 %v3930
  %4195 = vmatprep.subr.bf16.mxu0 0
  %4196 = vmatpush1.bf16.xpose.msra.mxu0 0
  %4197 = vmatprep.subr.bf16.mxu0 0
  %4198 = vmatpush1.bf16.xpose.msra.mxu0 0
  %4199 = vmatprep.subr.bf16.mxu0 0
  %4200 = vmatpush1.bf16.xpose.msra.mxu0 0
  %4201 = vmatprep.subr.bf16.mxu0 0
  %4202 = vmatpush1.bf16.xpose.msra.mxu0 0
  %4203 = vmatprep.subr.bf16.mxu0 0
  %4204 = vmatpush1.bf16.xpose.msra.mxu0 0
  %4205 = vmatprep.subr.bf16.mxu0 0
  %4206 = vmatpush1.bf16.xpose.msra.mxu0 0
  %4207 = vmatprep.subr.bf16.mxu0 0
  %4208 = vmatpush1.bf16.xpose.msra.mxu0 0
  %4209 = vmatprep.subr.bf16.mxu0 0
  %4210 = vmatpush1.bf16.xpose.msra.mxu0 0
  %4211 = vmatprep.mubr.bf16.mxu0 0
  %4212 = vmatmul.mubr.bf16.gmra.mrb[0].mxu0 %v1711
  %v4213 = vpop.f32.mrb[0].mxu0
  %v4214 = vadd.f32 0.0, %v4213
  %v4215 = vpop.f32.mrb[0].mxu0
  %v4216 = vpop.f32.mrb[0].mxu0
  %v4217 = vpop.f32.mrb[0].mxu0
  %4218 = vdwg.mxu0
  %4219 = vmatprep.subr.bf16.mxu0 0
  %4220 = vmatpush1.bf16.xpose.msra.mxu0 %v3931
  %4221 = vmatprep.subr.bf16.mxu0 0
  %4222 = vmatpush1.bf16.xpose.msra.mxu0 %v3932
  %4223 = vmatprep.subr.bf16.mxu0 0
  %4224 = vmatpush1.bf16.xpose.msra.mxu0 %v3933
  %4225 = vmatprep.subr.bf16.mxu0 0
  %4226 = vmatpush1.bf16.xpose.msra.mxu0 %v3934
  %4227 = vmatprep.subr.bf16.mxu0 0
  %4228 = vmatpush1.bf16.xpose.msra.mxu0 %v3935
  %4229 = vmatprep.subr.bf16.mxu0 0
  %4230 = vmatpush1.bf16.xpose.msra.mxu0 %v3936
  %4231 = vmatprep.subr.bf16.mxu0 0
  %4232 = vmatpush1.bf16.xpose.msra.mxu0 %v3937
  %4233 = vmatprep.subr.bf16.mxu0 0
  %4234 = vmatpush1.bf16.xpose.msra.mxu0 %v3938
  %4235 = vmatprep.subr.bf16.mxu0 0
  %4236 = vmatpush1.bf16.xpose.msra.mxu0 0
  %4237 = vmatprep.subr.bf16.mxu0 0
  %4238 = vmatpush1.bf16.xpose.msra.mxu0 0
  %4239 = vmatprep.subr.bf16.mxu0 0
  %4240 = vmatpush1.bf16.xpose.msra.mxu0 0
  %4241 = vmatprep.subr.bf16.mxu0 0
  %4242 = vmatpush1.bf16.xpose.msra.mxu0 0
  %4243 = vmatprep.subr.bf16.mxu0 0
  %4244 = vmatpush1.bf16.xpose.msra.mxu0 0
  %4245 = vmatprep.subr.bf16.mxu0 0
  %4246 = vmatpush1.bf16.xpose.msra.mxu0 0
  %4247 = vmatprep.subr.bf16.mxu0 0
  %4248 = vmatpush1.bf16.xpose.msra.mxu0 0
  %4249 = vmatprep.subr.bf16.mxu0 0
  %4250 = vmatpush1.bf16.xpose.msra.mxu0 0
  %4251 = vmatprep.mubr.bf16.mxu0 0
  %4252 = vmatmul.mubr.bf16.gmra.mrb[0].mxu0 %v1712
  %v4253 = vpop.f32.mrb[0].mxu0
  %v4254 = vadd.f32 0.0, %v4253
  %v4255 = vpop.f32.mrb[0].mxu0
  %v4256 = vpop.f32.mrb[0].mxu0
  %v4257 = vpop.f32.mrb[0].mxu0
  %4258 = vdwg.mxu0
  %4259 = vst [vmem:[%s6] sm:$0xf] %v3974
  %4260 = vst [vmem:[%s6 + $0x4] sm:$0xf] %v4014
  %4261 = vst [vmem:[%s6 + $0x8] sm:$0xf] %v4054
  %4262 = vst [vmem:[%s6 + $0xc] sm:$0xf] %v4094
  %4263 = vst [vmem:[%s6 + $0x10] sm:$0xf] %v4134
  %4264 = vst [vmem:[%s6 + $0x14] sm:$0xf] %v4174
  %4265 = vst [vmem:[%s6 + $0x18] sm:$0xf] %v4214
  %4266 = vst [vmem:[%s6 + $0x1c] sm:$0xf] %v4254
  // Predicated region
  $region26: #{right_forward.1} parent=0 // pred_check
    _
  $region27: #{right_forward.1} parent=0 // pred_check_branch
    %4268 = sbr.rel (0) target = $region29
  $region28: #{right_forward.1} parent=0 // pred_region
    _
  $region29: #{right_forward.1} parent=0 // pred_fallthru
    _
  // Predicated region
  $region30: #{right_forward.1} parent=0 // pred_check
    _
  $region31: #{right_forward.1} parent=0 // pred_check_branch
    %4270 = sbr.rel (0) target = $region33
  $region32: #{right_forward.1} parent=0 // pred_region
    _
  $region33: #{right_forward.1} parent=0 // pred_fallthru
    _

</llo_original>
